<compile_context>
chip_gen: v7x
topology: tpu7x:2x2x1
jax: 0.10.0
libtpu: 0.0.40
codegen_flags: <defaults>
</compile_context>

<pallas_src>
import jax
import jax.numpy as jnp
from jax.experimental import pallas as pl
from jax.experimental.pallas import tpu as pltpu


_VMEM_LIMIT = 32 * 1024 * 1024  # explicit scoped-VMEM cap, safe on v5e/v6e/v7x


def _pick_tile(n, target, mult):
    """Largest divisor of n that is <= target, preferring multiples of `mult`.

    Never returns more than max(n if n <= target else target) -> the full-N
    fallback cannot blow up VMEM for awkward N.
    """
    if n <= target:
        return n
    for m in (mult, 8, 1):
        t = (target // m) * m
        while t >= m:
            if n % t == 0:
                return t
            t -= m
    return 1


# ---------------------------------------------------------------------------
# Fused kernel: per (row tile i, kv tile j)
#   j == 0 :  q_i^T = Wq^T @ x_i^T + bq^T   (VMEM scratch, bf16)
#             out_i  = bo                    (lane-dense accumulator init)
#   every j:  [k_j | vw_j] = x_j @ Wkv + bkv (one small MXU matmul, C=32)
#             s^T = k_j @ q_i^T              (MXU, f32 accumulation)
#             p   = sigmoid(s^T)             (single-EUP tanh form)
#             out_i^T += sum_k p[k,:]*vw[k]  (VPU sublane reduce, not MXU)
# ---------------------------------------------------------------------------
def _mlp_t_kernel(xt_ref, xj_ref, wqT_ref, bqT_ref, wkv_ref, bkv_ref, bo_ref,
                  out_ref, qT_ref):
    j = pl.program_id(1)

    @pl.when(j == 0)
    def _per_row_tile_init():
        # q_i^T = Wq^T @ x_i^T + bq^T -> (128, TM); stored bf16 for the MXU.
        qT = jnp.dot(wqT_ref[...], xt_ref[...],
                     preferred_element_type=jnp.float32) + bqT_ref[...]
        qT_ref[...] = qT.astype(qT_ref.dtype)
        # Lane-dense accumulator (the output block itself) starts at bo.
        out_ref[...] = jnp.zeros_like(out_ref) + bo_ref[...]

    xj = xj_ref[...]                                             # (TK, C) bf16
    # Folded projections for the kv side, one matmul: [k | vw | 0-pad].
    kv = jnp.dot(xj, wkv_ref[...],
                 preferred_element_type=jnp.float32) + bkv_ref[...]  # (TK, 256)
    k = kv[:, :128].astype(jnp.bfloat16)                         # (TK, 128)
    vw = kv[:, 128:129]                                          # (TK, 1) f32

    # s^T = k_j @ q_i^T  == (q_i @ k_j^T)^T, f32 accumulation on the MXU.
    sT = jnp.dot(k, qT_ref[...], preferred_element_type=jnp.float32)  # (TK, TM)

    # sigmoid(x) = 0.5*tanh(0.5*x) + 0.5 : one EUP push per vreg (vs exp+recip).
    p = 0.5 * jnp.tanh(0.5 * sT) + 0.5
    # TODO(synk): training-mode dropout would mask `p` here (eval identity).

    # Value reduction on VPU/XLU (sublane reduce) — keeps it off the MXU.
    out_ref[...] += jnp.sum(p * vw, axis=0, keepdims=True)       # (1, TM)


def mlp_t_forward(x, params, decay_value, *, tm=512, tk=512):
    """x: (N, in_chan) f32 -> (N, 1) f32.  decay_value only affects backward."""
    del decay_value  # GradientReversal forward is identity.
    wt, bt, wq, bq, wo, bo = params
    N, C = x.shape

    # --- exact algebraic folds, done once in f32 ---------------------------
    w_all = wt @ wq                        # (C, 384)  token+qkv folded
    b_all = bt @ wq + bq                   # (1, 384)
    wq_f, bq_f = w_all[:, :128], b_all[:, :128]
    wk_f, bk_f = w_all[:, 128:256], b_all[:, 128:256]
    wv_f = w_all[:, 256:] @ wo             # (C, 1)    (s@v)@Wo == s@(v@Wo)
    bv_f = b_all[:, 256:] @ wo             # (1, 1)

    # q path, pre-transposed so the kernel never transposes anything.
    wqT = wq_f.T.astype(jnp.bfloat16)      # (128, C)
    bqT = bq_f.T                           # (128, 1) f32
    # kv path: one combined weight [Wk | Wv@Wo | zero-pad] -> (C, 256).
    wkv = jnp.concatenate(
        [wk_f, wv_f, jnp.zeros((C, 127), jnp.float32)], axis=1).astype(jnp.bfloat16)
    bkv = jnp.concatenate(
        [bk_f, bv_f, jnp.zeros((1, 127), jnp.float32)], axis=1)  # (1, 256) f32

    x_b = x.astype(jnp.bfloat16)           # (N, C)   kv-side stream
    xT_b = x_b.T                           # (C, N)   q-side stream

    TM = _pick_tile(N, tm, mult=128)       # row/output tile (lane dim)
    TK = _pick_tile(N, tk, mult=16)        # kv/reduction tile (bf16 sublanes)
    if TM != N and TM % 128 != 0:
        raise ValueError(f"row tile {TM} must be a multiple of 128 (or == N={N})")
    if TK != N and TK % 8 != 0:
        raise ValueError(f"kv tile {TK} must be a multiple of 8 (or == N={N})")

    grid = (N // TM, N // TK)              # i: parallel rows, j: reduction last

    out_slab = pl.pallas_call(
        _mlp_t_kernel,
        out_shape=jax.ShapeDtypeStruct((1, N), jnp.float32),     # lane-dense
        grid=grid,
        in_specs=[
            pl.BlockSpec((C, TM), lambda i, j: (0, i)),          # x^T (q path)
            pl.BlockSpec((TK, C), lambda i, j: (j, 0)),          # x   (kv path)
            pl.BlockSpec(wqT.shape, lambda i, j: (0, 0)),        # VMEM-resident
            pl.BlockSpec(bqT.shape, lambda i, j: (0, 0)),
            pl.BlockSpec(wkv.shape, lambda i, j: (0, 0)),
            pl.BlockSpec(bkv.shape, lambda i, j: (0, 0)),
            pl.BlockSpec(bo.shape, lambda i, j: (0, 0)),
        ],
        out_specs=pl.BlockSpec((1, TM), lambda i, j: (0, i)),    # accumulator
        scratch_shapes=[pltpu.VMEM((128, TM), jnp.bfloat16)],    # q_i^T
        compiler_params=pltpu.CompilerParams(
            dimension_semantics=("parallel", "arbitrary"),
            vmem_limit_bytes=_VMEM_LIMIT,
        ),
    )(xT_b, x_b, wqT, bqT, wkv, bkv, bo)

    return out_slab.reshape(N, 1)          # GRL forward == identity


def init_params(key, in_chan):
    """Deterministic synthetic parameters matching MLP_T(in_chan)."""
    ks = jax.random.split(key, 6)
    s = 0.05
    wt = s * jax.random.normal(ks[0], (in_chan, 128), jnp.float32)
    bt = s * jax.random.normal(ks[1], (1, 128), jnp.float32)
    wq = s * jax.random.normal(ks[2], (128, 384), jnp.float32)
    bq = s * jax.random.normal(ks[3], (1, 384), jnp.float32)
    wo = s * jax.random.normal(ks[4], (128, 1), jnp.float32)
    bo = s * jax.random.normal(ks[5], (1, 1), jnp.float32)
    return (wt, bt, wq, bq, wo, bo)


def mlp_t_ref(x, params):
    """Pure-JAX f32 reference following the PyTorch op order exactly."""
    wt, bt, wq, bq, wo, bo = params
    tok = x @ wt + bt
    qkv = tok @ wq + bq
    q, k, v = qkv[:, :128], qkv[:, 128:256], qkv[:, 256:]
    s = jax.nn.sigmoid(q @ k.T)
    att = s @ v
    return att @ wo + bo


if __name__ == "__main__":
    key = jax.random.PRNGKey(0)
    k_x, k_p = jax.random.split(key)

    # Small but grid-exercising shape: 1024 tokens x 32 input channels
    # -> grid (2 row tiles x 2 kv tiles) at TM = TK = 512.
    N, in_chan = 1024, 32
    x = jax.random.normal(k_x, (N, in_chan), jnp.float32)
    params = init_params(k_p, in_chan)
    decay_value = 1.0

    out = mlp_t_forward(x, params, decay_value)
    out = jax.block_until_ready(out)
    assert out.shape == (N, 1)

    ref = mlp_t_ref(x, params)
    # bf16 MXU operands (f32 accumulation) + exact algebraic folds change the
    # rounding order slightly -> loosened tolerance vs the pure-f32 reference.
    ok = jnp.allclose(out, ref, rtol=2e-2, atol=1e-1)
    assert bool(ok), f"max|diff|={float(jnp.max(jnp.abs(out - ref)))}"

    print("KERNEL_OK")
</pallas_src>

<mosaic_0001>
module attributes {stable_mosaic.version = 11 : i64} {
  func.func @_mlp_t_kernel(%arg0: i32, %arg1: i32, %arg2: memref<32x512xbf16, #tpu.memory_space<vmem>>, %arg3: memref<512x32xbf16, #tpu.memory_space<vmem>>, %arg4: memref<128x32xbf16, #tpu.memory_space<vmem>>, %arg5: memref<128x1xf32, #tpu.memory_space<vmem>>, %arg6: memref<32x256xbf16, #tpu.memory_space<vmem>>, %arg7: memref<1x256xf32, #tpu.memory_space<vmem>>, %arg8: memref<1x1xf32, #tpu.memory_space<vmem>>, %arg9: memref<1x512xf32, #tpu.memory_space<vmem>>, %arg10: memref<128x512xbf16, #tpu.memory_space<vmem>>) attributes {dimension_semantics = [#tpu.dimension_semantics<parallel>, #tpu.dimension_semantics<arbitrary>], iteration_bounds = array<i64: 2, 2>, scalar_prefetch = 0 : i64, scratch_operands = 1 : i64, tpu.core_type = #tpu.core_type<tc>, window_params = [{transform_indices = @transform_0, window_bounds = array<i64: 32, 512>}, {transform_indices = @transform_1, window_bounds = array<i64: 512, 32>}, {pipeline_mode = #tpu.pipeline_mode<synchronous>, transform_indices = @transform_2, window_bounds = array<i64: 128, 32>}, {pipeline_mode = #tpu.pipeline_mode<synchronous>, transform_indices = @transform_3, window_bounds = array<i64: 128, 1>}, {pipeline_mode = #tpu.pipeline_mode<synchronous>, transform_indices = @transform_4, window_bounds = array<i64: 32, 256>}, {pipeline_mode = #tpu.pipeline_mode<synchronous>, transform_indices = @transform_5, window_bounds = array<i64: 1, 256>}, {pipeline_mode = #tpu.pipeline_mode<synchronous>, transform_indices = @transform_6, window_bounds = array<i64: 1, 1>}, {transform_indices = @transform_7, window_bounds = array<i64: 1, 512>}]} {
    %c0_i32 = arith.constant 0 : i32
    %0 = arith.cmpi eq, %arg1, %c0_i32 : i32
    %1 = arith.extui %0 : i1 to i32
    %c0_i32_0 = arith.constant 0 : i32
    %2 = arith.cmpi ne, %1, %c0_i32_0 : i32
    scf.if %2 {
      %c0_17 = arith.constant 0 : index
      %c0_18 = arith.constant 0 : index
      %28 = vector.load %arg4[%c0_17, %c0_18] : memref<128x32xbf16, #tpu.memory_space<vmem>>, vector<128x32xbf16>
      %c0_19 = arith.constant 0 : index
      %c0_20 = arith.constant 0 : index
      %29 = vector.load %arg2[%c0_19, %c0_20] : memref<32x512xbf16, #tpu.memory_space<vmem>>, vector<32x512xbf16>
      %cst_21 = arith.constant dense<0.000000e+00> : vector<128x512xf32>
      %30 = tpu.matmul %28, %29, %cst_21 {dimension_numbers = #tpu.dot_dimension_numbers<[1], [0], [0], [1], [0, 0, 1, 1], [], []>} : vector<128x32xbf16>, vector<32x512xbf16>, vector<128x512xf32> -> vector<128x512xf32>
      %c0_22 = arith.constant 0 : index
      %c0_23 = arith.constant 0 : index
      %31 = vector.load %arg5[%c0_22, %c0_23] : memref<128x1xf32, #tpu.memory_space<vmem>>, vector<128x1xf32>
      %32 = vector.broadcast %31 : vector<128x1xf32> to vector<128x512xf32>
      %33 = arith.addf %30, %32 : vector<128x512xf32>
      %34 = arith.truncf %33 : vector<128x512xf32> to vector<128x512xbf16>
      %c0_24 = arith.constant 0 : index
      %c0_25 = arith.constant 0 : index
      %35 = vector.load %arg10[%c0_24, %c0_25] : memref<128x512xbf16, #tpu.memory_space<vmem>>, vector<128x512xbf16>
      tpu.vector_store %arg10[%c0_24, %c0_25], %34 {strides = array<i32>} : memref<128x512xbf16, #tpu.memory_space<vmem>>, vector<128x512xbf16>,
      %cst_26 = arith.constant 0.000000e+00 : f32
      %36 = vector.broadcast %cst_26 : f32 to vector<1x512xf32>
      %c0_27 = arith.constant 0 : index
      %c0_28 = arith.constant 0 : index
      %37 = vector.load %arg8[%c0_27, %c0_28] : memref<1x1xf32, #tpu.memory_space<vmem>>, vector<1x1xf32>
      %38 = vector.broadcast %37 : vector<1x1xf32> to vector<1x512xf32>
      %39 = arith.addf %36, %38 : vector<1x512xf32>
      %c0_29 = arith.constant 0 : index
      %c0_30 = arith.constant 0 : index
      %40 = vector.load %arg9[%c0_29, %c0_30] : memref<1x512xf32, #tpu.memory_space<vmem>>, vector<1x512xf32>
      tpu.vector_store %arg9[%c0_29, %c0_30], %39 {strides = array<i32>} : memref<1x512xf32, #tpu.memory_space<vmem>>, vector<1x512xf32>,
    } else {
    }
    %c0 = arith.constant 0 : index
    %c0_1 = arith.constant 0 : index
    %3 = vector.load %arg3[%c0, %c0_1] : memref<512x32xbf16, #tpu.memory_space<vmem>>, vector<512x32xbf16>
    %c0_2 = arith.constant 0 : index
    %c0_3 = arith.constant 0 : index
    %4 = vector.load %arg6[%c0_2, %c0_3] : memref<32x256xbf16, #tpu.memory_space<vmem>>, vector<32x256xbf16>
    %cst = arith.constant dense<0.000000e+00> : vector<512x256xf32>
    %5 = tpu.matmul %3, %4, %cst {dimension_numbers = #tpu.dot_dimension_numbers<[1], [0], [0], [1], [0, 0, 1, 1], [], []>} : vector<512x32xbf16>, vector<32x256xbf16>, vector<512x256xf32> -> vector<512x256xf32>
    %c0_4 = arith.constant 0 : index
    %c0_5 = arith.constant 0 : index
    %6 = vector.load %arg7[%c0_4, %c0_5] : memref<1x256xf32, #tpu.memory_space<vmem>>, vector<1x256xf32>
    %7 = vector.broadcast %6 : vector<1x256xf32> to vector<512x256xf32>
    %8 = arith.addf %5, %7 : vector<512x256xf32>
    %9 = vector.extract_strided_slice %8 {offsets = [0, 0], sizes = [512, 128], strides = [1, 1]} : vector<512x256xf32> to vector<512x128xf32>
    %10 = arith.truncf %9 : vector<512x128xf32> to vector<512x128xbf16>
    %11 = vector.extract_strided_slice %8 {offsets = [0, 128], sizes = [512, 1], strides = [1, 1]} : vector<512x256xf32> to vector<512x1xf32>
    %c0_6 = arith.constant 0 : index
    %c0_7 = arith.constant 0 : index
    %12 = vector.load %arg10[%c0_6, %c0_7] : memref<128x512xbf16, #tpu.memory_space<vmem>>, vector<128x512xbf16>
    %cst_8 = arith.constant dense<0.000000e+00> : vector<512x512xf32>
    %13 = tpu.matmul %10, %12, %cst_8 {dimension_numbers = #tpu.dot_dimension_numbers<[1], [0], [0], [1], [0, 0, 1, 1], [], []>} : vector<512x128xbf16>, vector<128x512xbf16>, vector<512x512xf32> -> vector<512x512xf32>
    %cst_9 = arith.constant 5.000000e-01 : f32
    %14 = vector.broadcast %cst_9 : f32 to vector<512x512xf32>
    %15 = arith.mulf %14, %13 : vector<512x512xf32>
    %16 = math.tanh %15 : vector<512x512xf32>
    %cst_10 = arith.constant 5.000000e-01 : f32
    %17 = vector.broadcast %cst_10 : f32 to vector<512x512xf32>
    %18 = arith.mulf %17, %16 : vector<512x512xf32>
    %cst_11 = arith.constant 5.000000e-01 : f32
    %19 = vector.broadcast %cst_11 : f32 to vector<512x512xf32>
    %20 = arith.addf %18, %19 : vector<512x512xf32>
    %c0_12 = arith.constant 0 : index
    %c0_13 = arith.constant 0 : index
    %21 = vector.load %arg9[%c0_12, %c0_13] : memref<1x512xf32, #tpu.memory_space<vmem>>, vector<1x512xf32>
    %22 = vector.broadcast %11 : vector<512x1xf32> to vector<512x512xf32>
    %23 = arith.mulf %20, %22 : vector<512x512xf32>
    %cst_14 = arith.constant dense<0.000000e+00> : vector<512xf32>
    %24 = vector.multi_reduction <add>, %23, %cst_14 [0] : vector<512x512xf32> to vector<512xf32>
    %25 = vector.shape_cast %24 : vector<512xf32> to vector<1x512xf32>
    %26 = arith.addf %21, %25 : vector<1x512xf32>
    %c0_15 = arith.constant 0 : index
    %c0_16 = arith.constant 0 : index
    %27 = vector.load %arg9[%c0_15, %c0_16] : memref<1x512xf32, #tpu.memory_space<vmem>>, vector<1x512xf32>
    tpu.vector_store %arg9[%c0_15, %c0_16], %26 {strides = array<i32>} : memref<1x512xf32, #tpu.memory_space<vmem>>, vector<1x512xf32>,
    return
  }
  func.func @transform_0(%arg0: i32, %arg1: i32) -> (i32, i32) {
    %c0_i32 = arith.constant 0 : i32
    %c0_i32_0 = arith.constant 0 : i32
    return %c0_i32, %arg0 : i32, i32
  }
  func.func @transform_1(%arg0: i32, %arg1: i32) -> (i32, i32) {
    %c0_i32 = arith.constant 0 : i32
    %c0_i32_0 = arith.constant 0 : i32
    return %arg1, %c0_i32 : i32, i32
  }
  func.func @transform_2(%arg0: i32, %arg1: i32) -> (i32, i32) {
    %c0_i32 = arith.constant 0 : i32
    %c0_i32_0 = arith.constant 0 : i32
    %c0_i32_1 = arith.constant 0 : i32
    return %c0_i32, %c0_i32_0 : i32, i32
  }
  func.func @transform_3(%arg0: i32, %arg1: i32) -> (i32, i32) {
    %c0_i32 = arith.constant 0 : i32
    %c0_i32_0 = arith.constant 0 : i32
    %c0_i32_1 = arith.constant 0 : i32
    return %c0_i32, %c0_i32_0 : i32, i32
  }
  func.func @transform_4(%arg0: i32, %arg1: i32) -> (i32, i32) {
    %c0_i32 = arith.constant 0 : i32
    %c0_i32_0 = arith.constant 0 : i32
    %c0_i32_1 = arith.constant 0 : i32
    return %c0_i32, %c0_i32_0 : i32, i32
  }
  func.func @transform_5(%arg0: i32, %arg1: i32) -> (i32, i32) {
    %c0_i32 = arith.constant 0 : i32
    %c0_i32_0 = arith.constant 0 : i32
    %c0_i32_1 = arith.constant 0 : i32
    return %c0_i32, %c0_i32_0 : i32, i32
  }
  func.func @transform_6(%arg0: i32, %arg1: i32) -> (i32, i32) {
    %c0_i32 = arith.constant 0 : i32
    %c0_i32_0 = arith.constant 0 : i32
    %c0_i32_1 = arith.constant 0 : i32
    return %c0_i32, %c0_i32_0 : i32, i32
  }
  func.func @transform_7(%arg0: i32, %arg1: i32) -> (i32, i32) {
    %c0_i32 = arith.constant 0 : i32
    %c0_i32_0 = arith.constant 0 : i32
    return %c0_i32, %arg0 : i32, i32
  }
}

</mosaic_0001>

<llo_original>
// kernel: tpu_custom_call.1
$region0: #{tpu_custom_call.1}
  #allocation0 [shape = 'u32[]', space=smem, size = 0x4, offset = 0x4, fixed_abs, tag = 'smem constant byte address 0x4 - core index']
  #allocation1 [shape = 'u32[144,128]{1,0:T(1,128)}', space=vmem, size = 0x12000, scoped, tag = 'internal scratch']
  #allocation2 [shape = 'bf16[128,512]{1,0:T(16,128)(2,1)}', space=vmem, size = 0x20000, scoped, tag = 'scratch operand']
  #allocation3 [shape = 'f32[1,1]{1,0:T(1,128)S(1)}', space=vmem, size = 0x200, scoped, tag = 'scoped memory for tpu_custom_call.1']
  %s0 = inlined_call_operand.vmem [shape: bf16[32,1024], index: 0, kind: input, shape index: {}]
  %s1 = inlined_call_operand.vmem [shape: bf16[1024,32], index: 1, kind: input, shape index: {}]
  %s2 = inlined_call_operand.vmem [shape: bf16[128,32], index: 2, kind: input, shape index: {}]
  %s3 = inlined_call_operand.vmem [shape: f32[128,1], index: 3, kind: input, shape index: {}]
  %s4 = inlined_call_operand.vmem [shape: bf16[32,256], index: 4, kind: input, shape index: {}]
  %s5 = inlined_call_operand.vmem [shape: f32[1,256], index: 5, kind: input, shape index: {}]
  %s6 = inlined_call_operand.<no memory space> [shape: f32[1,1], index: 6, kind: input, shape index: {}]
  %s7 = inlined_call_operand.hbm [shape: f32[1,1024], index: 7, kind: output, shape index: {}]
  %s8 = sld [smem:[#allocation0]]
  $region88: #{tpu_custom_call.1} parent=0
    _
  %s10 = ssub.s32 1, %s8
  %s11 = scalar_select 0, %s10, %s8
  %v12 = vstv %s6
  %13 = vst [vmem:[#allocation3] sm:$0x1] %v12
  $region1: #{tpu_custom_call.1} parent=0
    #allocation4 [shape = 'u8[65536]{0}', space=vmem, size = 0x10000, scoped, tag = 'input window, operand 0']
    #allocation5 [shape = 'u8[4096]{0}', space=vmem, size = 0x1000, scoped, tag = 'output window, operand 0']
    #allocation6 [shape = 's32[2]{0}', space=sflag, size = 0x8, scoped, tag = 'scoped memory for tpu_custom_call.1']
    %14 = vsyncpa [#allocation6], 0
    %s15 = scalar_lea.sflag [#allocation6], 1
    %16 = vsyncpa %s15, 0
    loop: start=0, step=1, limit=6
    $region2: #{tpu_custom_call.1} parent=1 // loop_pre_header
      _
    $region3: #{tpu_custom_call.1} parent=1 // loop_header
      %s18 = sphi 0, %s22
      %p19 = scmp.ge.s32.totalorder %s18, 6
      %s25 = sphi 0, %s37
      %s26 = sphi 0, %s33
      %s27 = sphi 0, %s25
      %s28 = sphi 0, %s26
      %s29 = sphi 0, %s27
      %s30 = sphi 0, %s28
      %s40 = sphi 0, %s42
      %s43 = sphi 0, %s40
      %s44 = sphi 0, %s43
      %s60 = sphi 0, %s44
      %s66 = sphi 0, %s68
      %s69 = sphi 0, %s66
      %s70 = sphi 0, %s69
      %s86 = sphi 0, %s70
      %s90 = sphi 0, %s90
      %s92 = sphi 0, %s90
      %s93 = sphi 0, %s92
      %s107 = sphi 0, %s93
      %s111 = sphi 0, %s111
      %s113 = sphi 0, %s111
      %s114 = sphi 0, %s113
      %s128 = sphi 0, %s114
      %s132 = sphi 0, %s132
      %s134 = sphi 0, %s132
      %s135 = sphi 0, %s134
      %s149 = sphi 0, %s135
      %s153 = sphi 0, %s153
      %s155 = sphi 0, %s153
      %s156 = sphi 0, %s155
      %s170 = sphi 0, %s156
      %s174 = sphi 0, %s174
      %s176 = sphi 0, %s174
      %s177 = sphi 0, %s176
      %s191 = sphi 0, %s177
      %s197 = sphi 0, %s199
      %s200 = sphi 0, %s197
      %s201 = sphi 0, %s200
      %s217 = sphi 0, %s201
    $region4: #{tpu_custom_call.1} parent=1 // loop_header_branch
      %21 = sbr.rel (%p19) target = $region8
    $region5: #{tpu_custom_call.1} parent=1 // loop_body
      %s23 = ssub.s32 %s18, 1
      %s24 = ssub.s32 %s18, 2
      %s31 = sadd.s32 1, %s26
      %p32 = scmp.ge.s32.totalorder %s31, 2
      %s33 = scalar_select %p32, 0, %s31
      %s34 = sadd.s32 1, %s25
      %s35 = scalar_select %p32, %s34, %s25
      %p36 = scmp.ge.s32.totalorder %s35, 2
      %s37 = scalar_select %p36, 0, %s35
      %s38 = ssub.s32 %s25, %s37
      %p39 = scmp.eq.s32.totalorder %s38, 0
      %s41 = sadd.s32 %s40, 1
      %s42 = scalar_select %p39, %s40, %s41
      %p45 = pneg %p39
      %p46 = scmp.eq.s32.totalorder %s18, 3
      %p47 = por %p45, %p46
      %p48 = scmp.ne.s32.totalorder %s40, %s43
      %p49 = scmp.eq.s32.totalorder %s18, 0
      %p50 = por %p48, %p49
      %p51 = scmp.ne.s32.totalorder %s40, %s43
      %p52 = scmp.eq.s32.totalorder %s23, 3
      %p53 = por %p51, %p52
      %p54 = scmp.ne.s32.totalorder %s43, %s44
      %p55 = scmp.eq.s32.totalorder %s23, 0
      %p56 = por %p54, %p55
      %p57 = scmp.ne.s32.totalorder %s43, %s44
      %p58 = scmp.eq.s32.totalorder %s24, 3
      %p59 = por %p57, %p58
      %p61 = scmp.ne.s32.totalorder %s44, %s60
      %p62 = scmp.eq.s32.totalorder %s24, 0
      %p63 = por %p61, %p62
      %s64 = ssub.s32 %s26, %s33
      %p65 = scmp.eq.s32.totalorder %s64, 0
      %s67 = sadd.s32 %s66, 1
      %s68 = scalar_select %p65, %s66, %s67
      %p71 = pneg %p65
      %p72 = scmp.eq.s32.totalorder %s18, 3
      %p73 = por %p71, %p72
      %p74 = scmp.ne.s32.totalorder %s66, %s69
      %p75 = scmp.eq.s32.totalorder %s18, 0
      %p76 = por %p74, %p75
      %p77 = scmp.ne.s32.totalorder %s66, %s69
      %p78 = scmp.eq.s32.totalorder %s23, 3
      %p79 = por %p77, %p78
      %p80 = scmp.ne.s32.totalorder %s69, %s70
      %p81 = scmp.eq.s32.totalorder %s23, 0
      %p82 = por %p80, %p81
      %p83 = scmp.ne.s32.totalorder %s69, %s70
      %p84 = scmp.eq.s32.totalorder %s24, 3
      %p85 = por %p83, %p84
      %p87 = scmp.ne.s32.totalorder %s70, %s86
      %p88 = scmp.eq.s32.totalorder %s24, 0
      %p89 = por %p87, %p88
      %s91 = sadd.s32 %s90, 1
      %p94 = scmp.eq.s32.totalorder %s18, 3
      %p95 = scmp.ne.s32.totalorder %s90, %s92
      %p96 = scmp.eq.s32.totalorder %s18, 0
      %p97 = por %p95, %p96
      %p98 = scmp.ne.s32.totalorder %s90, %s92
      %p99 = scmp.eq.s32.totalorder %s23, 3
      %p100 = por %p98, %p99
      %p101 = scmp.ne.s32.totalorder %s92, %s93
      %p102 = scmp.eq.s32.totalorder %s23, 0
      %p103 = por %p101, %p102
      %p104 = scmp.ne.s32.totalorder %s92, %s93
      %p105 = scmp.eq.s32.totalorder %s24, 3
      %p106 = por %p104, %p105
      %p108 = scmp.ne.s32.totalorder %s93, %s107
      %p109 = scmp.eq.s32.totalorder %s24, 0
      %p110 = por %p108, %p109
      %s112 = sadd.s32 %s111, 1
      %p115 = scmp.eq.s32.totalorder %s18, 3
      %p116 = scmp.ne.s32.totalorder %s111, %s113
      %p117 = scmp.eq.s32.totalorder %s18, 0
      %p118 = por %p116, %p117
      %p119 = scmp.ne.s32.totalorder %s111, %s113
      %p120 = scmp.eq.s32.totalorder %s23, 3
      %p121 = por %p119, %p120
      %p122 = scmp.ne.s32.totalorder %s113, %s114
      %p123 = scmp.eq.s32.totalorder %s23, 0
      %p124 = por %p122, %p123
      %p125 = scmp.ne.s32.totalorder %s113, %s114
      %p126 = scmp.eq.s32.totalorder %s24, 3
      %p127 = por %p125, %p126
      %p129 = scmp.ne.s32.totalorder %s114, %s128
      %p130 = scmp.eq.s32.totalorder %s24, 0
      %p131 = por %p129, %p130
      %s133 = sadd.s32 %s132, 1
      %p136 = scmp.eq.s32.totalorder %s18, 3
      %p137 = scmp.ne.s32.totalorder %s132, %s134
      %p138 = scmp.eq.s32.totalorder %s18, 0
      %p139 = por %p137, %p138
      %p140 = scmp.ne.s32.totalorder %s132, %s134
      %p141 = scmp.eq.s32.totalorder %s23, 3
      %p142 = por %p140, %p141
      %p143 = scmp.ne.s32.totalorder %s134, %s135
      %p144 = scmp.eq.s32.totalorder %s23, 0
      %p145 = por %p143, %p144
      %p146 = scmp.ne.s32.totalorder %s134, %s135
      %p147 = scmp.eq.s32.totalorder %s24, 3
      %p148 = por %p146, %p147
      %p150 = scmp.ne.s32.totalorder %s135, %s149
      %p151 = scmp.eq.s32.totalorder %s24, 0
      %p152 = por %p150, %p151
      %s154 = sadd.s32 %s153, 1
      %p157 = scmp.eq.s32.totalorder %s18, 3
      %p158 = scmp.ne.s32.totalorder %s153, %s155
      %p159 = scmp.eq.s32.totalorder %s18, 0
      %p160 = por %p158, %p159
      %p161 = scmp.ne.s32.totalorder %s153, %s155
      %p162 = scmp.eq.s32.totalorder %s23, 3
      %p163 = por %p161, %p162
      %p164 = scmp.ne.s32.totalorder %s155, %s156
      %p165 = scmp.eq.s32.totalorder %s23, 0
      %p166 = por %p164, %p165
      %p167 = scmp.ne.s32.totalorder %s155, %s156
      %p168 = scmp.eq.s32.totalorder %s24, 3
      %p169 = por %p167, %p168
      %p171 = scmp.ne.s32.totalorder %s156, %s170
      %p172 = scmp.eq.s32.totalorder %s24, 0
      %p173 = por %p171, %p172
      %s175 = sadd.s32 %s174, 1
      %p178 = scmp.eq.s32.totalorder %s18, 3
      %p179 = scmp.ne.s32.totalorder %s174, %s176
      %p180 = scmp.eq.s32.totalorder %s18, 0
      %p181 = por %p179, %p180
      %p182 = scmp.ne.s32.totalorder %s174, %s176
      %p183 = scmp.eq.s32.totalorder %s23, 3
      %p184 = por %p182, %p183
      %p185 = scmp.ne.s32.totalorder %s176, %s177
      %p186 = scmp.eq.s32.totalorder %s23, 0
      %p187 = por %p185, %p186
      %p188 = scmp.ne.s32.totalorder %s176, %s177
      %p189 = scmp.eq.s32.totalorder %s24, 3
      %p190 = por %p188, %p189
      %p192 = scmp.ne.s32.totalorder %s177, %s191
      %p193 = scmp.eq.s32.totalorder %s24, 0
      %p194 = por %p192, %p193
      %s195 = ssub.s32 %s25, %s37
      %p196 = scmp.eq.s32.totalorder %s195, 0
      %s198 = sadd.s32 %s197, 1
      %s199 = scalar_select %p196, %s197, %s198
      %p202 = pneg %p196
      %p203 = scmp.eq.s32.totalorder %s18, 3
      %p204 = por %p202, %p203
      %p205 = scmp.ne.s32.totalorder %s197, %s200
      %p206 = scmp.eq.s32.totalorder %s18, 0
      %p207 = por %p205, %p206
      %p208 = scmp.ne.s32.totalorder %s197, %s200
      %p209 = scmp.eq.s32.totalorder %s23, 3
      %p210 = por %p208, %p209
      %p211 = scmp.ne.s32.totalorder %s200, %s201
      %p212 = scmp.eq.s32.totalorder %s23, 0
      %p213 = por %p211, %p212
      %p214 = scmp.ne.s32.totalorder %s200, %s201
      %p215 = scmp.eq.s32.totalorder %s24, 3
      %p216 = por %p214, %p215
      %p218 = scmp.ne.s32.totalorder %s201, %s217
      %p219 = scmp.eq.s32.totalorder %s24, 0
      %p220 = por %p218, %p219
      %p221 = scmp.le.s32.totalorder 1, %s18
      %p222 = scmp.lt.s32.totalorder %s18, 5
      %p223 = pnand %p221, %p222
      %p224 = pneg %p223
      // Predicated region
      $region9: #{tpu_custom_call.1} parent=5 // pred_check
        _
      $region10: #{tpu_custom_call.1} parent=5 // pred_check_branch
        %226 = sbr.rel (%p223) target = $region12
      $region11: #{tpu_custom_call.1} parent=5 // pred_region
        %s227 = ssub.s32 %s18, 1
        // Predicated region
        $region13: #{tpu_custom_call.1} parent=11 // pred_check
          %p228 = pneg %p103
        $region14: #{tpu_custom_call.1} parent=11 // pred_check_branch
          %230 = sbr.rel (%p228) target = $region16
        $region15: #{tpu_custom_call.1} parent=11 // pred_region
          _
        $region16: #{tpu_custom_call.1} parent=11 // pred_fallthru
          _
        // Predicated region
        $region17: #{tpu_custom_call.1} parent=11 // pred_check
          %p231 = pneg %p124
        $region18: #{tpu_custom_call.1} parent=11 // pred_check_branch
          %233 = sbr.rel (%p231) target = $region20
        $region19: #{tpu_custom_call.1} parent=11 // pred_region
          _
        $region20: #{tpu_custom_call.1} parent=11 // pred_fallthru
          _
        // Predicated region
        $region21: #{tpu_custom_call.1} parent=11 // pred_check
          %p234 = pneg %p145
        $region22: #{tpu_custom_call.1} parent=11 // pred_check_branch
          %236 = sbr.rel (%p234) target = $region24
        $region23: #{tpu_custom_call.1} parent=11 // pred_region
          _
        $region24: #{tpu_custom_call.1} parent=11 // pred_fallthru
          _
        // Predicated region
        $region25: #{tpu_custom_call.1} parent=11 // pred_check
          %p237 = pneg %p166
        $region26: #{tpu_custom_call.1} parent=11 // pred_check_branch
          %239 = sbr.rel (%p237) target = $region28
        $region27: #{tpu_custom_call.1} parent=11 // pred_region
          _
        $region28: #{tpu_custom_call.1} parent=11 // pred_fallthru
          _
        // Predicated region
        $region29: #{tpu_custom_call.1} parent=11 // pred_check
          %p240 = pneg %p187
        $region30: #{tpu_custom_call.1} parent=11 // pred_check_branch
          %242 = sbr.rel (%p240) target = $region32
        $region31: #{tpu_custom_call.1} parent=11 // pred_region
          _
        $region32: #{tpu_custom_call.1} parent=11 // pred_fallthru
          _
      $region12: #{tpu_custom_call.1} parent=5 // pred_fallthru
        _
      %p243 = scmp.lt.s32.totalorder %s18, 4
      // Predicated region
      $region33: #{tpu_custom_call.1} parent=5 // pred_check
        %p244 = pneg %p243
      $region34: #{tpu_custom_call.1} parent=5 // pred_check_branch
        %246 = sbr.rel (%p244) target = $region36
      $region35: #{tpu_custom_call.1} parent=5 // pred_region
        // Predicated region
        $region37: #{tpu_custom_call.1} parent=35 // pred_check
          %p247 = pneg %p50
        $region38: #{tpu_custom_call.1} parent=35 // pred_check_branch
          %249 = sbr.rel (%p247) target = $region40
        $region39: #{tpu_custom_call.1} parent=35 // pred_region
          %s250 = sand.u32 %s40, 1
          %s251 = sand.u32 %s40, 1
          %s252 = smul.addr %s251, 64
          %s253 = scalar_lea.vmem [#allocation4], %s252
          %s254 = smul.u32 4, %s25
          %s255 = smul.addr %s254, 4
          %s256 = scalar_lea.vmem %s0, %s255
          // Predicated region
          $region41: #{tpu_custom_call.1} parent=39 // pred_check
            _
          $region42: #{tpu_custom_call.1} parent=39 // pred_check_branch
            %258 = sbr.rel (0) target = $region44
          $region43: #{tpu_custom_call.1} parent=39 // pred_region
            // Predicated region
            $region45: #{tpu_custom_call.1} parent=43 // pred_check
              _
            $region46: #{tpu_custom_call.1} parent=43 // pred_check_branch
              %260 = sbr.rel (0) target = $region48
            $region47: #{tpu_custom_call.1} parent=43 // pred_region
              loop: start=0, step=1, limit=1
              $region49: #{tpu_custom_call.1} parent=47 // loop_pre_header
                _
              $region50: #{tpu_custom_call.1} parent=47 // loop_header
                %s262 = sphi 0, %s266
                %p263 = scmp.ge.s32.totalorder %s262, 1
                %s267 = sphi %s256, %s256
                %s268 = sphi %s253, %s253
              $region51: #{tpu_custom_call.1} parent=47 // loop_header_branch
                %265 = sbr.rel (%p263) target = $region55
              $region52: #{tpu_custom_call.1} parent=47 // loop_body
                %v269 = vld [vmem:[%s267] sm:$0xff]
                %270 = vst [vmem:[%s268] sm:$0xff] %v269
                %v271 = vld [vmem:[%s267 + $0x8] sm:$0xff]
                %272 = vst [vmem:[%s268 + $0x8] sm:$0xff] %v271
                %v273 = vld [vmem:[%s267 + $0x20] sm:$0xff]
                %274 = vst [vmem:[%s268 + $0x10] sm:$0xff] %v273
                %v275 = vld [vmem:[%s267 + $0x28] sm:$0xff]
                %276 = vst [vmem:[%s268 + $0x18] sm:$0xff] %v275
                %v277 = vld [vmem:[%s267 + $0x40] sm:$0xff]
                %278 = vst [vmem:[%s268 + $0x20] sm:$0xff] %v277
                %v279 = vld [vmem:[%s267 + $0x48] sm:$0xff]
                %280 = vst [vmem:[%s268 + $0x28] sm:$0xff] %v279
                %v281 = vld [vmem:[%s267 + $0x60] sm:$0xff]
                %282 = vst [vmem:[%s268 + $0x30] sm:$0xff] %v281
                %v283 = vld [vmem:[%s267 + $0x68] sm:$0xff]
                %284 = vst [vmem:[%s268 + $0x38] sm:$0xff] %v283
              $region53: #{tpu_custom_call.1} parent=47 // loop_footer
                %s266 = sadd.s32 1, %s262
              $region54: #{tpu_custom_call.1} parent=47 // loop_footer_branch
                %261 = sbr.rel target = $region50
              $region55: #{tpu_custom_call.1} parent=47 // loop_exit
                _
            $region48: #{tpu_custom_call.1} parent=43 // pred_fallthru
              _
            // Predicated region
            $region56: #{tpu_custom_call.1} parent=43 // pred_check
              _
            $region57: #{tpu_custom_call.1} parent=43 // pred_check_branch
              %286 = sbr.rel target = $region59
            $region58: #{tpu_custom_call.1} parent=43 // pred_region
              _
            $region59: #{tpu_custom_call.1} parent=43 // pred_fallthru
              _
          $region44: #{tpu_custom_call.1} parent=39 // pred_fallthru
            _
          %287 = vnop
        $region40: #{tpu_custom_call.1} parent=35 // pred_fallthru
          _
        // Predicated region
        $region60: #{tpu_custom_call.1} parent=35 // pred_check
          %p288 = pneg %p76
        $region61: #{tpu_custom_call.1} parent=35 // pred_check_branch
          %290 = sbr.rel (%p288) target = $region63
        $region62: #{tpu_custom_call.1} parent=35 // pred_region
          %s291 = smul.u32 64, %s26
          %p292 = scmp.lt.s32.totalorder %s291, 127
          %s293 = scalar_select %p292, %s291, 127
          %s294 = smul.addr %s293, 4
          %s295 = scalar_lea.vmem %s1, %s294
          %s296 = smul.u32 64, %s26
        $region63: #{tpu_custom_call.1} parent=35 // pred_fallthru
          _
      $region36: #{tpu_custom_call.1} parent=5 // pred_fallthru
        _
      %p297 = scmp.le.s32.totalorder 1, %s18
      %p298 = scmp.lt.s32.totalorder %s18, 5
      %p299 = pnand %p297, %p298
      %p300 = pneg %p299
      // Predicated region
      $region64: #{tpu_custom_call.1} parent=5 // pred_check
        _
      $region65: #{tpu_custom_call.1} parent=5 // pred_check_branch
        %302 = sbr.rel (%p299) target = $region67
      $region66: #{tpu_custom_call.1} parent=5 // pred_region
        %s303 = ssub.s32 %s18, 1
        %s304 = sand.u32 %s43, 1
        %s305 = sand.u32 %s43, 1
        %s306 = smul.addr %s305, 64
        %s307 = scalar_lea.vmem [#allocation4], %s306
        // Predicated region
        $region68: #{tpu_custom_call.1} parent=66 // pred_check
          %p308 = pneg %p56
        $region69: #{tpu_custom_call.1} parent=66 // pred_check_branch
          %310 = sbr.rel (%p308) target = $region71
        $region70: #{tpu_custom_call.1} parent=66 // pred_region
          _
        $region71: #{tpu_custom_call.1} parent=66 // pred_fallthru
          _
        %s311 = sand.u32 %s43, 1
        %s312 = sand.u32 %s43, 1
        %s313 = smul.addr %s312, 64
        %s314 = scalar_lea.vmem [#allocation4], %s313
        %p315 = pneg %p56
        %p316 = pneg %p53
        %s317 = smul.u32 64, %s28
        %p318 = scmp.lt.s32.totalorder %s317, 127
        %s319 = scalar_select %p318, %s317, 127
        %s320 = smul.addr %s319, 4
        %s321 = scalar_lea.vmem %s1, %s320
        %p322 = pneg %p82
        %p323 = pneg %p79
        %p324 = pneg %p103
        %p325 = pneg %p100
        %p326 = pneg %p124
        %p327 = pneg %p121
        %p328 = pneg %p145
        %p329 = pneg %p142
        %p330 = pneg %p166
        %p331 = pneg %p163
        %p332 = pneg %p187
        %p333 = pneg %p184
        %p334 = pneg %p213
        %p335 = pneg %p210
        %s336 = sand.u32 %s200, 1
        %s337 = scalar_lea.sflag [#allocation6], %s336
        %s338 = sand.u32 %s200, 1
        %s339 = smul.addr %s338, 4
        %s340 = scalar_lea.vmem [#allocation5], %s339
        %s341 = smul.u32 4, %s27
        %s342 = smul.u32 64, %s28
        %p343 = scmp.lt.s32.totalorder %s342, 127
        %s344 = scalar_select %p343, %s342, 127
        %s345 = smul.addr %s344, 4
        %s346 = scalar_lea.vmem %s1, %s345
        %s347 = smul.u32 64, %s28
        %s348 = smul.u32 4, %s27
        %p350 = scmp.eq.s32.totalorder %s28, 0
        // Predicated region
        $region72: #{tpu_custom_call.1} parent=66 // pred_check
          %p351 = pneg %p350
        $region73: #{tpu_custom_call.1} parent=66 // pred_check_branch
          %353 = sbr.rel (%p351) target = $region75
        $region74: #{tpu_custom_call.1} parent=66 // pred_region
          %v354 = vld [vmem:[%s2] sm:$0xf]
          %v355 = vld [vmem:[%s2 + $0x4] sm:$0xf]
          %v356 = vld [vmem:[%s2 + $0x8] sm:$0xf]
          %v357 = vld [vmem:[%s2 + $0xc] sm:$0xf]
          %v358 = vld [vmem:[%s2 + $0x10] sm:$0xf]
          %v359 = vld [vmem:[%s2 + $0x14] sm:$0xf]
          %v360 = vld [vmem:[%s2 + $0x18] sm:$0xf]
          %v361 = vld [vmem:[%s2 + $0x1c] sm:$0xf]
          %v362 = vld [vmem:[%s2 + $0x20] sm:$0xf]
          %v363 = vld [vmem:[%s2 + $0x24] sm:$0xf]
          %v364 = vld [vmem:[%s2 + $0x28] sm:$0xf]
          %v365 = vld [vmem:[%s2 + $0x2c] sm:$0xf]
          %v366 = vld [vmem:[%s2 + $0x30] sm:$0xf]
          %v367 = vld [vmem:[%s2 + $0x34] sm:$0xf]
          %v368 = vld [vmem:[%s2 + $0x38] sm:$0xf]
          %v369 = vld [vmem:[%s2 + $0x3c] sm:$0xf]
          %v370 = vld [vmem:[%s307] sm:$0xff]
          %v371 = vld [vmem:[%s307 + $0x8] sm:$0xff]
          %v372 = vld [vmem:[%s307 + $0x10] sm:$0xff]
          %v373 = vld [vmem:[%s307 + $0x18] sm:$0xff]
          %v374 = vld [vmem:[%s307 + $0x20] sm:$0xff]
          %v375 = vld [vmem:[%s307 + $0x28] sm:$0xff]
          %v376 = vld [vmem:[%s307 + $0x30] sm:$0xff]
          %v377 = vld [vmem:[%s307 + $0x38] sm:$0xff]
          %v378 = vld [vmem:[%s3] sm:$0xff]
          %v379 = vld [vmem:[%s3 + $0x8] sm:$0xff]
          %v380 = vld [vmem:[%s3 + $0x10] sm:$0xff]
          %v381 = vld [vmem:[%s3 + $0x18] sm:$0xff]
          %v382 = vld [vmem:[%s3 + $0x20] sm:$0xff]
          %v383 = vld [vmem:[%s3 + $0x28] sm:$0xff]
          %v384 = vld [vmem:[%s3 + $0x30] sm:$0xff]
          %v385 = vld [vmem:[%s3 + $0x38] sm:$0xff]
          %v386 = vld [vmem:[%s3 + $0x40] sm:$0xff]
          %v387 = vld [vmem:[%s3 + $0x48] sm:$0xff]
          %v388 = vld [vmem:[%s3 + $0x50] sm:$0xff]
          %v389 = vld [vmem:[%s3 + $0x58] sm:$0xff]
          %v390 = vld [vmem:[%s3 + $0x60] sm:$0xff]
          %v391 = vld [vmem:[%s3 + $0x68] sm:$0xff]
          %v392 = vld [vmem:[%s3 + $0x70] sm:$0xff]
          %v393 = vld [vmem:[%s3 + $0x78] sm:$0xff]
          %395 = vset.pattern.permute.xlu0 0
          %396 = vperm.xlu0 %395, %v378
          %v397 = vpop.permute.xlu0 %396
          %400 = vset.pattern.permute.xlu0 0
          %401 = vperm.xlu0 %400, %v379
          %v402 = vpop.permute.xlu0 %401
          %405 = vset.pattern.permute.xlu0 0
          %406 = vperm.xlu0 %405, %v380
          %v407 = vpop.permute.xlu0 %406
          %410 = vset.pattern.permute.xlu0 0
          %411 = vperm.xlu0 %410, %v381
          %v412 = vpop.permute.xlu0 %411
          %415 = vset.pattern.permute.xlu0 0
          %416 = vperm.xlu0 %415, %v382
          %v417 = vpop.permute.xlu0 %416
          %420 = vset.pattern.permute.xlu0 0
          %421 = vperm.xlu0 %420, %v383
          %v422 = vpop.permute.xlu0 %421
          %425 = vset.pattern.permute.xlu0 0
          %426 = vperm.xlu0 %425, %v384
          %v427 = vpop.permute.xlu0 %426
          %430 = vset.pattern.permute.xlu0 0
          %431 = vperm.xlu0 %430, %v385
          %v432 = vpop.permute.xlu0 %431
          %435 = vset.pattern.permute.xlu0 0
          %436 = vperm.xlu0 %435, %v386
          %v437 = vpop.permute.xlu0 %436
          %440 = vset.pattern.permute.xlu0 0
          %441 = vperm.xlu0 %440, %v387
          %v442 = vpop.permute.xlu0 %441
          %445 = vset.pattern.permute.xlu0 0
          %446 = vperm.xlu0 %445, %v388
          %v447 = vpop.permute.xlu0 %446
          %450 = vset.pattern.permute.xlu0 0
          %451 = vperm.xlu0 %450, %v389
          %v452 = vpop.permute.xlu0 %451
          %455 = vset.pattern.permute.xlu0 0
          %456 = vperm.xlu0 %455, %v390
          %v457 = vpop.permute.xlu0 %456
          %460 = vset.pattern.permute.xlu0 0
          %461 = vperm.xlu0 %460, %v391
          %v462 = vpop.permute.xlu0 %461
          %465 = vset.pattern.permute.xlu0 0
          %466 = vperm.xlu0 %465, %v392
          %v467 = vpop.permute.xlu0 %466
          %470 = vset.pattern.permute.xlu0 0
          %471 = vperm.xlu0 %470, %v393
          %v472 = vpop.permute.xlu0 %471
          %v490 = vunpack.c.l.b16 %v354
          %v491 = vunpack.c.l.b16 %v355
          %v492 = vunpack.c.l.b16 %v356
          %v493 = vunpack.c.l.b16 %v357
          %v494 = vunpack.c.l.b16 %v358
          %v495 = vunpack.c.l.b16 %v359
          %v496 = vunpack.c.l.b16 %v360
          %v497 = vunpack.c.l.b16 %v361
          %v498 = vunpack.c.l.b16 %v362
          %v499 = vunpack.c.l.b16 %v363
          %v500 = vunpack.c.l.b16 %v364
          %v501 = vunpack.c.l.b16 %v365
          %v502 = vunpack.c.l.b16 %v366
          %v503 = vunpack.c.l.b16 %v367
          %v504 = vunpack.c.l.b16 %v368
          %v505 = vunpack.c.l.b16 %v369
          %v506 = vpack.c.b16 %v491, %v490
          %v507 = vpack.c.b16 %v493, %v492
          %v508 = vpack.c.b16 %v495, %v494
          %v509 = vpack.c.b16 %v497, %v496
          %v510 = vpack.c.b16 %v499, %v498
          %v511 = vpack.c.b16 %v501, %v500
          %v512 = vpack.c.b16 %v503, %v502
          %v513 = vpack.c.b16 %v505, %v504
          %v522 = vunpack.c.l.b16 %v370
          %v523 = vunpack.c.h.b16 %v370
          %v524 = vunpack.c.l.b16 %v371
          %v525 = vunpack.c.h.b16 %v371
          %v526 = vunpack.c.l.b16 %v372
          %v527 = vunpack.c.h.b16 %v372
          %v528 = vunpack.c.l.b16 %v373
          %v529 = vunpack.c.h.b16 %v373
          %v530 = vunpack.c.l.b16 %v374
          %v531 = vunpack.c.h.b16 %v374
          %v532 = vunpack.c.l.b16 %v375
          %v533 = vunpack.c.h.b16 %v375
          %v534 = vunpack.c.l.b16 %v376
          %v535 = vunpack.c.h.b16 %v376
          %v536 = vunpack.c.l.b16 %v377
          %v537 = vunpack.c.h.b16 %v377
          %v538 = vpack.c.b16 %v526, %v522
          %v539 = vpack.c.b16 %v527, %v523
          %v540 = vpack.c.b16 %v528, %v524
          %v541 = vpack.c.b16 %v529, %v525
          %v542 = vpack.c.b16 %v534, %v530
          %v543 = vpack.c.b16 %v535, %v531
          %v544 = vpack.c.b16 %v536, %v532
          %v545 = vpack.c.b16 %v537, %v533
          %vm554 = vcmask 261120
          %v556 = vsel %vm554, %v506, 0
          %v559 = vsel %vm554, %v507, 0
          %v562 = vsel %vm554, %v508, 0
          %v565 = vsel %vm554, %v509, 0
          %v568 = vsel %vm554, %v510, 0
          %v571 = vsel %vm554, %v511, 0
          %v574 = vsel %vm554, %v512, 0
          %v577 = vsel %vm554, %v513, 0
          %579 = vmatprep.subr.bf16.mxu0 %v539
          %580 = vmatpush1.bf16.msra.mxu0 %v538
          %581 = vmatprep.subr.bf16.mxu0 %v543
          %582 = vmatpush1.bf16.msra.mxu0 %v542
          %583 = vmatprep.subr.bf16.mxu0 0
          %584 = vmatpush1.bf16.msra.mxu0 0
          %585 = vmatprep.subr.bf16.mxu0 0
          %586 = vmatpush1.bf16.msra.mxu0 0
          %587 = vmatprep.subr.bf16.mxu0 0
          %588 = vmatpush1.bf16.msra.mxu0 0
          %589 = vmatprep.subr.bf16.mxu0 0
          %590 = vmatpush1.bf16.msra.mxu0 0
          %591 = vmatprep.subr.bf16.mxu0 0
          %592 = vmatpush1.bf16.msra.mxu0 0
          %593 = vmatprep.subr.bf16.mxu0 0
          %594 = vmatpush1.bf16.msra.mxu0 0
          %595 = vmatprep.subr.bf16.mxu0 0
          %596 = vmatpush1.bf16.msra.mxu0 0
          %597 = vmatprep.subr.bf16.mxu0 0
          %598 = vmatpush1.bf16.msra.mxu0 0
          %599 = vmatprep.subr.bf16.mxu0 0
          %600 = vmatpush1.bf16.msra.mxu0 0
          %601 = vmatprep.subr.bf16.mxu0 0
          %602 = vmatpush1.bf16.msra.mxu0 0
          %603 = vmatprep.subr.bf16.mxu0 0
          %604 = vmatpush1.bf16.msra.mxu0 0
          %605 = vmatprep.subr.bf16.mxu0 0
          %606 = vmatpush1.bf16.msra.mxu0 0
          %607 = vmatprep.subr.bf16.mxu0 0
          %608 = vmatpush1.bf16.msra.mxu0 0
          %609 = vmatprep.subr.bf16.mxu0 0
          %610 = vmatpush1.bf16.msra.mxu0 0
          %611 = vmatprep.mubr.bf16.mxu0 0
          %612 = vmatmul.mubr.bf16.gmra.mrb[0].mxu0 %v556
          %v613 = vpop.f32.mrb[0].mxu0
          %v614 = vadd.f32 %v397, %v613
          %v615 = vpop.f32.mrb[0].mxu0
          %v616 = vadd.f32 %v397, %v615
          %v617 = vpop.f32.mrb[0].mxu0
          %v618 = vadd.f32 %v402, %v617
          %v619 = vpop.f32.mrb[0].mxu0
          %v620 = vadd.f32 %v402, %v619
          %621 = vmatprep.mubr.bf16.mxu0 0
          %622 = vmatmul.mubr.bf16.gmra.mrb[0].mxu0 %v559
          %v623 = vpop.f32.mrb[0].mxu0
          %v624 = vadd.f32 %v407, %v623
          %v625 = vpop.f32.mrb[0].mxu0
          %v626 = vadd.f32 %v407, %v625
          %v627 = vpop.f32.mrb[0].mxu0
          %v628 = vadd.f32 %v412, %v627
          %v629 = vpop.f32.mrb[0].mxu0
          %v630 = vadd.f32 %v412, %v629
          %631 = vmatprep.mubr.bf16.mxu0 0
          %632 = vmatmul.mubr.bf16.gmra.mrb[0].mxu0 %v562
          %v633 = vpop.f32.mrb[0].mxu0
          %v634 = vadd.f32 %v417, %v633
          %v635 = vpop.f32.mrb[0].mxu0
          %v636 = vadd.f32 %v417, %v635
          %v637 = vpop.f32.mrb[0].mxu0
          %v638 = vadd.f32 %v422, %v637
          %v639 = vpop.f32.mrb[0].mxu0
          %v640 = vadd.f32 %v422, %v639
          %641 = vmatprep.mubr.bf16.mxu0 0
          %642 = vmatmul.mubr.bf16.gmra.mrb[0].mxu0 %v565
          %v643 = vpop.f32.mrb[0].mxu0
          %v644 = vadd.f32 %v427, %v643
          %v645 = vpop.f32.mrb[0].mxu0
          %v646 = vadd.f32 %v427, %v645
          %v647 = vpop.f32.mrb[0].mxu0
          %v648 = vadd.f32 %v432, %v647
          %v649 = vpop.f32.mrb[0].mxu0
          %v650 = vadd.f32 %v432, %v649
          %651 = vmatprep.mubr.bf16.mxu0 0
          %652 = vmatmul.mubr.bf16.gmra.mrb[0].mxu0 %v568
          %v653 = vpop.f32.mrb[0].mxu0
          %v654 = vadd.f32 %v437, %v653
          %v655 = vpop.f32.mrb[0].mxu0
          %v656 = vadd.f32 %v437, %v655
          %v657 = vpop.f32.mrb[0].mxu0
          %v658 = vadd.f32 %v442, %v657
          %v659 = vpop.f32.mrb[0].mxu0
          %v660 = vadd.f32 %v442, %v659
          %661 = vmatprep.mubr.bf16.mxu0 0
          %662 = vmatmul.mubr.bf16.gmra.mrb[0].mxu0 %v571
          %v663 = vpop.f32.mrb[0].mxu0
          %v664 = vadd.f32 %v447, %v663
          %v665 = vpop.f32.mrb[0].mxu0
          %v666 = vadd.f32 %v447, %v665
          %v667 = vpop.f32.mrb[0].mxu0
          %v668 = vadd.f32 %v452, %v667
          %v669 = vpop.f32.mrb[0].mxu0
          %v670 = vadd.f32 %v452, %v669
          %671 = vmatprep.mubr.bf16.mxu0 0
          %672 = vmatmul.mubr.bf16.gmra.mrb[0].mxu0 %v574
          %v673 = vpop.f32.mrb[0].mxu0
          %v674 = vadd.f32 %v457, %v673
          %v675 = vpop.f32.mrb[0].mxu0
          %v676 = vadd.f32 %v457, %v675
          %v677 = vpop.f32.mrb[0].mxu0
          %v678 = vadd.f32 %v462, %v677
          %v679 = vpop.f32.mrb[0].mxu0
          %v680 = vadd.f32 %v462, %v679
          %681 = vmatprep.mubr.bf16.mxu0 0
          %682 = vmatmul.mubr.bf16.gmra.mrb[0].mxu0 %v577
          %v683 = vpop.f32.mrb[0].mxu0
          %v684 = vadd.f32 %v467, %v683
          %v685 = vpop.f32.mrb[0].mxu0
          %v686 = vadd.f32 %v467, %v685
          %v687 = vpop.f32.mrb[0].mxu0
          %v688 = vadd.f32 %v472, %v687
          %v689 = vpop.f32.mrb[0].mxu0
          %v690 = vadd.f32 %v472, %v689
          %691 = vdwg.mxu0
          %692 = vmatprep.subr.bf16.mxu0 %v541
          %693 = vmatpush1.bf16.msra.mxu0 %v540
          %694 = vmatprep.subr.bf16.mxu0 %v545
          %695 = vmatpush1.bf16.msra.mxu0 %v544
          %696 = vmatprep.subr.bf16.mxu0 0
          %697 = vmatpush1.bf16.msra.mxu0 0
          %698 = vmatprep.subr.bf16.mxu0 0
          %699 = vmatpush1.bf16.msra.mxu0 0
          %700 = vmatprep.subr.bf16.mxu0 0
          %701 = vmatpush1.bf16.msra.mxu0 0
          %702 = vmatprep.subr.bf16.mxu0 0
          %703 = vmatpush1.bf16.msra.mxu0 0
          %704 = vmatprep.subr.bf16.mxu0 0
          %705 = vmatpush1.bf16.msra.mxu0 0
          %706 = vmatprep.subr.bf16.mxu0 0
          %707 = vmatpush1.bf16.msra.mxu0 0
          %708 = vmatprep.subr.bf16.mxu0 0
          %709 = vmatpush1.bf16.msra.mxu0 0
          %710 = vmatprep.subr.bf16.mxu0 0
          %711 = vmatpush1.bf16.msra.mxu0 0
          %712 = vmatprep.subr.bf16.mxu0 0
          %713 = vmatpush1.bf16.msra.mxu0 0
          %714 = vmatprep.subr.bf16.mxu0 0
          %715 = vmatpush1.bf16.msra.mxu0 0
          %716 = vmatprep.subr.bf16.mxu0 0
          %717 = vmatpush1.bf16.msra.mxu0 0
          %718 = vmatprep.subr.bf16.mxu0 0
          %719 = vmatpush1.bf16.msra.mxu0 0
          %720 = vmatprep.subr.bf16.mxu0 0
          %721 = vmatpush1.bf16.msra.mxu0 0
          %722 = vmatprep.subr.bf16.mxu0 0
          %723 = vmatpush1.bf16.msra.mxu0 0
          %724 = vmatprep.mubr.bf16.mxu0 0
          %725 = vmatmul.mubr.bf16.gmra.mrb[0].mxu0 %v556
          %v726 = vpop.f32.mrb[0].mxu0
          %v727 = vadd.f32 %v397, %v726
          %v728 = vpop.f32.mrb[0].mxu0
          %v729 = vadd.f32 %v397, %v728
          %v730 = vpop.f32.mrb[0].mxu0
          %v731 = vadd.f32 %v402, %v730
          %v732 = vpop.f32.mrb[0].mxu0
          %v733 = vadd.f32 %v402, %v732
          %734 = vmatprep.mubr.bf16.mxu0 0
          %735 = vmatmul.mubr.bf16.gmra.mrb[0].mxu0 %v559
          %v736 = vpop.f32.mrb[0].mxu0
          %v737 = vadd.f32 %v407, %v736
          %v738 = vpop.f32.mrb[0].mxu0
          %v739 = vadd.f32 %v407, %v738
          %v740 = vpop.f32.mrb[0].mxu0
          %v741 = vadd.f32 %v412, %v740
          %v742 = vpop.f32.mrb[0].mxu0
          %v743 = vadd.f32 %v412, %v742
          %744 = vmatprep.mubr.bf16.mxu0 0
          %745 = vmatmul.mubr.bf16.gmra.mrb[0].mxu0 %v562
          %v746 = vpop.f32.mrb[0].mxu0
          %v747 = vadd.f32 %v417, %v746
          %v748 = vpop.f32.mrb[0].mxu0
          %v749 = vadd.f32 %v417, %v748
          %v750 = vpop.f32.mrb[0].mxu0
          %v751 = vadd.f32 %v422, %v750
          %v752 = vpop.f32.mrb[0].mxu0
          %v753 = vadd.f32 %v422, %v752
          %754 = vmatprep.mubr.bf16.mxu0 0
          %755 = vmatmul.mubr.bf16.gmra.mrb[0].mxu0 %v565
          %v756 = vpop.f32.mrb[0].mxu0
          %v757 = vadd.f32 %v427, %v756
          %v758 = vpop.f32.mrb[0].mxu0
          %v759 = vadd.f32 %v427, %v758
          %v760 = vpop.f32.mrb[0].mxu0
          %v761 = vadd.f32 %v432, %v760
          %v762 = vpop.f32.mrb[0].mxu0
          %v763 = vadd.f32 %v432, %v762
          %764 = vmatprep.mubr.bf16.mxu0 0
          %765 = vmatmul.mubr.bf16.gmra.mrb[0].mxu0 %v568
          %v766 = vpop.f32.mrb[0].mxu0
          %v767 = vadd.f32 %v437, %v766
          %v768 = vpop.f32.mrb[0].mxu0
          %v769 = vadd.f32 %v437, %v768
          %v770 = vpop.f32.mrb[0].mxu0
          %v771 = vadd.f32 %v442, %v770
          %v772 = vpop.f32.mrb[0].mxu0
          %v773 = vadd.f32 %v442, %v772
          %774 = vmatprep.mubr.bf16.mxu0 0
          %775 = vmatmul.mubr.bf16.gmra.mrb[0].mxu0 %v571
          %v776 = vpop.f32.mrb[0].mxu0
          %v777 = vadd.f32 %v447, %v776
          %v778 = vpop.f32.mrb[0].mxu0
          %v779 = vadd.f32 %v447, %v778
          %v780 = vpop.f32.mrb[0].mxu0
          %v781 = vadd.f32 %v452, %v780
          %v782 = vpop.f32.mrb[0].mxu0
          %v783 = vadd.f32 %v452, %v782
          %784 = vmatprep.mubr.bf16.mxu0 0
          %785 = vmatmul.mubr.bf16.gmra.mrb[0].mxu0 %v574
          %v786 = vpop.f32.mrb[0].mxu0
          %v787 = vadd.f32 %v457, %v786
          %v788 = vpop.f32.mrb[0].mxu0
          %v789 = vadd.f32 %v457, %v788
          %v790 = vpop.f32.mrb[0].mxu0
          %v791 = vadd.f32 %v462, %v790
          %v792 = vpop.f32.mrb[0].mxu0
          %v793 = vadd.f32 %v462, %v792
          %794 = vmatprep.mubr.bf16.mxu0 0
          %795 = vmatmul.mubr.bf16.gmra.mrb[0].mxu0 %v577
          %v796 = vpop.f32.mrb[0].mxu0
          %v797 = vadd.f32 %v467, %v796
          %v798 = vpop.f32.mrb[0].mxu0
          %v799 = vadd.f32 %v467, %v798
          %v800 = vpop.f32.mrb[0].mxu0
          %v801 = vadd.f32 %v472, %v800
          %v802 = vpop.f32.mrb[0].mxu0
          %v803 = vadd.f32 %v472, %v802
          %804 = vdwg.mxu0
          %v805 = vpack.c.bf16 %v618, %v614
          %v806 = vpack.c.bf16 %v620, %v616
          %v807 = vpack.c.bf16 %v731, %v727
          %v808 = vpack.c.bf16 %v733, %v729
          %v809 = vpack.c.bf16 %v628, %v624
          %v810 = vpack.c.bf16 %v630, %v626
          %v811 = vpack.c.bf16 %v741, %v737
          %v812 = vpack.c.bf16 %v743, %v739
          %v813 = vpack.c.bf16 %v638, %v634
          %v814 = vpack.c.bf16 %v640, %v636
          %v815 = vpack.c.bf16 %v751, %v747
          %v816 = vpack.c.bf16 %v753, %v749
          %v817 = vpack.c.bf16 %v648, %v644
          %v818 = vpack.c.bf16 %v650, %v646
          %v819 = vpack.c.bf16 %v761, %v757
          %v820 = vpack.c.bf16 %v763, %v759
          %v821 = vpack.c.bf16 %v658, %v654
          %v822 = vpack.c.bf16 %v660, %v656
          %v823 = vpack.c.bf16 %v771, %v767
          %v824 = vpack.c.bf16 %v773, %v769
          %v825 = vpack.c.bf16 %v668, %v664
          %v826 = vpack.c.bf16 %v670, %v666
          %v827 = vpack.c.bf16 %v781, %v777
          %v828 = vpack.c.bf16 %v783, %v779
          %v829 = vpack.c.bf16 %v678, %v674
          %v830 = vpack.c.bf16 %v680, %v676
          %v831 = vpack.c.bf16 %v791, %v787
          %v832 = vpack.c.bf16 %v793, %v789
          %v833 = vpack.c.bf16 %v688, %v684
          %v834 = vpack.c.bf16 %v690, %v686
          %v835 = vpack.c.bf16 %v801, %v797
          %v836 = vpack.c.bf16 %v803, %v799
          %837 = vst [vmem:[#allocation2] sm:$0xff] %v805
          %838 = vst [vmem:[#allocation2 + $0x8] sm:$0xff] %v806
          %839 = vst [vmem:[#allocation2 + $0x10] sm:$0xff] %v807
          %840 = vst [vmem:[#allocation2 + $0x18] sm:$0xff] %v808
          %841 = vst [vmem:[#allocation2 + $0x20] sm:$0xff] %v809
          %842 = vst [vmem:[#allocation2 + $0x28] sm:$0xff] %v810
          %843 = vst [vmem:[#allocation2 + $0x30] sm:$0xff] %v811
          %844 = vst [vmem:[#allocation2 + $0x38] sm:$0xff] %v812
          %845 = vst [vmem:[#allocation2 + $0x40] sm:$0xff] %v813
          %846 = vst [vmem:[#allocation2 + $0x48] sm:$0xff] %v814
          %847 = vst [vmem:[#allocation2 + $0x50] sm:$0xff] %v815
          %848 = vst [vmem:[#allocation2 + $0x58] sm:$0xff] %v816
          %849 = vst [vmem:[#allocation2 + $0x60] sm:$0xff] %v817
          %850 = vst [vmem:[#allocation2 + $0x68] sm:$0xff] %v818
          %851 = vst [vmem:[#allocation2 + $0x70] sm:$0xff] %v819
          %852 = vst [vmem:[#allocation2 + $0x78] sm:$0xff] %v820
          %853 = vst [vmem:[#allocation2 + $0x80] sm:$0xff] %v821
          %854 = vst [vmem:[#allocation2 + $0x88] sm:$0xff] %v822
          %855 = vst [vmem:[#allocation2 + $0x90] sm:$0xff] %v823
          %856 = vst [vmem:[#allocation2 + $0x98] sm:$0xff] %v824
          %857 = vst [vmem:[#allocation2 + $0xa0] sm:$0xff] %v825
          %858 = vst [vmem:[#allocation2 + $0xa8] sm:$0xff] %v826
          %859 = vst [vmem:[#allocation2 + $0xb0] sm:$0xff] %v827
          %860 = vst [vmem:[#allocation2 + $0xb8] sm:$0xff] %v828
          %861 = vst [vmem:[#allocation2 + $0xc0] sm:$0xff] %v829
          %862 = vst [vmem:[#allocation2 + $0xc8] sm:$0xff] %v830
          %863 = vst [vmem:[#allocation2 + $0xd0] sm:$0xff] %v831
          %864 = vst [vmem:[#allocation2 + $0xd8] sm:$0xff] %v832
          %865 = vst [vmem:[#allocation2 + $0xe0] sm:$0xff] %v833
          %866 = vst [vmem:[#allocation2 + $0xe8] sm:$0xff] %v834
          %867 = vst [vmem:[#allocation2 + $0xf0] sm:$0xff] %v835
          %868 = vst [vmem:[#allocation2 + $0xf8] sm:$0xff] %v836
          %v869 = vld [vmem:[#allocation3] sm:$0x1]
          %871 = vset.pattern.permute.xlu0 0
          %872 = vperm.xlu0 %871, %v869
          %v873 = vpop.permute.xlu0 %872
          %v875 = vlaneseq
          %v876 = vshrl.u32 %v875, 7
          %v877 = vsub.s32 0, %v876
          %v878 = vrot.slane %v873, %v877
          %v879 = vadd.f32 %v878, 0.0
          %v880 = vlaneseq
          %vm881 = vcmp.ge.s32.totalorder %v880, 0
          %vm882 = vcmp.lt.s32.totalorder %v880, 512
          %vm883 = vmand %vm881, %vm882
          %884 = vst.msk [vmem:[%s340] sm:$0xf] %vm883, %v879
        $region75: #{tpu_custom_call.1} parent=66 // pred_fallthru
          _
        %v885 = vld [vmem:[%s346] sm:$0xf]
        %v886 = vld [vmem:[%s346 + $0x4] sm:$0xf]
        %v887 = vld [vmem:[%s346 + $0x8] sm:$0xf]
        %v888 = vld [vmem:[%s346 + $0xc] sm:$0xf]
        %v889 = vld [vmem:[%s346 + $0x10] sm:$0xf]
        %v890 = vld [vmem:[%s346 + $0x14] sm:$0xf]
        %v891 = vld [vmem:[%s346 + $0x18] sm:$0xf]
        %v892 = vld [vmem:[%s346 + $0x1c] sm:$0xf]
        %v893 = vld [vmem:[%s346 + $0x20] sm:$0xf]
        %v894 = vld [vmem:[%s346 + $0x24] sm:$0xf]
        %v895 = vld [vmem:[%s346 + $0x28] sm:$0xf]
        %v896 = vld [vmem:[%s346 + $0x2c] sm:$0xf]
        %v897 = vld [vmem:[%s346 + $0x30] sm:$0xf]
        %v898 = vld [vmem:[%s346 + $0x34] sm:$0xf]
        %v899 = vld [vmem:[%s346 + $0x38] sm:$0xf]
        %v900 = vld [vmem:[%s346 + $0x3c] sm:$0xf]
        %v901 = vld [vmem:[%s346 + $0x40] sm:$0xf]
        %v902 = vld [vmem:[%s346 + $0x44] sm:$0xf]
        %v903 = vld [vmem:[%s346 + $0x48] sm:$0xf]
        %v904 = vld [vmem:[%s346 + $0x4c] sm:$0xf]
        %v905 = vld [vmem:[%s346 + $0x50] sm:$0xf]
        %v906 = vld [vmem:[%s346 + $0x54] sm:$0xf]
        %v907 = vld [vmem:[%s346 + $0x58] sm:$0xf]
        %v908 = vld [vmem:[%s346 + $0x5c] sm:$0xf]
        %v909 = vld [vmem:[%s346 + $0x60] sm:$0xf]
        %v910 = vld [vmem:[%s346 + $0x64] sm:$0xf]
        %v911 = vld [vmem:[%s346 + $0x68] sm:$0xf]
        %v912 = vld [vmem:[%s346 + $0x6c] sm:$0xf]
        %v913 = vld [vmem:[%s346 + $0x70] sm:$0xf]
        %v914 = vld [vmem:[%s346 + $0x74] sm:$0xf]
        %v915 = vld [vmem:[%s346 + $0x78] sm:$0xf]
        %v916 = vld [vmem:[%s346 + $0x7c] sm:$0xf]
        %v917 = vld [vmem:[%s346 + $0x80] sm:$0xf]
        %v918 = vld [vmem:[%s346 + $0x84] sm:$0xf]
        %v919 = vld [vmem:[%s346 + $0x88] sm:$0xf]
        %v920 = vld [vmem:[%s346 + $0x8c] sm:$0xf]
        %v921 = vld [vmem:[%s346 + $0x90] sm:$0xf]
        %v922 = vld [vmem:[%s346 + $0x94] sm:$0xf]
        %v923 = vld [vmem:[%s346 + $0x98] sm:$0xf]
        %v924 = vld [vmem:[%s346 + $0x9c] sm:$0xf]
        %v925 = vld [vmem:[%s346 + $0xa0] sm:$0xf]
        %v926 = vld [vmem:[%s346 + $0xa4] sm:$0xf]
        %v927 = vld [vmem:[%s346 + $0xa8] sm:$0xf]
        %v928 = vld [vmem:[%s346 + $0xac] sm:$0xf]
        %v929 = vld [vmem:[%s346 + $0xb0] sm:$0xf]
        %v930 = vld [vmem:[%s346 + $0xb4] sm:$0xf]
        %v931 = vld [vmem:[%s346 + $0xb8] sm:$0xf]
        %v932 = vld [vmem:[%s346 + $0xbc] sm:$0xf]
        %v933 = vld [vmem:[%s346 + $0xc0] sm:$0xf]
        %v934 = vld [vmem:[%s346 + $0xc4] sm:$0xf]
        %v935 = vld [vmem:[%s346 + $0xc8] sm:$0xf]
        %v936 = vld [vmem:[%s346 + $0xcc] sm:$0xf]
        %v937 = vld [vmem:[%s346 + $0xd0] sm:$0xf]
        %v938 = vld [vmem:[%s346 + $0xd4] sm:$0xf]
        %v939 = vld [vmem:[%s346 + $0xd8] sm:$0xf]
        %v940 = vld [vmem:[%s346 + $0xdc] sm:$0xf]
        %v941 = vld [vmem:[%s346 + $0xe0] sm:$0xf]
        %v942 = vld [vmem:[%s346 + $0xe4] sm:$0xf]
        %v943 = vld [vmem:[%s346 + $0xe8] sm:$0xf]
        %v944 = vld [vmem:[%s346 + $0xec] sm:$0xf]
        %v945 = vld [vmem:[%s346 + $0xf0] sm:$0xf]
        %v946 = vld [vmem:[%s346 + $0xf4] sm:$0xf]
        %v947 = vld [vmem:[%s346 + $0xf8] sm:$0xf]
        %v948 = vld [vmem:[%s346 + $0xfc] sm:$0xf]
        %v949 = vld [vmem:[%s4] sm:$0xff]
        %v950 = vld [vmem:[%s4 + $0x8] sm:$0xff]
        %v951 = vld [vmem:[%s4 + $0x10] sm:$0xff]
        %v952 = vld [vmem:[%s4 + $0x18] sm:$0xff]
        %v953 = vld [vmem:[%s5] sm:$0x3]
        %v955 = vlaneseq
        %v956 = vshrl.u32 %v955, 7
        %v957 = vsub.s32 0, %v956
        %v958 = vrot.slane %v953, %v957
        %v959 = vlaneseq
        %v960 = vshrl.u32 %v959, 7
        %v961 = vsub.s32 1, %v960
        %v962 = vrot.slane %v953, %v961
        %v1029 = vunpack.c.l.b16 %v885
        %v1030 = vunpack.c.l.b16 %v886
        %v1031 = vunpack.c.l.b16 %v887
        %v1032 = vunpack.c.l.b16 %v888
        %v1033 = vunpack.c.l.b16 %v889
        %v1034 = vunpack.c.l.b16 %v890
        %v1035 = vunpack.c.l.b16 %v891
        %v1036 = vunpack.c.l.b16 %v892
        %v1037 = vunpack.c.l.b16 %v893
        %v1038 = vunpack.c.l.b16 %v894
        %v1039 = vunpack.c.l.b16 %v895
        %v1040 = vunpack.c.l.b16 %v896
        %v1041 = vunpack.c.l.b16 %v897
        %v1042 = vunpack.c.l.b16 %v898
        %v1043 = vunpack.c.l.b16 %v899
        %v1044 = vunpack.c.l.b16 %v900
        %v1045 = vunpack.c.l.b16 %v901
        %v1046 = vunpack.c.l.b16 %v902
        %v1047 = vunpack.c.l.b16 %v903
        %v1048 = vunpack.c.l.b16 %v904
        %v1049 = vunpack.c.l.b16 %v905
        %v1050 = vunpack.c.l.b16 %v906
        %v1051 = vunpack.c.l.b16 %v907
        %v1052 = vunpack.c.l.b16 %v908
        %v1053 = vunpack.c.l.b16 %v909
        %v1054 = vunpack.c.l.b16 %v910
        %v1055 = vunpack.c.l.b16 %v911
        %v1056 = vunpack.c.l.b16 %v912
        %v1057 = vunpack.c.l.b16 %v913
        %v1058 = vunpack.c.l.b16 %v914
        %v1059 = vunpack.c.l.b16 %v915
        %v1060 = vunpack.c.l.b16 %v916
        %v1061 = vunpack.c.l.b16 %v917
        %v1062 = vunpack.c.l.b16 %v918
        %v1063 = vunpack.c.l.b16 %v919
        %v1064 = vunpack.c.l.b16 %v920
        %v1065 = vunpack.c.l.b16 %v921
        %v1066 = vunpack.c.l.b16 %v922
        %v1067 = vunpack.c.l.b16 %v923
        %v1068 = vunpack.c.l.b16 %v924
        %v1069 = vunpack.c.l.b16 %v925
        %v1070 = vunpack.c.l.b16 %v926
        %v1071 = vunpack.c.l.b16 %v927
        %v1072 = vunpack.c.l.b16 %v928
        %v1073 = vunpack.c.l.b16 %v929
        %v1074 = vunpack.c.l.b16 %v930
        %v1075 = vunpack.c.l.b16 %v931
        %v1076 = vunpack.c.l.b16 %v932
        %v1077 = vunpack.c.l.b16 %v933
        %v1078 = vunpack.c.l.b16 %v934
        %v1079 = vunpack.c.l.b16 %v935
        %v1080 = vunpack.c.l.b16 %v936
        %v1081 = vunpack.c.l.b16 %v937
        %v1082 = vunpack.c.l.b16 %v938
        %v1083 = vunpack.c.l.b16 %v939
        %v1084 = vunpack.c.l.b16 %v940
        %v1085 = vunpack.c.l.b16 %v941
        %v1086 = vunpack.c.l.b16 %v942
        %v1087 = vunpack.c.l.b16 %v943
        %v1088 = vunpack.c.l.b16 %v944
        %v1089 = vunpack.c.l.b16 %v945
        %v1090 = vunpack.c.l.b16 %v946
        %v1091 = vunpack.c.l.b16 %v947
        %v1092 = vunpack.c.l.b16 %v948
        %v1093 = vpack.c.b16 %v1030, %v1029
        %v1094 = vpack.c.b16 %v1032, %v1031
        %v1095 = vpack.c.b16 %v1034, %v1033
        %v1096 = vpack.c.b16 %v1036, %v1035
        %v1097 = vpack.c.b16 %v1038, %v1037
        %v1098 = vpack.c.b16 %v1040, %v1039
        %v1099 = vpack.c.b16 %v1042, %v1041
        %v1100 = vpack.c.b16 %v1044, %v1043
        %v1101 = vpack.c.b16 %v1046, %v1045
        %v1102 = vpack.c.b16 %v1048, %v1047
        %v1103 = vpack.c.b16 %v1050, %v1049
        %v1104 = vpack.c.b16 %v1052, %v1051
        %v1105 = vpack.c.b16 %v1054, %v1053
        %v1106 = vpack.c.b16 %v1056, %v1055
        %v1107 = vpack.c.b16 %v1058, %v1057
        %v1108 = vpack.c.b16 %v1060, %v1059
        %v1109 = vpack.c.b16 %v1062, %v1061
        %v1110 = vpack.c.b16 %v1064, %v1063
        %v1111 = vpack.c.b16 %v1066, %v1065
        %v1112 = vpack.c.b16 %v1068, %v1067
        %v1113 = vpack.c.b16 %v1070, %v1069
        %v1114 = vpack.c.b16 %v1072, %v1071
        %v1115 = vpack.c.b16 %v1074, %v1073
        %v1116 = vpack.c.b16 %v1076, %v1075
        %v1117 = vpack.c.b16 %v1078, %v1077
        %v1118 = vpack.c.b16 %v1080, %v1079
        %v1119 = vpack.c.b16 %v1082, %v1081
        %v1120 = vpack.c.b16 %v1084, %v1083
        %v1121 = vpack.c.b16 %v1086, %v1085
        %v1122 = vpack.c.b16 %v1088, %v1087
        %v1123 = vpack.c.b16 %v1090, %v1089
        %v1124 = vpack.c.b16 %v1092, %v1091
        %v1129 = vunpack.c.l.b16 %v949
        %v1130 = vunpack.c.h.b16 %v949
        %v1131 = vunpack.c.l.b16 %v950
        %v1132 = vunpack.c.h.b16 %v950
        %v1133 = vunpack.c.l.b16 %v951
        %v1134 = vunpack.c.h.b16 %v951
        %v1135 = vunpack.c.l.b16 %v952
        %v1136 = vunpack.c.h.b16 %v952
        %v1137 = vpack.c.b16 %v1131, %v1129
        %v1138 = vpack.c.b16 %v1132, %v1130
        %v1139 = vpack.c.b16 %v1135, %v1133
        %v1140 = vpack.c.b16 %v1136, %v1134
        %vm1145 = vcmask 261120
        %v1147 = vsel %vm1145, %v1093, 0
        %v1150 = vsel %vm1145, %v1094, 0
        %v1153 = vsel %vm1145, %v1095, 0
        %v1156 = vsel %vm1145, %v1096, 0
        %v1159 = vsel %vm1145, %v1097, 0
        %v1162 = vsel %vm1145, %v1098, 0
        %v1165 = vsel %vm1145, %v1099, 0
        %v1168 = vsel %vm1145, %v1100, 0
        %v1171 = vsel %vm1145, %v1101, 0
        %v1174 = vsel %vm1145, %v1102, 0
        %v1177 = vsel %vm1145, %v1103, 0
        %v1180 = vsel %vm1145, %v1104, 0
        %v1183 = vsel %vm1145, %v1105, 0
        %v1186 = vsel %vm1145, %v1106, 0
        %v1189 = vsel %vm1145, %v1107, 0
        %v1192 = vsel %vm1145, %v1108, 0
        %v1195 = vsel %vm1145, %v1109, 0
        %v1198 = vsel %vm1145, %v1110, 0
        %v1201 = vsel %vm1145, %v1111, 0
        %v1204 = vsel %vm1145, %v1112, 0
        %v1207 = vsel %vm1145, %v1113, 0
        %v1210 = vsel %vm1145, %v1114, 0
        %v1213 = vsel %vm1145, %v1115, 0
        %v1216 = vsel %vm1145, %v1116, 0
        %v1219 = vsel %vm1145, %v1117, 0
        %v1222 = vsel %vm1145, %v1118, 0
        %v1225 = vsel %vm1145, %v1119, 0
        %v1228 = vsel %vm1145, %v1120, 0
        %v1231 = vsel %vm1145, %v1121, 0
        %v1234 = vsel %vm1145, %v1122, 0
        %v1237 = vsel %vm1145, %v1123, 0
        %v1240 = vsel %vm1145, %v1124, 0
        %1242 = vmatprep.subr.bf16.mxu0 %v1138
        %1243 = vmatpush1.bf16.msra.mxu0 %v1137
        %1244 = vmatprep.subr.bf16.mxu0 %v1140
        %1245 = vmatpush1.bf16.msra.mxu0 %v1139
        %1246 = vmatprep.subr.bf16.mxu0 0
        %1247 = vmatpush1.bf16.msra.mxu0 0
        %1248 = vmatprep.subr.bf16.mxu0 0
        %1249 = vmatpush1.bf16.msra.mxu0 0
        %1250 = vmatprep.subr.bf16.mxu0 0
        %1251 = vmatpush1.bf16.msra.mxu0 0
        %1252 = vmatprep.subr.bf16.mxu0 0
        %1253 = vmatpush1.bf16.msra.mxu0 0
        %1254 = vmatprep.subr.bf16.mxu0 0
        %1255 = vmatpush1.bf16.msra.mxu0 0
        %1256 = vmatprep.subr.bf16.mxu0 0
        %1257 = vmatpush1.bf16.msra.mxu0 0
        %1258 = vmatprep.subr.bf16.mxu0 0
        %1259 = vmatpush1.bf16.msra.mxu0 0
        %1260 = vmatprep.subr.bf16.mxu0 0
        %1261 = vmatpush1.bf16.msra.mxu0 0
        %1262 = vmatprep.subr.bf16.mxu0 0
        %1263 = vmatpush1.bf16.msra.mxu0 0
        %1264 = vmatprep.subr.bf16.mxu0 0
        %1265 = vmatpush1.bf16.msra.mxu0 0
        %1266 = vmatprep.subr.bf16.mxu0 0
        %1267 = vmatpush1.bf16.msra.mxu0 0
        %1268 = vmatprep.subr.bf16.mxu0 0
        %1269 = vmatpush1.bf16.msra.mxu0 0
        %1270 = vmatprep.subr.bf16.mxu0 0
        %1271 = vmatpush1.bf16.msra.mxu0 0
        %1272 = vmatprep.subr.bf16.mxu0 0
        %1273 = vmatpush1.bf16.msra.mxu0 0
        %1274 = vmatprep.mubr.bf16.mxu0 0
        %1275 = vmatmul.mubr.bf16.gmra.mrb[0].mxu0 %v1147
        %v1276 = vpop.f32.mrb[0].mxu0
        %v1277 = vadd.f32 %v958, %v1276
        %v1278 = vpop.f32.mrb[0].mxu0
        %v1279 = vadd.f32 %v962, %v1278
        %v1280 = vpop.f32.mrb[0].mxu0
        %v1281 = vadd.f32 %v958, %v1280
        %v1282 = vpop.f32.mrb[0].mxu0
        %v1283 = vadd.f32 %v962, %v1282
        %1284 = vmatprep.mubr.bf16.mxu0 0
        %1285 = vmatmul.mubr.bf16.gmra.mrb[0].mxu0 %v1150
        %v1286 = vpop.f32.mrb[0].mxu0
        %v1287 = vadd.f32 %v958, %v1286
        %v1288 = vpop.f32.mrb[0].mxu0
        %v1289 = vadd.f32 %v962, %v1288
        %v1290 = vpop.f32.mrb[0].mxu0
        %v1291 = vadd.f32 %v958, %v1290
        %v1292 = vpop.f32.mrb[0].mxu0
        %v1293 = vadd.f32 %v962, %v1292
        %1294 = vmatprep.mubr.bf16.mxu0 0
        %1295 = vmatmul.mubr.bf16.gmra.mrb[0].mxu0 %v1153
        %v1296 = vpop.f32.mrb[0].mxu0
        %v1297 = vadd.f32 %v958, %v1296
        %v1298 = vpop.f32.mrb[0].mxu0
        %v1299 = vadd.f32 %v962, %v1298
        %v1300 = vpop.f32.mrb[0].mxu0
        %v1301 = vadd.f32 %v958, %v1300
        %v1302 = vpop.f32.mrb[0].mxu0
        %v1303 = vadd.f32 %v962, %v1302
        %1304 = vmatprep.mubr.bf16.mxu0 0
        %1305 = vmatmul.mubr.bf16.gmra.mrb[0].mxu0 %v1156
        %v1306 = vpop.f32.mrb[0].mxu0
        %v1307 = vadd.f32 %v958, %v1306
        %v1308 = vpop.f32.mrb[0].mxu0
        %v1309 = vadd.f32 %v962, %v1308
        %v1310 = vpop.f32.mrb[0].mxu0
        %v1311 = vadd.f32 %v958, %v1310
        %v1312 = vpop.f32.mrb[0].mxu0
        %v1313 = vadd.f32 %v962, %v1312
        %1314 = vmatprep.mubr.bf16.mxu0 0
        %1315 = vmatmul.mubr.bf16.gmra.mrb[0].mxu0 %v1159
        %v1316 = vpop.f32.mrb[0].mxu0
        %v1317 = vadd.f32 %v958, %v1316
        %v1318 = vpop.f32.mrb[0].mxu0
        %v1319 = vadd.f32 %v962, %v1318
        %v1320 = vpop.f32.mrb[0].mxu0
        %v1321 = vadd.f32 %v958, %v1320
        %v1322 = vpop.f32.mrb[0].mxu0
        %v1323 = vadd.f32 %v962, %v1322
        %1324 = vmatprep.mubr.bf16.mxu0 0
        %1325 = vmatmul.mubr.bf16.gmra.mrb[0].mxu0 %v1162
        %v1326 = vpop.f32.mrb[0].mxu0
        %v1327 = vadd.f32 %v958, %v1326
        %v1328 = vpop.f32.mrb[0].mxu0
        %v1329 = vadd.f32 %v962, %v1328
        %v1330 = vpop.f32.mrb[0].mxu0
        %v1331 = vadd.f32 %v958, %v1330
        %v1332 = vpop.f32.mrb[0].mxu0
        %v1333 = vadd.f32 %v962, %v1332
        %1334 = vmatprep.mubr.bf16.mxu0 0
        %1335 = vmatmul.mubr.bf16.gmra.mrb[0].mxu0 %v1165
        %v1336 = vpop.f32.mrb[0].mxu0
        %v1337 = vadd.f32 %v958, %v1336
        %v1338 = vpop.f32.mrb[0].mxu0
        %v1339 = vadd.f32 %v962, %v1338
        %v1340 = vpop.f32.mrb[0].mxu0
        %v1341 = vadd.f32 %v958, %v1340
        %v1342 = vpop.f32.mrb[0].mxu0
        %v1343 = vadd.f32 %v962, %v1342
        %1344 = vmatprep.mubr.bf16.mxu0 0
        %1345 = vmatmul.mubr.bf16.gmra.mrb[0].mxu0 %v1168
        %v1346 = vpop.f32.mrb[0].mxu0
        %v1347 = vadd.f32 %v958, %v1346
        %v1348 = vpop.f32.mrb[0].mxu0
        %v1349 = vadd.f32 %v962, %v1348
        %v1350 = vpop.f32.mrb[0].mxu0
        %v1351 = vadd.f32 %v958, %v1350
        %v1352 = vpop.f32.mrb[0].mxu0
        %v1353 = vadd.f32 %v962, %v1352
        %1354 = vmatprep.mubr.bf16.mxu0 0
        %1355 = vmatmul.mubr.bf16.gmra.mrb[0].mxu0 %v1171
        %v1356 = vpop.f32.mrb[0].mxu0
        %v1357 = vadd.f32 %v958, %v1356
        %v1358 = vpop.f32.mrb[0].mxu0
        %v1359 = vadd.f32 %v962, %v1358
        %v1360 = vpop.f32.mrb[0].mxu0
        %v1361 = vadd.f32 %v958, %v1360
        %v1362 = vpop.f32.mrb[0].mxu0
        %v1363 = vadd.f32 %v962, %v1362
        %1364 = vmatprep.mubr.bf16.mxu0 0
        %1365 = vmatmul.mubr.bf16.gmra.mrb[0].mxu0 %v1174
        %v1366 = vpop.f32.mrb[0].mxu0
        %v1367 = vadd.f32 %v958, %v1366
        %v1368 = vpop.f32.mrb[0].mxu0
        %v1369 = vadd.f32 %v962, %v1368
        %v1370 = vpop.f32.mrb[0].mxu0
        %v1371 = vadd.f32 %v958, %v1370
        %v1372 = vpop.f32.mrb[0].mxu0
        %v1373 = vadd.f32 %v962, %v1372
        %1374 = vmatprep.mubr.bf16.mxu0 0
        %1375 = vmatmul.mubr.bf16.gmra.mrb[0].mxu0 %v1177
        %v1376 = vpop.f32.mrb[0].mxu0
        %v1377 = vadd.f32 %v958, %v1376
        %v1378 = vpop.f32.mrb[0].mxu0
        %v1379 = vadd.f32 %v962, %v1378
        %v1380 = vpop.f32.mrb[0].mxu0
        %v1381 = vadd.f32 %v958, %v1380
        %v1382 = vpop.f32.mrb[0].mxu0
        %v1383 = vadd.f32 %v962, %v1382
        %1384 = vmatprep.mubr.bf16.mxu0 0
        %1385 = vmatmul.mubr.bf16.gmra.mrb[0].mxu0 %v1180
        %v1386 = vpop.f32.mrb[0].mxu0
        %v1387 = vadd.f32 %v958, %v1386
        %v1388 = vpop.f32.mrb[0].mxu0
        %v1389 = vadd.f32 %v962, %v1388
        %v1390 = vpop.f32.mrb[0].mxu0
        %v1391 = vadd.f32 %v958, %v1390
        %v1392 = vpop.f32.mrb[0].mxu0
        %v1393 = vadd.f32 %v962, %v1392
        %1394 = vmatprep.mubr.bf16.mxu0 0
        %1395 = vmatmul.mubr.bf16.gmra.mrb[0].mxu0 %v1183
        %v1396 = vpop.f32.mrb[0].mxu0
        %v1397 = vadd.f32 %v958, %v1396
        %v1398 = vpop.f32.mrb[0].mxu0
        %v1399 = vadd.f32 %v962, %v1398
        %v1400 = vpop.f32.mrb[0].mxu0
        %v1401 = vadd.f32 %v958, %v1400
        %v1402 = vpop.f32.mrb[0].mxu0
        %v1403 = vadd.f32 %v962, %v1402
        %1404 = vmatprep.mubr.bf16.mxu0 0
        %1405 = vmatmul.mubr.bf16.gmra.mrb[0].mxu0 %v1186
        %v1406 = vpop.f32.mrb[0].mxu0
        %v1407 = vadd.f32 %v958, %v1406
        %v1408 = vpop.f32.mrb[0].mxu0
        %v1409 = vadd.f32 %v962, %v1408
        %v1410 = vpop.f32.mrb[0].mxu0
        %v1411 = vadd.f32 %v958, %v1410
        %v1412 = vpop.f32.mrb[0].mxu0
        %v1413 = vadd.f32 %v962, %v1412
        %1414 = vmatprep.mubr.bf16.mxu0 0
        %1415 = vmatmul.mubr.bf16.gmra.mrb[0].mxu0 %v1189
        %v1416 = vpop.f32.mrb[0].mxu0
        %v1417 = vadd.f32 %v958, %v1416
        %v1418 = vpop.f32.mrb[0].mxu0
        %v1419 = vadd.f32 %v962, %v1418
        %v1420 = vpop.f32.mrb[0].mxu0
        %v1421 = vadd.f32 %v958, %v1420
        %v1422 = vpop.f32.mrb[0].mxu0
        %v1423 = vadd.f32 %v962, %v1422
        %1424 = vmatprep.mubr.bf16.mxu0 0
        %1425 = vmatmul.mubr.bf16.gmra.mrb[0].mxu0 %v1192
        %v1426 = vpop.f32.mrb[0].mxu0
        %v1427 = vadd.f32 %v958, %v1426
        %v1428 = vpop.f32.mrb[0].mxu0
        %v1429 = vadd.f32 %v962, %v1428
        %v1430 = vpop.f32.mrb[0].mxu0
        %v1431 = vadd.f32 %v958, %v1430
        %v1432 = vpop.f32.mrb[0].mxu0
        %v1433 = vadd.f32 %v962, %v1432
        %1434 = vmatprep.mubr.bf16.mxu0 0
        %1435 = vmatmul.mubr.bf16.gmra.mrb[0].mxu0 %v1195
        %v1436 = vpop.f32.mrb[0].mxu0
        %v1437 = vadd.f32 %v958, %v1436
        %v1438 = vpop.f32.mrb[0].mxu0
        %v1439 = vadd.f32 %v962, %v1438
        %v1440 = vpop.f32.mrb[0].mxu0
        %v1441 = vadd.f32 %v958, %v1440
        %v1442 = vpop.f32.mrb[0].mxu0
        %v1443 = vadd.f32 %v962, %v1442
        %1444 = vmatprep.mubr.bf16.mxu0 0
        %1445 = vmatmul.mubr.bf16.gmra.mrb[0].mxu0 %v1198
        %v1446 = vpop.f32.mrb[0].mxu0
        %v1447 = vadd.f32 %v958, %v1446
        %v1448 = vpop.f32.mrb[0].mxu0
        %v1449 = vadd.f32 %v962, %v1448
        %v1450 = vpop.f32.mrb[0].mxu0
        %v1451 = vadd.f32 %v958, %v1450
        %v1452 = vpop.f32.mrb[0].mxu0
        %v1453 = vadd.f32 %v962, %v1452
        %1454 = vmatprep.mubr.bf16.mxu0 0
        %1455 = vmatmul.mubr.bf16.gmra.mrb[0].mxu0 %v1201
        %v1456 = vpop.f32.mrb[0].mxu0
        %v1457 = vadd.f32 %v958, %v1456
        %v1458 = vpop.f32.mrb[0].mxu0
        %v1459 = vadd.f32 %v962, %v1458
        %v1460 = vpop.f32.mrb[0].mxu0
        %v1461 = vadd.f32 %v958, %v1460
        %v1462 = vpop.f32.mrb[0].mxu0
        %v1463 = vadd.f32 %v962, %v1462
        %1464 = vmatprep.mubr.bf16.mxu0 0
        %1465 = vmatmul.mubr.bf16.gmra.mrb[0].mxu0 %v1204
        %v1466 = vpop.f32.mrb[0].mxu0
        %v1467 = vadd.f32 %v958, %v1466
        %v1468 = vpop.f32.mrb[0].mxu0
        %v1469 = vadd.f32 %v962, %v1468
        %v1470 = vpop.f32.mrb[0].mxu0
        %v1471 = vadd.f32 %v958, %v1470
        %v1472 = vpop.f32.mrb[0].mxu0
        %v1473 = vadd.f32 %v962, %v1472
        %1474 = vmatprep.mubr.bf16.mxu0 0
        %1475 = vmatmul.mubr.bf16.gmra.mrb[0].mxu0 %v1207
        %v1476 = vpop.f32.mrb[0].mxu0
        %v1477 = vadd.f32 %v958, %v1476
        %v1478 = vpop.f32.mrb[0].mxu0
        %v1479 = vadd.f32 %v962, %v1478
        %v1480 = vpop.f32.mrb[0].mxu0
        %v1481 = vadd.f32 %v958, %v1480
        %v1482 = vpop.f32.mrb[0].mxu0
        %v1483 = vadd.f32 %v962, %v1482
        %1484 = vmatprep.mubr.bf16.mxu0 0
        %1485 = vmatmul.mubr.bf16.gmra.mrb[0].mxu0 %v1210
        %v1486 = vpop.f32.mrb[0].mxu0
        %v1487 = vadd.f32 %v958, %v1486
        %v1488 = vpop.f32.mrb[0].mxu0
        %v1489 = vadd.f32 %v962, %v1488
        %v1490 = vpop.f32.mrb[0].mxu0
        %v1491 = vadd.f32 %v958, %v1490
        %v1492 = vpop.f32.mrb[0].mxu0
        %v1493 = vadd.f32 %v962, %v1492
        %1494 = vmatprep.mubr.bf16.mxu0 0
        %1495 = vmatmul.mubr.bf16.gmra.mrb[0].mxu0 %v1213
        %v1496 = vpop.f32.mrb[0].mxu0
        %v1497 = vadd.f32 %v958, %v1496
        %v1498 = vpop.f32.mrb[0].mxu0
        %v1499 = vadd.f32 %v962, %v1498
        %v1500 = vpop.f32.mrb[0].mxu0
        %v1501 = vadd.f32 %v958, %v1500
        %v1502 = vpop.f32.mrb[0].mxu0
        %v1503 = vadd.f32 %v962, %v1502
        %1504 = vmatprep.mubr.bf16.mxu0 0
        %1505 = vmatmul.mubr.bf16.gmra.mrb[0].mxu0 %v1216
        %v1506 = vpop.f32.mrb[0].mxu0
        %v1507 = vadd.f32 %v958, %v1506
        %v1508 = vpop.f32.mrb[0].mxu0
        %v1509 = vadd.f32 %v962, %v1508
        %v1510 = vpop.f32.mrb[0].mxu0
        %v1511 = vadd.f32 %v958, %v1510
        %v1512 = vpop.f32.mrb[0].mxu0
        %v1513 = vadd.f32 %v962, %v1512
        %1514 = vmatprep.mubr.bf16.mxu0 0
        %1515 = vmatmul.mubr.bf16.gmra.mrb[0].mxu0 %v1219
        %v1516 = vpop.f32.mrb[0].mxu0
        %v1517 = vadd.f32 %v958, %v1516
        %v1518 = vpop.f32.mrb[0].mxu0
        %v1519 = vadd.f32 %v962, %v1518
        %v1520 = vpop.f32.mrb[0].mxu0
        %v1521 = vadd.f32 %v958, %v1520
        %v1522 = vpop.f32.mrb[0].mxu0
        %v1523 = vadd.f32 %v962, %v1522
        %1524 = vmatprep.mubr.bf16.mxu0 0
        %1525 = vmatmul.mubr.bf16.gmra.mrb[0].mxu0 %v1222
        %v1526 = vpop.f32.mrb[0].mxu0
        %v1527 = vadd.f32 %v958, %v1526
        %v1528 = vpop.f32.mrb[0].mxu0
        %v1529 = vadd.f32 %v962, %v1528
        %v1530 = vpop.f32.mrb[0].mxu0
        %v1531 = vadd.f32 %v958, %v1530
        %v1532 = vpop.f32.mrb[0].mxu0
        %v1533 = vadd.f32 %v962, %v1532
        %1534 = vmatprep.mubr.bf16.mxu0 0
        %1535 = vmatmul.mubr.bf16.gmra.mrb[0].mxu0 %v1225
        %v1536 = vpop.f32.mrb[0].mxu0
        %v1537 = vadd.f32 %v958, %v1536
        %v1538 = vpop.f32.mrb[0].mxu0
        %v1539 = vadd.f32 %v962, %v1538
        %v1540 = vpop.f32.mrb[0].mxu0
        %v1541 = vadd.f32 %v958, %v1540
        %v1542 = vpop.f32.mrb[0].mxu0
        %v1543 = vadd.f32 %v962, %v1542
        %1544 = vmatprep.mubr.bf16.mxu0 0
        %1545 = vmatmul.mubr.bf16.gmra.mrb[0].mxu0 %v1228
        %v1546 = vpop.f32.mrb[0].mxu0
        %v1547 = vadd.f32 %v958, %v1546
        %v1548 = vpop.f32.mrb[0].mxu0
        %v1549 = vadd.f32 %v962, %v1548
        %v1550 = vpop.f32.mrb[0].mxu0
        %v1551 = vadd.f32 %v958, %v1550
        %v1552 = vpop.f32.mrb[0].mxu0
        %v1553 = vadd.f32 %v962, %v1552
        %1554 = vmatprep.mubr.bf16.mxu0 0
        %1555 = vmatmul.mubr.bf16.gmra.mrb[0].mxu0 %v1231
        %v1556 = vpop.f32.mrb[0].mxu0
        %v1557 = vadd.f32 %v958, %v1556
        %v1558 = vpop.f32.mrb[0].mxu0
        %v1559 = vadd.f32 %v962, %v1558
        %v1560 = vpop.f32.mrb[0].mxu0
        %v1561 = vadd.f32 %v958, %v1560
        %v1562 = vpop.f32.mrb[0].mxu0
        %v1563 = vadd.f32 %v962, %v1562
        %1564 = vmatprep.mubr.bf16.mxu0 0
        %1565 = vmatmul.mubr.bf16.gmra.mrb[0].mxu0 %v1234
        %v1566 = vpop.f32.mrb[0].mxu0
        %v1567 = vadd.f32 %v958, %v1566
        %v1568 = vpop.f32.mrb[0].mxu0
        %v1569 = vadd.f32 %v962, %v1568
        %v1570 = vpop.f32.mrb[0].mxu0
        %v1571 = vadd.f32 %v958, %v1570
        %v1572 = vpop.f32.mrb[0].mxu0
        %v1573 = vadd.f32 %v962, %v1572
        %1574 = vmatprep.mubr.bf16.mxu0 0
        %1575 = vmatmul.mubr.bf16.gmra.mrb[0].mxu0 %v1237
        %v1576 = vpop.f32.mrb[0].mxu0
        %v1577 = vadd.f32 %v958, %v1576
        %v1578 = vpop.f32.mrb[0].mxu0
        %v1579 = vadd.f32 %v962, %v1578
        %v1580 = vpop.f32.mrb[0].mxu0
        %v1581 = vadd.f32 %v958, %v1580
        %v1582 = vpop.f32.mrb[0].mxu0
        %v1583 = vadd.f32 %v962, %v1582
        %1584 = vmatprep.mubr.bf16.mxu0 0
        %1585 = vmatmul.mubr.bf16.gmra.mrb[0].mxu0 %v1240
        %v1586 = vpop.f32.mrb[0].mxu0
        %v1587 = vadd.f32 %v958, %v1586
        %v1588 = vpop.f32.mrb[0].mxu0
        %v1589 = vadd.f32 %v962, %v1588
        %v1590 = vpop.f32.mrb[0].mxu0
        %v1591 = vadd.f32 %v958, %v1590
        %v1592 = vpop.f32.mrb[0].mxu0
        %v1593 = vadd.f32 %v962, %v1592
        %1594 = vdwg.mxu0
        %v1595 = vpack.c.bf16 %v1281, %v1277
        %v1596 = vpack.c.bf16 %v1291, %v1287
        %v1597 = vpack.c.bf16 %v1301, %v1297
        %v1598 = vpack.c.bf16 %v1311, %v1307
        %v1599 = vpack.c.bf16 %v1321, %v1317
        %v1600 = vpack.c.bf16 %v1331, %v1327
        %v1601 = vpack.c.bf16 %v1341, %v1337
        %v1602 = vpack.c.bf16 %v1351, %v1347
        %v1603 = vpack.c.bf16 %v1361, %v1357
        %v1604 = vpack.c.bf16 %v1371, %v1367
        %v1605 = vpack.c.bf16 %v1381, %v1377
        %v1606 = vpack.c.bf16 %v1391, %v1387
        %v1607 = vpack.c.bf16 %v1401, %v1397
        %v1608 = vpack.c.bf16 %v1411, %v1407
        %v1609 = vpack.c.bf16 %v1421, %v1417
        %v1610 = vpack.c.bf16 %v1431, %v1427
        %v1611 = vpack.c.bf16 %v1441, %v1437
        %v1612 = vpack.c.bf16 %v1451, %v1447
        %v1613 = vpack.c.bf16 %v1461, %v1457
        %v1614 = vpack.c.bf16 %v1471, %v1467
        %v1615 = vpack.c.bf16 %v1481, %v1477
        %v1616 = vpack.c.bf16 %v1491, %v1487
        %v1617 = vpack.c.bf16 %v1501, %v1497
        %v1618 = vpack.c.bf16 %v1511, %v1507
        %v1619 = vpack.c.bf16 %v1521, %v1517
        %v1620 = vpack.c.bf16 %v1531, %v1527
        %v1621 = vpack.c.bf16 %v1541, %v1537
        %v1622 = vpack.c.bf16 %v1551, %v1547
        %v1623 = vpack.c.bf16 %v1561, %v1557
        %v1624 = vpack.c.bf16 %v1571, %v1567
        %v1625 = vpack.c.bf16 %v1581, %v1577
        %v1626 = vpack.c.bf16 %v1591, %v1587
        %v1627 = vld [vmem:[#allocation2] sm:$0xff]
        %v1628 = vld [vmem:[#allocation2 + $0x8] sm:$0xff]
        %v1629 = vld [vmem:[#allocation2 + $0x10] sm:$0xff]
        %v1630 = vld [vmem:[#allocation2 + $0x18] sm:$0xff]
        %v1631 = vld [vmem:[#allocation2 + $0x20] sm:$0xff]
        %v1632 = vld [vmem:[#allocation2 + $0x28] sm:$0xff]
        %v1633 = vld [vmem:[#allocation2 + $0x30] sm:$0xff]
        %v1634 = vld [vmem:[#allocation2 + $0x38] sm:$0xff]
        %v1635 = vld [vmem:[#allocation2 + $0x40] sm:$0xff]
        %v1636 = vld [vmem:[#allocation2 + $0x48] sm:$0xff]
        %v1637 = vld [vmem:[#allocation2 + $0x50] sm:$0xff]
        %v1638 = vld [vmem:[#allocation2 + $0x58] sm:$0xff]
        %v1639 = vld [vmem:[#allocation2 + $0x60] sm:$0xff]
        %v1640 = vld [vmem:[#allocation2 + $0x68] sm:$0xff]
        %v1641 = vld [vmem:[#allocation2 + $0x70] sm:$0xff]
        %v1642 = vld [vmem:[#allocation2 + $0x78] sm:$0xff]
        %v1643 = vld [vmem:[#allocation2 + $0x80] sm:$0xff]
        %v1644 = vld [vmem:[#allocation2 + $0x88] sm:$0xff]
        %v1645 = vld [vmem:[#allocation2 + $0x90] sm:$0xff]
        %v1646 = vld [vmem:[#allocation2 + $0x98] sm:$0xff]
        %v1647 = vld [vmem:[#allocation2 + $0xa0] sm:$0xff]
        %v1648 = vld [vmem:[#allocation2 + $0xa8] sm:$0xff]
        %v1649 = vld [vmem:[#allocation2 + $0xb0] sm:$0xff]
        %v1650 = vld [vmem:[#allocation2 + $0xb8] sm:$0xff]
        %v1651 = vld [vmem:[#allocation2 + $0xc0] sm:$0xff]
        %v1652 = vld [vmem:[#allocation2 + $0xc8] sm:$0xff]
        %v1653 = vld [vmem:[#allocation2 + $0xd0] sm:$0xff]
        %v1654 = vld [vmem:[#allocation2 + $0xd8] sm:$0xff]
        %v1655 = vld [vmem:[#allocation2 + $0xe0] sm:$0xff]
        %v1656 = vld [vmem:[#allocation2 + $0xe8] sm:$0xff]
        %v1657 = vld [vmem:[#allocation2 + $0xf0] sm:$0xff]
        %v1658 = vld [vmem:[#allocation2 + $0xf8] sm:$0xff]
        %1659 = vmatprep.subr.bf16.mxu0 %v1628
        %1660 = vmatpush1.bf16.msra.mxu0 %v1627
        %1661 = vmatprep.subr.bf16.mxu0 %v1632
        %1662 = vmatpush1.bf16.msra.mxu0 %v1631
        %1663 = vmatprep.subr.bf16.mxu0 %v1636
        %1664 = vmatpush1.bf16.msra.mxu0 %v1635
        %1665 = vmatprep.subr.bf16.mxu0 %v1640
        %1666 = vmatpush1.bf16.msra.mxu0 %v1639
        %1667 = vmatprep.subr.bf16.mxu0 %v1644
        %1668 = vmatpush1.bf16.msra.mxu0 %v1643
        %1669 = vmatprep.subr.bf16.mxu0 %v1648
        %1670 = vmatpush1.bf16.msra.mxu0 %v1647
        %1671 = vmatprep.subr.bf16.mxu0 %v1652
        %1672 = vmatpush1.bf16.msra.mxu0 %v1651
        %1673 = vmatprep.subr.bf16.mxu0 %v1656
        %1674 = vmatpush1.bf16.msra.mxu0 %v1655
        %1675 = vmatprep.subr.bf16.mxu0 0
        %1676 = vmatpush1.bf16.msra.mxu0 0
        %1677 = vmatprep.subr.bf16.mxu0 0
        %1678 = vmatpush1.bf16.msra.mxu0 0
        %1679 = vmatprep.subr.bf16.mxu0 0
        %1680 = vmatpush1.bf16.msra.mxu0 0
        %1681 = vmatprep.subr.bf16.mxu0 0
        %1682 = vmatpush1.bf16.msra.mxu0 0
        %1683 = vmatprep.subr.bf16.mxu0 0
        %1684 = vmatpush1.bf16.msra.mxu0 0
        %1685 = vmatprep.subr.bf16.mxu0 0
        %1686 = vmatpush1.bf16.msra.mxu0 0
        %1687 = vmatprep.subr.bf16.mxu0 0
        %1688 = vmatpush1.bf16.msra.mxu0 0
        %1689 = vmatprep.subr.bf16.mxu0 0
        %1690 = vmatpush1.bf16.msra.mxu0 0
        %1691 = vmatprep.mubr.bf16.mxu0 0
        %1692 = vmatmul.mubr.bf16.gmra.mrb[0].mxu0 %v1595
        %v1693 = vpop.f32.mrb[0].mxu0
        %v1694 = vadd.f32 0.0, %v1693
        %v1695 = vpop.f32.mrb[0].mxu0
        %v1696 = vadd.f32 0.0, %v1695
        %v1697 = vpop.f32.mrb[0].mxu0
        %v1698 = vadd.f32 0.0, %v1697
        %v1699 = vpop.f32.mrb[0].mxu0
        %v1700 = vadd.f32 0.0, %v1699
        %1701 = vmatprep.mubr.bf16.mxu0 0
        %1702 = vmatmul.mubr.bf16.gmra.mrb[0].mxu0 %v1596
        %v1703 = vpop.f32.mrb[0].mxu0
        %v1704 = vadd.f32 0.0, %v1703
        %v1705 = vpop.f32.mrb[0].mxu0
        %v1706 = vadd.f32 0.0, %v1705
        %v1707 = vpop.f32.mrb[0].mxu0
        %v1708 = vadd.f32 0.0, %v1707
        %v1709 = vpop.f32.mrb[0].mxu0
        %v1710 = vadd.f32 0.0, %v1709
        %1711 = vmatprep.mubr.bf16.mxu0 0
        %1712 = vmatmul.mubr.bf16.gmra.mrb[0].mxu0 %v1597
        %v1713 = vpop.f32.mrb[0].mxu0
        %v1714 = vadd.f32 0.0, %v1713
        %v1715 = vpop.f32.mrb[0].mxu0
        %v1716 = vadd.f32 0.0, %v1715
        %v1717 = vpop.f32.mrb[0].mxu0
        %v1718 = vadd.f32 0.0, %v1717
        %v1719 = vpop.f32.mrb[0].mxu0
        %v1720 = vadd.f32 0.0, %v1719
        %1721 = vmatprep.mubr.bf16.mxu0 0
        %1722 = vmatmul.mubr.bf16.gmra.mrb[0].mxu0 %v1598
        %v1723 = vpop.f32.mrb[0].mxu0
        %v1724 = vadd.f32 0.0, %v1723
        %v1725 = vpop.f32.mrb[0].mxu0
        %v1726 = vadd.f32 0.0, %v1725
        %v1727 = vpop.f32.mrb[0].mxu0
        %v1728 = vadd.f32 0.0, %v1727
        %v1729 = vpop.f32.mrb[0].mxu0
        %v1730 = vadd.f32 0.0, %v1729
        %1731 = vmatprep.mubr.bf16.mxu0 0
        %1732 = vmatmul.mubr.bf16.gmra.mrb[0].mxu0 %v1599
        %v1733 = vpop.f32.mrb[0].mxu0
        %v1734 = vadd.f32 0.0, %v1733
        %v1735 = vpop.f32.mrb[0].mxu0
        %v1736 = vadd.f32 0.0, %v1735
        %v1737 = vpop.f32.mrb[0].mxu0
        %v1738 = vadd.f32 0.0, %v1737
        %v1739 = vpop.f32.mrb[0].mxu0
        %v1740 = vadd.f32 0.0, %v1739
        %1741 = vmatprep.mubr.bf16.mxu0 0
        %1742 = vmatmul.mubr.bf16.gmra.mrb[0].mxu0 %v1600
        %v1743 = vpop.f32.mrb[0].mxu0
        %v1744 = vadd.f32 0.0, %v1743
        %v1745 = vpop.f32.mrb[0].mxu0
        %v1746 = vadd.f32 0.0, %v1745
        %v1747 = vpop.f32.mrb[0].mxu0
        %v1748 = vadd.f32 0.0, %v1747
        %v1749 = vpop.f32.mrb[0].mxu0
        %v1750 = vadd.f32 0.0, %v1749
        %1751 = vmatprep.mubr.bf16.mxu0 0
        %1752 = vmatmul.mubr.bf16.gmra.mrb[0].mxu0 %v1601
        %v1753 = vpop.f32.mrb[0].mxu0
        %v1754 = vadd.f32 0.0, %v1753
        %v1755 = vpop.f32.mrb[0].mxu0
        %v1756 = vadd.f32 0.0, %v1755
        %v1757 = vpop.f32.mrb[0].mxu0
        %v1758 = vadd.f32 0.0, %v1757
        %v1759 = vpop.f32.mrb[0].mxu0
        %v1760 = vadd.f32 0.0, %v1759
        %1761 = vmatprep.mubr.bf16.mxu0 0
        %1762 = vmatmul.mubr.bf16.gmra.mrb[0].mxu0 %v1602
        %v1763 = vpop.f32.mrb[0].mxu0
        %v1764 = vadd.f32 0.0, %v1763
        %v1765 = vpop.f32.mrb[0].mxu0
        %v1766 = vadd.f32 0.0, %v1765
        %v1767 = vpop.f32.mrb[0].mxu0
        %v1768 = vadd.f32 0.0, %v1767
        %v1769 = vpop.f32.mrb[0].mxu0
        %v1770 = vadd.f32 0.0, %v1769
        %1771 = vmatprep.mubr.bf16.mxu0 0
        %1772 = vmatmul.mubr.bf16.gmra.mrb[0].mxu0 %v1603
        %v1773 = vpop.f32.mrb[0].mxu0
        %v1774 = vadd.f32 0.0, %v1773
        %v1775 = vpop.f32.mrb[0].mxu0
        %v1776 = vadd.f32 0.0, %v1775
        %v1777 = vpop.f32.mrb[0].mxu0
        %v1778 = vadd.f32 0.0, %v1777
        %v1779 = vpop.f32.mrb[0].mxu0
        %v1780 = vadd.f32 0.0, %v1779
        %1781 = vmatprep.mubr.bf16.mxu0 0
        %1782 = vmatmul.mubr.bf16.gmra.mrb[0].mxu0 %v1604
        %v1783 = vpop.f32.mrb[0].mxu0
        %v1784 = vadd.f32 0.0, %v1783
        %v1785 = vpop.f32.mrb[0].mxu0
        %v1786 = vadd.f32 0.0, %v1785
        %v1787 = vpop.f32.mrb[0].mxu0
        %v1788 = vadd.f32 0.0, %v1787
        %v1789 = vpop.f32.mrb[0].mxu0
        %v1790 = vadd.f32 0.0, %v1789
        %1791 = vmatprep.mubr.bf16.mxu0 0
        %1792 = vmatmul.mubr.bf16.gmra.mrb[0].mxu0 %v1605
        %v1793 = vpop.f32.mrb[0].mxu0
        %v1794 = vadd.f32 0.0, %v1793
        %v1795 = vpop.f32.mrb[0].mxu0
        %v1796 = vadd.f32 0.0, %v1795
        %v1797 = vpop.f32.mrb[0].mxu0
        %v1798 = vadd.f32 0.0, %v1797
        %v1799 = vpop.f32.mrb[0].mxu0
        %v1800 = vadd.f32 0.0, %v1799
        %1801 = vmatprep.mubr.bf16.mxu0 0
        %1802 = vmatmul.mubr.bf16.gmra.mrb[0].mxu0 %v1606
        %v1803 = vpop.f32.mrb[0].mxu0
        %v1804 = vadd.f32 0.0, %v1803
        %v1805 = vpop.f32.mrb[0].mxu0
        %v1806 = vadd.f32 0.0, %v1805
        %v1807 = vpop.f32.mrb[0].mxu0
        %v1808 = vadd.f32 0.0, %v1807
        %v1809 = vpop.f32.mrb[0].mxu0
        %v1810 = vadd.f32 0.0, %v1809
        %1811 = vmatprep.mubr.bf16.mxu0 0
        %1812 = vmatmul.mubr.bf16.gmra.mrb[0].mxu0 %v1607
        %v1813 = vpop.f32.mrb[0].mxu0
        %v1814 = vadd.f32 0.0, %v1813
        %v1815 = vpop.f32.mrb[0].mxu0
        %v1816 = vadd.f32 0.0, %v1815
        %v1817 = vpop.f32.mrb[0].mxu0
        %v1818 = vadd.f32 0.0, %v1817
        %v1819 = vpop.f32.mrb[0].mxu0
        %v1820 = vadd.f32 0.0, %v1819
        %1821 = vmatprep.mubr.bf16.mxu0 0
        %1822 = vmatmul.mubr.bf16.gmra.mrb[0].mxu0 %v1608
        %v1823 = vpop.f32.mrb[0].mxu0
        %v1824 = vadd.f32 0.0, %v1823
        %v1825 = vpop.f32.mrb[0].mxu0
        %v1826 = vadd.f32 0.0, %v1825
        %v1827 = vpop.f32.mrb[0].mxu0
        %v1828 = vadd.f32 0.0, %v1827
        %v1829 = vpop.f32.mrb[0].mxu0
        %v1830 = vadd.f32 0.0, %v1829
        %1831 = vmatprep.mubr.bf16.mxu0 0
        %1832 = vmatmul.mubr.bf16.gmra.mrb[0].mxu0 %v1609
        %v1833 = vpop.f32.mrb[0].mxu0
        %v1834 = vadd.f32 0.0, %v1833
        %v1835 = vpop.f32.mrb[0].mxu0
        %v1836 = vadd.f32 0.0, %v1835
        %v1837 = vpop.f32.mrb[0].mxu0
        %v1838 = vadd.f32 0.0, %v1837
        %v1839 = vpop.f32.mrb[0].mxu0
        %v1840 = vadd.f32 0.0, %v1839
        %1841 = vmatprep.mubr.bf16.mxu0 0
        %1842 = vmatmul.mubr.bf16.gmra.mrb[0].mxu0 %v1610
        %v1843 = vpop.f32.mrb[0].mxu0
        %v1844 = vadd.f32 0.0, %v1843
        %v1845 = vpop.f32.mrb[0].mxu0
        %v1846 = vadd.f32 0.0, %v1845
        %v1847 = vpop.f32.mrb[0].mxu0
        %v1848 = vadd.f32 0.0, %v1847
        %v1849 = vpop.f32.mrb[0].mxu0
        %v1850 = vadd.f32 0.0, %v1849
        %1851 = vmatprep.mubr.bf16.mxu0 0
        %1852 = vmatmul.mubr.bf16.gmra.mrb[0].mxu0 %v1611
        %v1853 = vpop.f32.mrb[0].mxu0
        %v1854 = vadd.f32 0.0, %v1853
        %v1855 = vpop.f32.mrb[0].mxu0
        %v1856 = vadd.f32 0.0, %v1855
        %v1857 = vpop.f32.mrb[0].mxu0
        %v1858 = vadd.f32 0.0, %v1857
        %v1859 = vpop.f32.mrb[0].mxu0
        %v1860 = vadd.f32 0.0, %v1859
        %1861 = vmatprep.mubr.bf16.mxu0 0
        %1862 = vmatmul.mubr.bf16.gmra.mrb[0].mxu0 %v1612
        %v1863 = vpop.f32.mrb[0].mxu0
        %v1864 = vadd.f32 0.0, %v1863
        %v1865 = vpop.f32.mrb[0].mxu0
        %v1866 = vadd.f32 0.0, %v1865
        %v1867 = vpop.f32.mrb[0].mxu0
        %v1868 = vadd.f32 0.0, %v1867
        %v1869 = vpop.f32.mrb[0].mxu0
        %v1870 = vadd.f32 0.0, %v1869
        %1871 = vmatprep.mubr.bf16.mxu0 0
        %1872 = vmatmul.mubr.bf16.gmra.mrb[0].mxu0 %v1613
        %v1873 = vpop.f32.mrb[0].mxu0
        %v1874 = vadd.f32 0.0, %v1873
        %v1875 = vpop.f32.mrb[0].mxu0
        %v1876 = vadd.f32 0.0, %v1875
        %v1877 = vpop.f32.mrb[0].mxu0
        %v1878 = vadd.f32 0.0, %v1877
        %v1879 = vpop.f32.mrb[0].mxu0
        %v1880 = vadd.f32 0.0, %v1879
        %1881 = vmatprep.mubr.bf16.mxu0 0
        %1882 = vmatmul.mubr.bf16.gmra.mrb[0].mxu0 %v1614
        %v1883 = vpop.f32.mrb[0].mxu0
        %v1884 = vadd.f32 0.0, %v1883
        %v1885 = vpop.f32.mrb[0].mxu0
        %v1886 = vadd.f32 0.0, %v1885
        %v1887 = vpop.f32.mrb[0].mxu0
        %v1888 = vadd.f32 0.0, %v1887
        %v1889 = vpop.f32.mrb[0].mxu0
        %v1890 = vadd.f32 0.0, %v1889
        %1891 = vmatprep.mubr.bf16.mxu0 0
        %1892 = vmatmul.mubr.bf16.gmra.mrb[0].mxu0 %v1615
        %v1893 = vpop.f32.mrb[0].mxu0
        %v1894 = vadd.f32 0.0, %v1893
        %v1895 = vpop.f32.mrb[0].mxu0
        %v1896 = vadd.f32 0.0, %v1895
        %v1897 = vpop.f32.mrb[0].mxu0
        %v1898 = vadd.f32 0.0, %v1897
        %v1899 = vpop.f32.mrb[0].mxu0
        %v1900 = vadd.f32 0.0, %v1899
        %1901 = vmatprep.mubr.bf16.mxu0 0
        %1902 = vmatmul.mubr.bf16.gmra.mrb[0].mxu0 %v1616
        %v1903 = vpop.f32.mrb[0].mxu0
        %v1904 = vadd.f32 0.0, %v1903
        %v1905 = vpop.f32.mrb[0].mxu0
        %v1906 = vadd.f32 0.0, %v1905
        %v1907 = vpop.f32.mrb[0].mxu0
        %v1908 = vadd.f32 0.0, %v1907
        %v1909 = vpop.f32.mrb[0].mxu0
        %v1910 = vadd.f32 0.0, %v1909
        %1911 = vmatprep.mubr.bf16.mxu0 0
        %1912 = vmatmul.mubr.bf16.gmra.mrb[0].mxu0 %v1617
        %v1913 = vpop.f32.mrb[0].mxu0
        %v1914 = vadd.f32 0.0, %v1913
        %v1915 = vpop.f32.mrb[0].mxu0
        %v1916 = vadd.f32 0.0, %v1915
        %v1917 = vpop.f32.mrb[0].mxu0
        %v1918 = vadd.f32 0.0, %v1917
        %v1919 = vpop.f32.mrb[0].mxu0
        %v1920 = vadd.f32 0.0, %v1919
        %1921 = vmatprep.mubr.bf16.mxu0 0
        %1922 = vmatmul.mubr.bf16.gmra.mrb[0].mxu0 %v1618
        %v1923 = vpop.f32.mrb[0].mxu0
        %v1924 = vadd.f32 0.0, %v1923
        %v1925 = vpop.f32.mrb[0].mxu0
        %v1926 = vadd.f32 0.0, %v1925
        %v1927 = vpop.f32.mrb[0].mxu0
        %v1928 = vadd.f32 0.0, %v1927
        %v1929 = vpop.f32.mrb[0].mxu0
        %v1930 = vadd.f32 0.0, %v1929
        %1931 = vmatprep.mubr.bf16.mxu0 0
        %1932 = vmatmul.mubr.bf16.gmra.mrb[0].mxu0 %v1619
        %v1933 = vpop.f32.mrb[0].mxu0
        %v1934 = vadd.f32 0.0, %v1933
        %v1935 = vpop.f32.mrb[0].mxu0
        %v1936 = vadd.f32 0.0, %v1935
        %v1937 = vpop.f32.mrb[0].mxu0
        %v1938 = vadd.f32 0.0, %v1937
        %v1939 = vpop.f32.mrb[0].mxu0
        %v1940 = vadd.f32 0.0, %v1939
        %1941 = vmatprep.mubr.bf16.mxu0 0
        %1942 = vmatmul.mubr.bf16.gmra.mrb[0].mxu0 %v1620
        %v1943 = vpop.f32.mrb[0].mxu0
        %v1944 = vadd.f32 0.0, %v1943
        %v1945 = vpop.f32.mrb[0].mxu0
        %v1946 = vadd.f32 0.0, %v1945
        %v1947 = vpop.f32.mrb[0].mxu0
        %v1948 = vadd.f32 0.0, %v1947
        %v1949 = vpop.f32.mrb[0].mxu0
        %v1950 = vadd.f32 0.0, %v1949
        %1951 = vmatprep.mubr.bf16.mxu0 0
        %1952 = vmatmul.mubr.bf16.gmra.mrb[0].mxu0 %v1621
        %v1953 = vpop.f32.mrb[0].mxu0
        %v1954 = vadd.f32 0.0, %v1953
        %v1955 = vpop.f32.mrb[0].mxu0
        %v1956 = vadd.f32 0.0, %v1955
        %v1957 = vpop.f32.mrb[0].mxu0
        %v1958 = vadd.f32 0.0, %v1957
        %v1959 = vpop.f32.mrb[0].mxu0
        %v1960 = vadd.f32 0.0, %v1959
        %1961 = vmatprep.mubr.bf16.mxu0 0
        %1962 = vmatmul.mubr.bf16.gmra.mrb[0].mxu0 %v1622
        %v1963 = vpop.f32.mrb[0].mxu0
        %v1964 = vadd.f32 0.0, %v1963
        %v1965 = vpop.f32.mrb[0].mxu0
        %v1966 = vadd.f32 0.0, %v1965
        %v1967 = vpop.f32.mrb[0].mxu0
        %v1968 = vadd.f32 0.0, %v1967
        %v1969 = vpop.f32.mrb[0].mxu0
        %v1970 = vadd.f32 0.0, %v1969
        %1971 = vmatprep.mubr.bf16.mxu0 0
        %1972 = vmatmul.mubr.bf16.gmra.mrb[0].mxu0 %v1623
        %v1973 = vpop.f32.mrb[0].mxu0
        %v1974 = vadd.f32 0.0, %v1973
        %v1975 = vpop.f32.mrb[0].mxu0
        %v1976 = vadd.f32 0.0, %v1975
        %v1977 = vpop.f32.mrb[0].mxu0
        %v1978 = vadd.f32 0.0, %v1977
        %v1979 = vpop.f32.mrb[0].mxu0
        %v1980 = vadd.f32 0.0, %v1979
        %1981 = vmatprep.mubr.bf16.mxu0 0
        %1982 = vmatmul.mubr.bf16.gmra.mrb[0].mxu0 %v1624
        %v1983 = vpop.f32.mrb[0].mxu0
        %v1984 = vadd.f32 0.0, %v1983
        %v1985 = vpop.f32.mrb[0].mxu0
        %v1986 = vadd.f32 0.0, %v1985
        %v1987 = vpop.f32.mrb[0].mxu0
        %v1988 = vadd.f32 0.0, %v1987
        %v1989 = vpop.f32.mrb[0].mxu0
        %v1990 = vadd.f32 0.0, %v1989
        %1991 = vmatprep.mubr.bf16.mxu0 0
        %1992 = vmatmul.mubr.bf16.gmra.mrb[0].mxu0 %v1625
        %v1993 = vpop.f32.mrb[0].mxu0
        %v1994 = vadd.f32 0.0, %v1993
        %v1995 = vpop.f32.mrb[0].mxu0
        %v1996 = vadd.f32 0.0, %v1995
        %v1997 = vpop.f32.mrb[0].mxu0
        %v1998 = vadd.f32 0.0, %v1997
        %v1999 = vpop.f32.mrb[0].mxu0
        %v2000 = vadd.f32 0.0, %v1999
        %2001 = vmatprep.mubr.bf16.mxu0 0
        %2002 = vmatmul.mubr.bf16.gmra.mrb[0].mxu0 %v1626
        %v2003 = vpop.f32.mrb[0].mxu0
        %v2004 = vadd.f32 0.0, %v2003
        %v2005 = vpop.f32.mrb[0].mxu0
        %v2006 = vadd.f32 0.0, %v2005
        %v2007 = vpop.f32.mrb[0].mxu0
        %v2008 = vadd.f32 0.0, %v2007
        %v2009 = vpop.f32.mrb[0].mxu0
        %v2010 = vadd.f32 0.0, %v2009
        %2011 = vdwg.mxu0
        %2012 = vmatprep.subr.bf16.mxu0 %v1630
        %2013 = vmatpush1.bf16.msra.mxu0 %v1629
        %2014 = vmatprep.subr.bf16.mxu0 %v1634
        %2015 = vmatpush1.bf16.msra.mxu0 %v1633
        %2016 = vmatprep.subr.bf16.mxu0 %v1638
        %2017 = vmatpush1.bf16.msra.mxu0 %v1637
        %2018 = vmatprep.subr.bf16.mxu0 %v1642
        %2019 = vmatpush1.bf16.msra.mxu0 %v1641
        %2020 = vmatprep.subr.bf16.mxu0 %v1646
        %2021 = vmatpush1.bf16.msra.mxu0 %v1645
        %2022 = vmatprep.subr.bf16.mxu0 %v1650
        %2023 = vmatpush1.bf16.msra.mxu0 %v1649
        %2024 = vmatprep.subr.bf16.mxu0 %v1654
        %2025 = vmatpush1.bf16.msra.mxu0 %v1653
        %2026 = vmatprep.subr.bf16.mxu0 %v1658
        %2027 = vmatpush1.bf16.msra.mxu0 %v1657
        %2028 = vmatprep.subr.bf16.mxu0 0
        %2029 = vmatpush1.bf16.msra.mxu0 0
        %2030 = vmatprep.subr.bf16.mxu0 0
        %2031 = vmatpush1.bf16.msra.mxu0 0
        %2032 = vmatprep.subr.bf16.mxu0 0
        %2033 = vmatpush1.bf16.msra.mxu0 0
        %2034 = vmatprep.subr.bf16.mxu0 0
        %2035 = vmatpush1.bf16.msra.mxu0 0
        %2036 = vmatprep.subr.bf16.mxu0 0
        %2037 = vmatpush1.bf16.msra.mxu0 0
        %2038 = vmatprep.subr.bf16.mxu0 0
        %2039 = vmatpush1.bf16.msra.mxu0 0
        %2040 = vmatprep.subr.bf16.mxu0 0
        %2041 = vmatpush1.bf16.msra.mxu0 0
        %2042 = vmatprep.subr.bf16.mxu0 0
        %2043 = vmatpush1.bf16.msra.mxu0 0
        %2044 = vmatprep.mubr.bf16.mxu0 0
        %2045 = vmatmul.mubr.bf16.gmra.mrb[0].mxu0 %v1595
        %v2046 = vpop.f32.mrb[0].mxu0
        %v2047 = vadd.f32 0.0, %v2046
        %v2048 = vpop.f32.mrb[0].mxu0
        %v2049 = vadd.f32 0.0, %v2048
        %v2050 = vpop.f32.mrb[0].mxu0
        %v2051 = vadd.f32 0.0, %v2050
        %v2052 = vpop.f32.mrb[0].mxu0
        %v2053 = vadd.f32 0.0, %v2052
        %2054 = vmatprep.mubr.bf16.mxu0 0
        %2055 = vmatmul.mubr.bf16.gmra.mrb[0].mxu0 %v1596
        %v2056 = vpop.f32.mrb[0].mxu0
        %v2057 = vadd.f32 0.0, %v2056
        %v2058 = vpop.f32.mrb[0].mxu0
        %v2059 = vadd.f32 0.0, %v2058
        %v2060 = vpop.f32.mrb[0].mxu0
        %v2061 = vadd.f32 0.0, %v2060
        %v2062 = vpop.f32.mrb[0].mxu0
        %v2063 = vadd.f32 0.0, %v2062
        %2064 = vmatprep.mubr.bf16.mxu0 0
        %2065 = vmatmul.mubr.bf16.gmra.mrb[0].mxu0 %v1597
        %v2066 = vpop.f32.mrb[0].mxu0
        %v2067 = vadd.f32 0.0, %v2066
        %v2068 = vpop.f32.mrb[0].mxu0
        %v2069 = vadd.f32 0.0, %v2068
        %v2070 = vpop.f32.mrb[0].mxu0
        %v2071 = vadd.f32 0.0, %v2070
        %v2072 = vpop.f32.mrb[0].mxu0
        %v2073 = vadd.f32 0.0, %v2072
        %2074 = vmatprep.mubr.bf16.mxu0 0
        %2075 = vmatmul.mubr.bf16.gmra.mrb[0].mxu0 %v1598
        %v2076 = vpop.f32.mrb[0].mxu0
        %v2077 = vadd.f32 0.0, %v2076
        %v2078 = vpop.f32.mrb[0].mxu0
        %v2079 = vadd.f32 0.0, %v2078
        %v2080 = vpop.f32.mrb[0].mxu0
        %v2081 = vadd.f32 0.0, %v2080
        %v2082 = vpop.f32.mrb[0].mxu0
        %v2083 = vadd.f32 0.0, %v2082
        %2084 = vmatprep.mubr.bf16.mxu0 0
        %2085 = vmatmul.mubr.bf16.gmra.mrb[0].mxu0 %v1599
        %v2086 = vpop.f32.mrb[0].mxu0
        %v2087 = vadd.f32 0.0, %v2086
        %v2088 = vpop.f32.mrb[0].mxu0
        %v2089 = vadd.f32 0.0, %v2088
        %v2090 = vpop.f32.mrb[0].mxu0
        %v2091 = vadd.f32 0.0, %v2090
        %v2092 = vpop.f32.mrb[0].mxu0
        %v2093 = vadd.f32 0.0, %v2092
        %2094 = vmatprep.mubr.bf16.mxu0 0
        %2095 = vmatmul.mubr.bf16.gmra.mrb[0].mxu0 %v1600
        %v2096 = vpop.f32.mrb[0].mxu0
        %v2097 = vadd.f32 0.0, %v2096
        %v2098 = vpop.f32.mrb[0].mxu0
        %v2099 = vadd.f32 0.0, %v2098
        %v2100 = vpop.f32.mrb[0].mxu0
        %v2101 = vadd.f32 0.0, %v2100
        %v2102 = vpop.f32.mrb[0].mxu0
        %v2103 = vadd.f32 0.0, %v2102
        %2104 = vmatprep.mubr.bf16.mxu0 0
        %2105 = vmatmul.mubr.bf16.gmra.mrb[0].mxu0 %v1601
        %v2106 = vpop.f32.mrb[0].mxu0
        %v2107 = vadd.f32 0.0, %v2106
        %v2108 = vpop.f32.mrb[0].mxu0
        %v2109 = vadd.f32 0.0, %v2108
        %v2110 = vpop.f32.mrb[0].mxu0
        %v2111 = vadd.f32 0.0, %v2110
        %v2112 = vpop.f32.mrb[0].mxu0
        %v2113 = vadd.f32 0.0, %v2112
        %2114 = vmatprep.mubr.bf16.mxu0 0
        %2115 = vmatmul.mubr.bf16.gmra.mrb[0].mxu0 %v1602
        %v2116 = vpop.f32.mrb[0].mxu0
        %v2117 = vadd.f32 0.0, %v2116
        %v2118 = vpop.f32.mrb[0].mxu0
        %v2119 = vadd.f32 0.0, %v2118
        %v2120 = vpop.f32.mrb[0].mxu0
        %v2121 = vadd.f32 0.0, %v2120
        %v2122 = vpop.f32.mrb[0].mxu0
        %v2123 = vadd.f32 0.0, %v2122
        %2124 = vmatprep.mubr.bf16.mxu0 0
        %2125 = vmatmul.mubr.bf16.gmra.mrb[0].mxu0 %v1603
        %v2126 = vpop.f32.mrb[0].mxu0
        %v2127 = vadd.f32 0.0, %v2126
        %v2128 = vpop.f32.mrb[0].mxu0
        %v2129 = vadd.f32 0.0, %v2128
        %v2130 = vpop.f32.mrb[0].mxu0
        %v2131 = vadd.f32 0.0, %v2130
        %v2132 = vpop.f32.mrb[0].mxu0
        %v2133 = vadd.f32 0.0, %v2132
        %2134 = vmatprep.mubr.bf16.mxu0 0
        %2135 = vmatmul.mubr.bf16.gmra.mrb[0].mxu0 %v1604
        %v2136 = vpop.f32.mrb[0].mxu0
        %v2137 = vadd.f32 0.0, %v2136
        %v2138 = vpop.f32.mrb[0].mxu0
        %v2139 = vadd.f32 0.0, %v2138
        %v2140 = vpop.f32.mrb[0].mxu0
        %v2141 = vadd.f32 0.0, %v2140
        %v2142 = vpop.f32.mrb[0].mxu0
        %v2143 = vadd.f32 0.0, %v2142
        %2144 = vmatprep.mubr.bf16.mxu0 0
        %2145 = vmatmul.mubr.bf16.gmra.mrb[0].mxu0 %v1605
        %v2146 = vpop.f32.mrb[0].mxu0
        %v2147 = vadd.f32 0.0, %v2146
        %v2148 = vpop.f32.mrb[0].mxu0
        %v2149 = vadd.f32 0.0, %v2148
        %v2150 = vpop.f32.mrb[0].mxu0
        %v2151 = vadd.f32 0.0, %v2150
        %v2152 = vpop.f32.mrb[0].mxu0
        %v2153 = vadd.f32 0.0, %v2152
        %2154 = vmatprep.mubr.bf16.mxu0 0
        %2155 = vmatmul.mubr.bf16.gmra.mrb[0].mxu0 %v1606
        %v2156 = vpop.f32.mrb[0].mxu0
        %v2157 = vadd.f32 0.0, %v2156
        %v2158 = vpop.f32.mrb[0].mxu0
        %v2159 = vadd.f32 0.0, %v2158
        %v2160 = vpop.f32.mrb[0].mxu0
        %v2161 = vadd.f32 0.0, %v2160
        %v2162 = vpop.f32.mrb[0].mxu0
        %v2163 = vadd.f32 0.0, %v2162
        %2164 = vmatprep.mubr.bf16.mxu0 0
        %2165 = vmatmul.mubr.bf16.gmra.mrb[0].mxu0 %v1607
        %v2166 = vpop.f32.mrb[0].mxu0
        %v2167 = vadd.f32 0.0, %v2166
        %v2168 = vpop.f32.mrb[0].mxu0
        %v2169 = vadd.f32 0.0, %v2168
        %v2170 = vpop.f32.mrb[0].mxu0
        %v2171 = vadd.f32 0.0, %v2170
        %v2172 = vpop.f32.mrb[0].mxu0
        %v2173 = vadd.f32 0.0, %v2172
        %2174 = vmatprep.mubr.bf16.mxu0 0
        %2175 = vmatmul.mubr.bf16.gmra.mrb[0].mxu0 %v1608
        %v2176 = vpop.f32.mrb[0].mxu0
        %v2177 = vadd.f32 0.0, %v2176
        %v2178 = vpop.f32.mrb[0].mxu0
        %v2179 = vadd.f32 0.0, %v2178
        %v2180 = vpop.f32.mrb[0].mxu0
        %v2181 = vadd.f32 0.0, %v2180
        %v2182 = vpop.f32.mrb[0].mxu0
        %v2183 = vadd.f32 0.0, %v2182
        %2184 = vmatprep.mubr.bf16.mxu0 0
        %2185 = vmatmul.mubr.bf16.gmra.mrb[0].mxu0 %v1609
        %v2186 = vpop.f32.mrb[0].mxu0
        %v2187 = vadd.f32 0.0, %v2186
        %v2188 = vpop.f32.mrb[0].mxu0
        %v2189 = vadd.f32 0.0, %v2188
        %v2190 = vpop.f32.mrb[0].mxu0
        %v2191 = vadd.f32 0.0, %v2190
        %v2192 = vpop.f32.mrb[0].mxu0
        %v2193 = vadd.f32 0.0, %v2192
        %2194 = vmatprep.mubr.bf16.mxu0 0
        %2195 = vmatmul.mubr.bf16.gmra.mrb[0].mxu0 %v1610
        %v2196 = vpop.f32.mrb[0].mxu0
        %v2197 = vadd.f32 0.0, %v2196
        %v2198 = vpop.f32.mrb[0].mxu0
        %v2199 = vadd.f32 0.0, %v2198
        %v2200 = vpop.f32.mrb[0].mxu0
        %v2201 = vadd.f32 0.0, %v2200
        %v2202 = vpop.f32.mrb[0].mxu0
        %v2203 = vadd.f32 0.0, %v2202
        %2204 = vmatprep.mubr.bf16.mxu0 0
        %2205 = vmatmul.mubr.bf16.gmra.mrb[0].mxu0 %v1611
        %v2206 = vpop.f32.mrb[0].mxu0
        %v2207 = vadd.f32 0.0, %v2206
        %v2208 = vpop.f32.mrb[0].mxu0
        %v2209 = vadd.f32 0.0, %v2208
        %v2210 = vpop.f32.mrb[0].mxu0
        %v2211 = vadd.f32 0.0, %v2210
        %v2212 = vpop.f32.mrb[0].mxu0
        %v2213 = vadd.f32 0.0, %v2212
        %2214 = vmatprep.mubr.bf16.mxu0 0
        %2215 = vmatmul.mubr.bf16.gmra.mrb[0].mxu0 %v1612
        %v2216 = vpop.f32.mrb[0].mxu0
        %v2217 = vadd.f32 0.0, %v2216
        %v2218 = vpop.f32.mrb[0].mxu0
        %v2219 = vadd.f32 0.0, %v2218
        %v2220 = vpop.f32.mrb[0].mxu0
        %v2221 = vadd.f32 0.0, %v2220
        %v2222 = vpop.f32.mrb[0].mxu0
        %v2223 = vadd.f32 0.0, %v2222
        %2224 = vmatprep.mubr.bf16.mxu0 0
        %2225 = vmatmul.mubr.bf16.gmra.mrb[0].mxu0 %v1613
        %v2226 = vpop.f32.mrb[0].mxu0
        %v2227 = vadd.f32 0.0, %v2226
        %v2228 = vpop.f32.mrb[0].mxu0
        %v2229 = vadd.f32 0.0, %v2228
        %v2230 = vpop.f32.mrb[0].mxu0
        %v2231 = vadd.f32 0.0, %v2230
        %v2232 = vpop.f32.mrb[0].mxu0
        %v2233 = vadd.f32 0.0, %v2232
        %2234 = vmatprep.mubr.bf16.mxu0 0
        %2235 = vmatmul.mubr.bf16.gmra.mrb[0].mxu0 %v1614
        %v2236 = vpop.f32.mrb[0].mxu0
        %v2237 = vadd.f32 0.0, %v2236
        %v2238 = vpop.f32.mrb[0].mxu0
        %v2239 = vadd.f32 0.0, %v2238
        %v2240 = vpop.f32.mrb[0].mxu0
        %v2241 = vadd.f32 0.0, %v2240
        %v2242 = vpop.f32.mrb[0].mxu0
        %v2243 = vadd.f32 0.0, %v2242
        %2244 = vmatprep.mubr.bf16.mxu0 0
        %2245 = vmatmul.mubr.bf16.gmra.mrb[0].mxu0 %v1615
        %v2246 = vpop.f32.mrb[0].mxu0
        %v2247 = vadd.f32 0.0, %v2246
        %v2248 = vpop.f32.mrb[0].mxu0
        %v2249 = vadd.f32 0.0, %v2248
        %v2250 = vpop.f32.mrb[0].mxu0
        %v2251 = vadd.f32 0.0, %v2250
        %v2252 = vpop.f32.mrb[0].mxu0
        %v2253 = vadd.f32 0.0, %v2252
        %2254 = vmatprep.mubr.bf16.mxu0 0
        %2255 = vmatmul.mubr.bf16.gmra.mrb[0].mxu0 %v1616
        %v2256 = vpop.f32.mrb[0].mxu0
        %v2257 = vadd.f32 0.0, %v2256
        %v2258 = vpop.f32.mrb[0].mxu0
        %v2259 = vadd.f32 0.0, %v2258
        %v2260 = vpop.f32.mrb[0].mxu0
        %v2261 = vadd.f32 0.0, %v2260
        %v2262 = vpop.f32.mrb[0].mxu0
        %v2263 = vadd.f32 0.0, %v2262
        %2264 = vmatprep.mubr.bf16.mxu0 0
        %2265 = vmatmul.mubr.bf16.gmra.mrb[0].mxu0 %v1617
        %v2266 = vpop.f32.mrb[0].mxu0
        %v2267 = vadd.f32 0.0, %v2266
        %v2268 = vpop.f32.mrb[0].mxu0
        %v2269 = vadd.f32 0.0, %v2268
        %v2270 = vpop.f32.mrb[0].mxu0
        %v2271 = vadd.f32 0.0, %v2270
        %v2272 = vpop.f32.mrb[0].mxu0
        %v2273 = vadd.f32 0.0, %v2272
        %2274 = vmatprep.mubr.bf16.mxu0 0
        %2275 = vmatmul.mubr.bf16.gmra.mrb[0].mxu0 %v1618
        %v2276 = vpop.f32.mrb[0].mxu0
        %v2277 = vadd.f32 0.0, %v2276
        %v2278 = vpop.f32.mrb[0].mxu0
        %v2279 = vadd.f32 0.0, %v2278
        %v2280 = vpop.f32.mrb[0].mxu0
        %v2281 = vadd.f32 0.0, %v2280
        %v2282 = vpop.f32.mrb[0].mxu0
        %v2283 = vadd.f32 0.0, %v2282
        %2284 = vmatprep.mubr.bf16.mxu0 0
        %2285 = vmatmul.mubr.bf16.gmra.mrb[0].mxu0 %v1619
        %v2286 = vpop.f32.mrb[0].mxu0
        %v2287 = vadd.f32 0.0, %v2286
        %v2288 = vpop.f32.mrb[0].mxu0
        %v2289 = vadd.f32 0.0, %v2288
        %v2290 = vpop.f32.mrb[0].mxu0
        %v2291 = vadd.f32 0.0, %v2290
        %v2292 = vpop.f32.mrb[0].mxu0
        %v2293 = vadd.f32 0.0, %v2292
        %2294 = vmatprep.mubr.bf16.mxu0 0
        %2295 = vmatmul.mubr.bf16.gmra.mrb[0].mxu0 %v1620
        %v2296 = vpop.f32.mrb[0].mxu0
        %v2297 = vadd.f32 0.0, %v2296
        %v2298 = vpop.f32.mrb[0].mxu0
        %v2299 = vadd.f32 0.0, %v2298
        %v2300 = vpop.f32.mrb[0].mxu0
        %v2301 = vadd.f32 0.0, %v2300
        %v2302 = vpop.f32.mrb[0].mxu0
        %v2303 = vadd.f32 0.0, %v2302
        %2304 = vmatprep.mubr.bf16.mxu0 0
        %2305 = vmatmul.mubr.bf16.gmra.mrb[0].mxu0 %v1621
        %v2306 = vpop.f32.mrb[0].mxu0
        %v2307 = vadd.f32 0.0, %v2306
        %v2308 = vpop.f32.mrb[0].mxu0
        %v2309 = vadd.f32 0.0, %v2308
        %v2310 = vpop.f32.mrb[0].mxu0
        %v2311 = vadd.f32 0.0, %v2310
        %v2312 = vpop.f32.mrb[0].mxu0
        %v2313 = vadd.f32 0.0, %v2312
        %2314 = vmatprep.mubr.bf16.mxu0 0
        %2315 = vmatmul.mubr.bf16.gmra.mrb[0].mxu0 %v1622
        %v2316 = vpop.f32.mrb[0].mxu0
        %v2317 = vadd.f32 0.0, %v2316
        %v2318 = vpop.f32.mrb[0].mxu0
        %v2319 = vadd.f32 0.0, %v2318
        %v2320 = vpop.f32.mrb[0].mxu0
        %v2321 = vadd.f32 0.0, %v2320
        %v2322 = vpop.f32.mrb[0].mxu0
        %v2323 = vadd.f32 0.0, %v2322
        %2324 = vmatprep.mubr.bf16.mxu0 0
        %2325 = vmatmul.mubr.bf16.gmra.mrb[0].mxu0 %v1623
        %v2326 = vpop.f32.mrb[0].mxu0
        %v2327 = vadd.f32 0.0, %v2326
        %v2328 = vpop.f32.mrb[0].mxu0
        %v2329 = vadd.f32 0.0, %v2328
        %v2330 = vpop.f32.mrb[0].mxu0
        %v2331 = vadd.f32 0.0, %v2330
        %v2332 = vpop.f32.mrb[0].mxu0
        %v2333 = vadd.f32 0.0, %v2332
        %2334 = vmatprep.mubr.bf16.mxu0 0
        %2335 = vmatmul.mubr.bf16.gmra.mrb[0].mxu0 %v1624
        %v2336 = vpop.f32.mrb[0].mxu0
        %v2337 = vadd.f32 0.0, %v2336
        %v2338 = vpop.f32.mrb[0].mxu0
        %v2339 = vadd.f32 0.0, %v2338
        %v2340 = vpop.f32.mrb[0].mxu0
        %v2341 = vadd.f32 0.0, %v2340
        %v2342 = vpop.f32.mrb[0].mxu0
        %v2343 = vadd.f32 0.0, %v2342
        %2344 = vmatprep.mubr.bf16.mxu0 0
        %2345 = vmatmul.mubr.bf16.gmra.mrb[0].mxu0 %v1625
        %v2346 = vpop.f32.mrb[0].mxu0
        %v2347 = vadd.f32 0.0, %v2346
        %v2348 = vpop.f32.mrb[0].mxu0
        %v2349 = vadd.f32 0.0, %v2348
        %v2350 = vpop.f32.mrb[0].mxu0
        %v2351 = vadd.f32 0.0, %v2350
        %v2352 = vpop.f32.mrb[0].mxu0
        %v2353 = vadd.f32 0.0, %v2352
        %2354 = vmatprep.mubr.bf16.mxu0 0
        %2355 = vmatmul.mubr.bf16.gmra.mrb[0].mxu0 %v1626
        %v2356 = vpop.f32.mrb[0].mxu0
        %v2357 = vadd.f32 0.0, %v2356
        %v2358 = vpop.f32.mrb[0].mxu0
        %v2359 = vadd.f32 0.0, %v2358
        %v2360 = vpop.f32.mrb[0].mxu0
        %v2361 = vadd.f32 0.0, %v2360
        %v2362 = vpop.f32.mrb[0].mxu0
        %v2363 = vadd.f32 0.0, %v2362
        %2364 = vdwg.mxu0
        %v2365 = vmul.f32 %v1694, 0.5
        %v2366 = vmul.f32 %v1696, 0.5
        %v2367 = vmul.f32 %v2047, 0.5
        %v2368 = vmul.f32 %v2049, 0.5
        %v2369 = vmul.f32 %v1698, 0.5
        %v2370 = vmul.f32 %v1700, 0.5
        %v2371 = vmul.f32 %v2051, 0.5
        %v2372 = vmul.f32 %v2053, 0.5
        %v2373 = vmul.f32 %v1704, 0.5
        %v2374 = vmul.f32 %v1706, 0.5
        %v2375 = vmul.f32 %v2057, 0.5
        %v2376 = vmul.f32 %v2059, 0.5
        %v2377 = vmul.f32 %v1708, 0.5
        %v2378 = vmul.f32 %v1710, 0.5
        %v2379 = vmul.f32 %v2061, 0.5
        %v2380 = vmul.f32 %v2063, 0.5
        %v2381 = vmul.f32 %v1714, 0.5
        %v2382 = vmul.f32 %v1716, 0.5
        %v2383 = vmul.f32 %v2067, 0.5
        %v2384 = vmul.f32 %v2069, 0.5
        %v2385 = vmul.f32 %v1718, 0.5
        %v2386 = vmul.f32 %v1720, 0.5
        %v2387 = vmul.f32 %v2071, 0.5
        %v2388 = vmul.f32 %v2073, 0.5
        %v2389 = vmul.f32 %v1724, 0.5
        %v2390 = vmul.f32 %v1726, 0.5
        %v2391 = vmul.f32 %v2077, 0.5
        %v2392 = vmul.f32 %v2079, 0.5
        %v2393 = vmul.f32 %v1728, 0.5
        %v2394 = vmul.f32 %v1730, 0.5
        %v2395 = vmul.f32 %v2081, 0.5
        %v2396 = vmul.f32 %v2083, 0.5
        %v2397 = vmul.f32 %v1734, 0.5
        %v2398 = vmul.f32 %v1736, 0.5
        %v2399 = vmul.f32 %v2087, 0.5
        %v2400 = vmul.f32 %v2089, 0.5
        %v2401 = vmul.f32 %v1738, 0.5
        %v2402 = vmul.f32 %v1740, 0.5
        %v2403 = vmul.f32 %v2091, 0.5
        %v2404 = vmul.f32 %v2093, 0.5
        %v2405 = vmul.f32 %v1744, 0.5
        %v2406 = vmul.f32 %v1746, 0.5
        %v2407 = vmul.f32 %v2097, 0.5
        %v2408 = vmul.f32 %v2099, 0.5
        %v2409 = vmul.f32 %v1748, 0.5
        %v2410 = vmul.f32 %v1750, 0.5
        %v2411 = vmul.f32 %v2101, 0.5
        %v2412 = vmul.f32 %v2103, 0.5
        %v2413 = vmul.f32 %v1754, 0.5
        %v2414 = vmul.f32 %v1756, 0.5
        %v2415 = vmul.f32 %v2107, 0.5
        %v2416 = vmul.f32 %v2109, 0.5
        %v2417 = vmul.f32 %v1758, 0.5
        %v2418 = vmul.f32 %v1760, 0.5
        %v2419 = vmul.f32 %v2111, 0.5
        %v2420 = vmul.f32 %v2113, 0.5
        %v2421 = vmul.f32 %v1764, 0.5
        %v2422 = vmul.f32 %v1766, 0.5
        %v2423 = vmul.f32 %v2117, 0.5
        %v2424 = vmul.f32 %v2119, 0.5
        %v2425 = vmul.f32 %v1768, 0.5
        %v2426 = vmul.f32 %v1770, 0.5
        %v2427 = vmul.f32 %v2121, 0.5
        %v2428 = vmul.f32 %v2123, 0.5
        %v2429 = vmul.f32 %v1774, 0.5
        %v2430 = vmul.f32 %v1776, 0.5
        %v2431 = vmul.f32 %v2127, 0.5
        %v2432 = vmul.f32 %v2129, 0.5
        %v2433 = vmul.f32 %v1778, 0.5
        %v2434 = vmul.f32 %v1780, 0.5
        %v2435 = vmul.f32 %v2131, 0.5
        %v2436 = vmul.f32 %v2133, 0.5
        %v2437 = vmul.f32 %v1784, 0.5
        %v2438 = vmul.f32 %v1786, 0.5
        %v2439 = vmul.f32 %v2137, 0.5
        %v2440 = vmul.f32 %v2139, 0.5
        %v2441 = vmul.f32 %v1788, 0.5
        %v2442 = vmul.f32 %v1790, 0.5
        %v2443 = vmul.f32 %v2141, 0.5
        %v2444 = vmul.f32 %v2143, 0.5
        %v2445 = vmul.f32 %v1794, 0.5
        %v2446 = vmul.f32 %v1796, 0.5
        %v2447 = vmul.f32 %v2147, 0.5
        %v2448 = vmul.f32 %v2149, 0.5
        %v2449 = vmul.f32 %v1798, 0.5
        %v2450 = vmul.f32 %v1800, 0.5
        %v2451 = vmul.f32 %v2151, 0.5
        %v2452 = vmul.f32 %v2153, 0.5
        %v2453 = vmul.f32 %v1804, 0.5
        %v2454 = vmul.f32 %v1806, 0.5
        %v2455 = vmul.f32 %v2157, 0.5
        %v2456 = vmul.f32 %v2159, 0.5
        %v2457 = vmul.f32 %v1808, 0.5
        %v2458 = vmul.f32 %v1810, 0.5
        %v2459 = vmul.f32 %v2161, 0.5
        %v2460 = vmul.f32 %v2163, 0.5
        %v2461 = vmul.f32 %v1814, 0.5
        %v2462 = vmul.f32 %v1816, 0.5
        %v2463 = vmul.f32 %v2167, 0.5
        %v2464 = vmul.f32 %v2169, 0.5
        %v2465 = vmul.f32 %v1818, 0.5
        %v2466 = vmul.f32 %v1820, 0.5
        %v2467 = vmul.f32 %v2171, 0.5
        %v2468 = vmul.f32 %v2173, 0.5
        %v2469 = vmul.f32 %v1824, 0.5
        %v2470 = vmul.f32 %v1826, 0.5
        %v2471 = vmul.f32 %v2177, 0.5
        %v2472 = vmul.f32 %v2179, 0.5
        %v2473 = vmul.f32 %v1828, 0.5
        %v2474 = vmul.f32 %v1830, 0.5
        %v2475 = vmul.f32 %v2181, 0.5
        %v2476 = vmul.f32 %v2183, 0.5
        %v2477 = vmul.f32 %v1834, 0.5
        %v2478 = vmul.f32 %v1836, 0.5
        %v2479 = vmul.f32 %v2187, 0.5
        %v2480 = vmul.f32 %v2189, 0.5
        %v2481 = vmul.f32 %v1838, 0.5
        %v2482 = vmul.f32 %v1840, 0.5
        %v2483 = vmul.f32 %v2191, 0.5
        %v2484 = vmul.f32 %v2193, 0.5
        %v2485 = vmul.f32 %v1844, 0.5
        %v2486 = vmul.f32 %v1846, 0.5
        %v2487 = vmul.f32 %v2197, 0.5
        %v2488 = vmul.f32 %v2199, 0.5
        %v2489 = vmul.f32 %v1848, 0.5
        %v2490 = vmul.f32 %v1850, 0.5
        %v2491 = vmul.f32 %v2201, 0.5
        %v2492 = vmul.f32 %v2203, 0.5
        %v2493 = vmul.f32 %v1854, 0.5
        %v2494 = vmul.f32 %v1856, 0.5
        %v2495 = vmul.f32 %v2207, 0.5
        %v2496 = vmul.f32 %v2209, 0.5
        %v2497 = vmul.f32 %v1858, 0.5
        %v2498 = vmul.f32 %v1860, 0.5
        %v2499 = vmul.f32 %v2211, 0.5
        %v2500 = vmul.f32 %v2213, 0.5
        %v2501 = vmul.f32 %v1864, 0.5
        %v2502 = vmul.f32 %v1866, 0.5
        %v2503 = vmul.f32 %v2217, 0.5
        %v2504 = vmul.f32 %v2219, 0.5
        %v2505 = vmul.f32 %v1868, 0.5
        %v2506 = vmul.f32 %v1870, 0.5
        %v2507 = vmul.f32 %v2221, 0.5
        %v2508 = vmul.f32 %v2223, 0.5
        %v2509 = vmul.f32 %v1874, 0.5
        %v2510 = vmul.f32 %v1876, 0.5
        %v2511 = vmul.f32 %v2227, 0.5
        %v2512 = vmul.f32 %v2229, 0.5
        %v2513 = vmul.f32 %v1878, 0.5
        %v2514 = vmul.f32 %v1880, 0.5
        %v2515 = vmul.f32 %v2231, 0.5
        %v2516 = vmul.f32 %v2233, 0.5
        %v2517 = vmul.f32 %v1884, 0.5
        %v2518 = vmul.f32 %v1886, 0.5
        %v2519 = vmul.f32 %v2237, 0.5
        %v2520 = vmul.f32 %v2239, 0.5
        %v2521 = vmul.f32 %v1888, 0.5
        %v2522 = vmul.f32 %v1890, 0.5
        %v2523 = vmul.f32 %v2241, 0.5
        %v2524 = vmul.f32 %v2243, 0.5
        %v2525 = vmul.f32 %v1894, 0.5
        %v2526 = vmul.f32 %v1896, 0.5
        %v2527 = vmul.f32 %v2247, 0.5
        %v2528 = vmul.f32 %v2249, 0.5
        %v2529 = vmul.f32 %v1898, 0.5
        %v2530 = vmul.f32 %v1900, 0.5
        %v2531 = vmul.f32 %v2251, 0.5
        %v2532 = vmul.f32 %v2253, 0.5
        %v2533 = vmul.f32 %v1904, 0.5
        %v2534 = vmul.f32 %v1906, 0.5
        %v2535 = vmul.f32 %v2257, 0.5
        %v2536 = vmul.f32 %v2259, 0.5
        %v2537 = vmul.f32 %v1908, 0.5
        %v2538 = vmul.f32 %v1910, 0.5
        %v2539 = vmul.f32 %v2261, 0.5
        %v2540 = vmul.f32 %v2263, 0.5
        %v2541 = vmul.f32 %v1914, 0.5
        %v2542 = vmul.f32 %v1916, 0.5
        %v2543 = vmul.f32 %v2267, 0.5
        %v2544 = vmul.f32 %v2269, 0.5
        %v2545 = vmul.f32 %v1918, 0.5
        %v2546 = vmul.f32 %v1920, 0.5
        %v2547 = vmul.f32 %v2271, 0.5
        %v2548 = vmul.f32 %v2273, 0.5
        %v2549 = vmul.f32 %v1924, 0.5
        %v2550 = vmul.f32 %v1926, 0.5
        %v2551 = vmul.f32 %v2277, 0.5
        %v2552 = vmul.f32 %v2279, 0.5
        %v2553 = vmul.f32 %v1928, 0.5
        %v2554 = vmul.f32 %v1930, 0.5
        %v2555 = vmul.f32 %v2281, 0.5
        %v2556 = vmul.f32 %v2283, 0.5
        %v2557 = vmul.f32 %v1934, 0.5
        %v2558 = vmul.f32 %v1936, 0.5
        %v2559 = vmul.f32 %v2287, 0.5
        %v2560 = vmul.f32 %v2289, 0.5
        %v2561 = vmul.f32 %v1938, 0.5
        %v2562 = vmul.f32 %v1940, 0.5
        %v2563 = vmul.f32 %v2291, 0.5
        %v2564 = vmul.f32 %v2293, 0.5
        %v2565 = vmul.f32 %v1944, 0.5
        %v2566 = vmul.f32 %v1946, 0.5
        %v2567 = vmul.f32 %v2297, 0.5
        %v2568 = vmul.f32 %v2299, 0.5
        %v2569 = vmul.f32 %v1948, 0.5
        %v2570 = vmul.f32 %v1950, 0.5
        %v2571 = vmul.f32 %v2301, 0.5
        %v2572 = vmul.f32 %v2303, 0.5
        %v2573 = vmul.f32 %v1954, 0.5
        %v2574 = vmul.f32 %v1956, 0.5
        %v2575 = vmul.f32 %v2307, 0.5
        %v2576 = vmul.f32 %v2309, 0.5
        %v2577 = vmul.f32 %v1958, 0.5
        %v2578 = vmul.f32 %v1960, 0.5
        %v2579 = vmul.f32 %v2311, 0.5
        %v2580 = vmul.f32 %v2313, 0.5
        %v2581 = vmul.f32 %v1964, 0.5
        %v2582 = vmul.f32 %v1966, 0.5
        %v2583 = vmul.f32 %v2317, 0.5
        %v2584 = vmul.f32 %v2319, 0.5
        %v2585 = vmul.f32 %v1968, 0.5
        %v2586 = vmul.f32 %v1970, 0.5
        %v2587 = vmul.f32 %v2321, 0.5
        %v2588 = vmul.f32 %v2323, 0.5
        %v2589 = vmul.f32 %v1974, 0.5
        %v2590 = vmul.f32 %v1976, 0.5
        %v2591 = vmul.f32 %v2327, 0.5
        %v2592 = vmul.f32 %v2329, 0.5
        %v2593 = vmul.f32 %v1978, 0.5
        %v2594 = vmul.f32 %v1980, 0.5
        %v2595 = vmul.f32 %v2331, 0.5
        %v2596 = vmul.f32 %v2333, 0.5
        %v2597 = vmul.f32 %v1984, 0.5
        %v2598 = vmul.f32 %v1986, 0.5
        %v2599 = vmul.f32 %v2337, 0.5
        %v2600 = vmul.f32 %v2339, 0.5
        %v2601 = vmul.f32 %v1988, 0.5
        %v2602 = vmul.f32 %v1990, 0.5
        %v2603 = vmul.f32 %v2341, 0.5
        %v2604 = vmul.f32 %v2343, 0.5
        %v2605 = vmul.f32 %v1994, 0.5
        %v2606 = vmul.f32 %v1996, 0.5
        %v2607 = vmul.f32 %v2347, 0.5
        %v2608 = vmul.f32 %v2349, 0.5
        %v2609 = vmul.f32 %v1998, 0.5
        %v2610 = vmul.f32 %v2000, 0.5
        %v2611 = vmul.f32 %v2351, 0.5
        %v2612 = vmul.f32 %v2353, 0.5
        %v2613 = vmul.f32 %v2004, 0.5
        %v2614 = vmul.f32 %v2006, 0.5
        %v2615 = vmul.f32 %v2357, 0.5
        %v2616 = vmul.f32 %v2359, 0.5
        %v2617 = vmul.f32 %v2008, 0.5
        %v2618 = vmul.f32 %v2010, 0.5
        %v2619 = vmul.f32 %v2361, 0.5
        %v2620 = vmul.f32 %v2363, 0.5
        %v2621 = vtanh.pop %v2365
        %v2622 = vtanh.pop %v2366
        %v2623 = vtanh.pop %v2367
        %v2624 = vtanh.pop %v2368
        %v2625 = vtanh.pop %v2369
        %v2626 = vtanh.pop %v2370
        %v2627 = vtanh.pop %v2371
        %v2628 = vtanh.pop %v2372
        %v2629 = vtanh.pop %v2373
        %v2630 = vtanh.pop %v2374
        %v2631 = vtanh.pop %v2375
        %v2632 = vtanh.pop %v2376
        %v2633 = vtanh.pop %v2377
        %v2634 = vtanh.pop %v2378
        %v2635 = vtanh.pop %v2379
        %v2636 = vtanh.pop %v2380
        %v2637 = vtanh.pop %v2381
        %v2638 = vtanh.pop %v2382
        %v2639 = vtanh.pop %v2383
        %v2640 = vtanh.pop %v2384
        %v2641 = vtanh.pop %v2385
        %v2642 = vtanh.pop %v2386
        %v2643 = vtanh.pop %v2387
        %v2644 = vtanh.pop %v2388
        %v2645 = vtanh.pop %v2389
        %v2646 = vtanh.pop %v2390
        %v2647 = vtanh.pop %v2391
        %v2648 = vtanh.pop %v2392
        %v2649 = vtanh.pop %v2393
        %v2650 = vtanh.pop %v2394
        %v2651 = vtanh.pop %v2395
        %v2652 = vtanh.pop %v2396
        %v2653 = vtanh.pop %v2397
        %v2654 = vtanh.pop %v2398
        %v2655 = vtanh.pop %v2399
        %v2656 = vtanh.pop %v2400
        %v2657 = vtanh.pop %v2401
        %v2658 = vtanh.pop %v2402
        %v2659 = vtanh.pop %v2403
        %v2660 = vtanh.pop %v2404
        %v2661 = vtanh.pop %v2405
        %v2662 = vtanh.pop %v2406
        %v2663 = vtanh.pop %v2407
        %v2664 = vtanh.pop %v2408
        %v2665 = vtanh.pop %v2409
        %v2666 = vtanh.pop %v2410
        %v2667 = vtanh.pop %v2411
        %v2668 = vtanh.pop %v2412
        %v2669 = vtanh.pop %v2413
        %v2670 = vtanh.pop %v2414
        %v2671 = vtanh.pop %v2415
        %v2672 = vtanh.pop %v2416
        %v2673 = vtanh.pop %v2417
        %v2674 = vtanh.pop %v2418
        %v2675 = vtanh.pop %v2419
        %v2676 = vtanh.pop %v2420
        %v2677 = vtanh.pop %v2421
        %v2678 = vtanh.pop %v2422
        %v2679 = vtanh.pop %v2423
        %v2680 = vtanh.pop %v2424
        %v2681 = vtanh.pop %v2425
        %v2682 = vtanh.pop %v2426
        %v2683 = vtanh.pop %v2427
        %v2684 = vtanh.pop %v2428
        %v2685 = vtanh.pop %v2429
        %v2686 = vtanh.pop %v2430
        %v2687 = vtanh.pop %v2431
        %v2688 = vtanh.pop %v2432
        %v2689 = vtanh.pop %v2433
        %v2690 = vtanh.pop %v2434
        %v2691 = vtanh.pop %v2435
        %v2692 = vtanh.pop %v2436
        %v2693 = vtanh.pop %v2437
        %v2694 = vtanh.pop %v2438
        %v2695 = vtanh.pop %v2439
        %v2696 = vtanh.pop %v2440
        %v2697 = vtanh.pop %v2441
        %v2698 = vtanh.pop %v2442
        %v2699 = vtanh.pop %v2443
        %v2700 = vtanh.pop %v2444
        %v2701 = vtanh.pop %v2445
        %v2702 = vtanh.pop %v2446
        %v2703 = vtanh.pop %v2447
        %v2704 = vtanh.pop %v2448
        %v2705 = vtanh.pop %v2449
        %v2706 = vtanh.pop %v2450
        %v2707 = vtanh.pop %v2451
        %v2708 = vtanh.pop %v2452
        %v2709 = vtanh.pop %v2453
        %v2710 = vtanh.pop %v2454
        %v2711 = vtanh.pop %v2455
        %v2712 = vtanh.pop %v2456
        %v2713 = vtanh.pop %v2457
        %v2714 = vtanh.pop %v2458
        %v2715 = vtanh.pop %v2459
        %v2716 = vtanh.pop %v2460
        %v2717 = vtanh.pop %v2461
        %v2718 = vtanh.pop %v2462
        %v2719 = vtanh.pop %v2463
        %v2720 = vtanh.pop %v2464
        %v2721 = vtanh.pop %v2465
        %v2722 = vtanh.pop %v2466
        %v2723 = vtanh.pop %v2467
        %v2724 = vtanh.pop %v2468
        %v2725 = vtanh.pop %v2469
        %v2726 = vtanh.pop %v2470
        %v2727 = vtanh.pop %v2471
        %v2728 = vtanh.pop %v2472
        %v2729 = vtanh.pop %v2473
        %v2730 = vtanh.pop %v2474
        %v2731 = vtanh.pop %v2475
        %v2732 = vtanh.pop %v2476
        %v2733 = vtanh.pop %v2477
        %v2734 = vtanh.pop %v2478
        %v2735 = vtanh.pop %v2479
        %v2736 = vtanh.pop %v2480
        %v2737 = vtanh.pop %v2481
        %v2738 = vtanh.pop %v2482
        %v2739 = vtanh.pop %v2483
        %v2740 = vtanh.pop %v2484
        %v2741 = vtanh.pop %v2485
        %v2742 = vtanh.pop %v2486
        %v2743 = vtanh.pop %v2487
        %v2744 = vtanh.pop %v2488
        %v2745 = vtanh.pop %v2489
        %v2746 = vtanh.pop %v2490
        %v2747 = vtanh.pop %v2491
        %v2748 = vtanh.pop %v2492
        %v2749 = vtanh.pop %v2493
        %v2750 = vtanh.pop %v2494
        %v2751 = vtanh.pop %v2495
        %v2752 = vtanh.pop %v2496
        %v2753 = vtanh.pop %v2497
        %v2754 = vtanh.pop %v2498
        %v2755 = vtanh.pop %v2499
        %v2756 = vtanh.pop %v2500
        %v2757 = vtanh.pop %v2501
        %v2758 = vtanh.pop %v2502
        %v2759 = vtanh.pop %v2503
        %v2760 = vtanh.pop %v2504
        %v2761 = vtanh.pop %v2505
        %v2762 = vtanh.pop %v2506
        %v2763 = vtanh.pop %v2507
        %v2764 = vtanh.pop %v2508
        %v2765 = vtanh.pop %v2509
        %v2766 = vtanh.pop %v2510
        %v2767 = vtanh.pop %v2511
        %v2768 = vtanh.pop %v2512
        %v2769 = vtanh.pop %v2513
        %v2770 = vtanh.pop %v2514
        %v2771 = vtanh.pop %v2515
        %v2772 = vtanh.pop %v2516
        %v2773 = vtanh.pop %v2517
        %v2774 = vtanh.pop %v2518
        %v2775 = vtanh.pop %v2519
        %v2776 = vtanh.pop %v2520
        %v2777 = vtanh.pop %v2521
        %v2778 = vtanh.pop %v2522
        %v2779 = vtanh.pop %v2523
        %v2780 = vtanh.pop %v2524
        %v2781 = vtanh.pop %v2525
        %v2782 = vtanh.pop %v2526
        %v2783 = vtanh.pop %v2527
        %v2784 = vtanh.pop %v2528
        %v2785 = vtanh.pop %v2529
        %v2786 = vtanh.pop %v2530
        %v2787 = vtanh.pop %v2531
        %v2788 = vtanh.pop %v2532
        %v2789 = vtanh.pop %v2533
        %v2790 = vtanh.pop %v2534
        %v2791 = vtanh.pop %v2535
        %v2792 = vtanh.pop %v2536
        %v2793 = vtanh.pop %v2537
        %v2794 = vtanh.pop %v2538
        %v2795 = vtanh.pop %v2539
        %v2796 = vtanh.pop %v2540
        %v2797 = vtanh.pop %v2541
        %v2798 = vtanh.pop %v2542
        %v2799 = vtanh.pop %v2543
        %v2800 = vtanh.pop %v2544
        %v2801 = vtanh.pop %v2545
        %v2802 = vtanh.pop %v2546
        %v2803 = vtanh.pop %v2547
        %v2804 = vtanh.pop %v2548
        %v2805 = vtanh.pop %v2549
        %v2806 = vtanh.pop %v2550
        %v2807 = vtanh.pop %v2551
        %v2808 = vtanh.pop %v2552
        %v2809 = vtanh.pop %v2553
        %v2810 = vtanh.pop %v2554
        %v2811 = vtanh.pop %v2555
        %v2812 = vtanh.pop %v2556
        %v2813 = vtanh.pop %v2557
        %v2814 = vtanh.pop %v2558
        %v2815 = vtanh.pop %v2559
        %v2816 = vtanh.pop %v2560
        %v2817 = vtanh.pop %v2561
        %v2818 = vtanh.pop %v2562
        %v2819 = vtanh.pop %v2563
        %v2820 = vtanh.pop %v2564
        %v2821 = vtanh.pop %v2565
        %v2822 = vtanh.pop %v2566
        %v2823 = vtanh.pop %v2567
        %v2824 = vtanh.pop %v2568
        %v2825 = vtanh.pop %v2569
        %v2826 = vtanh.pop %v2570
        %v2827 = vtanh.pop %v2571
        %v2828 = vtanh.pop %v2572
        %v2829 = vtanh.pop %v2573
        %v2830 = vtanh.pop %v2574
        %v2831 = vtanh.pop %v2575
        %v2832 = vtanh.pop %v2576
        %v2833 = vtanh.pop %v2577
        %v2834 = vtanh.pop %v2578
        %v2835 = vtanh.pop %v2579
        %v2836 = vtanh.pop %v2580
        %v2837 = vtanh.pop %v2581
        %v2838 = vtanh.pop %v2582
        %v2839 = vtanh.pop %v2583
        %v2840 = vtanh.pop %v2584
        %v2841 = vtanh.pop %v2585
        %v2842 = vtanh.pop %v2586
        %v2843 = vtanh.pop %v2587
        %v2844 = vtanh.pop %v2588
        %v2845 = vtanh.pop %v2589
        %v2846 = vtanh.pop %v2590
        %v2847 = vtanh.pop %v2591
        %v2848 = vtanh.pop %v2592
        %v2849 = vtanh.pop %v2593
        %v2850 = vtanh.pop %v2594
        %v2851 = vtanh.pop %v2595
        %v2852 = vtanh.pop %v2596
        %v2853 = vtanh.pop %v2597
        %v2854 = vtanh.pop %v2598
        %v2855 = vtanh.pop %v2599
        %v2856 = vtanh.pop %v2600
        %v2857 = vtanh.pop %v2601
        %v2858 = vtanh.pop %v2602
        %v2859 = vtanh.pop %v2603
        %v2860 = vtanh.pop %v2604
        %v2861 = vtanh.pop %v2605
        %v2862 = vtanh.pop %v2606
        %v2863 = vtanh.pop %v2607
        %v2864 = vtanh.pop %v2608
        %v2865 = vtanh.pop %v2609
        %v2866 = vtanh.pop %v2610
        %v2867 = vtanh.pop %v2611
        %v2868 = vtanh.pop %v2612
        %v2869 = vtanh.pop %v2613
        %v2870 = vtanh.pop %v2614
        %v2871 = vtanh.pop %v2615
        %v2872 = vtanh.pop %v2616
        %v2873 = vtanh.pop %v2617
        %v2874 = vtanh.pop %v2618
        %v2875 = vtanh.pop %v2619
        %v2876 = vtanh.pop %v2620
        %v2877 = vmul.f32 %v2621, 0.5
        %v2878 = vmul.f32 %v2622, 0.5
        %v2879 = vmul.f32 %v2623, 0.5
        %v2880 = vmul.f32 %v2624, 0.5
        %v2881 = vmul.f32 %v2625, 0.5
        %v2882 = vmul.f32 %v2626, 0.5
        %v2883 = vmul.f32 %v2627, 0.5
        %v2884 = vmul.f32 %v2628, 0.5
        %v2885 = vmul.f32 %v2629, 0.5
        %v2886 = vmul.f32 %v2630, 0.5
        %v2887 = vmul.f32 %v2631, 0.5
        %v2888 = vmul.f32 %v2632, 0.5
        %v2889 = vmul.f32 %v2633, 0.5
        %v2890 = vmul.f32 %v2634, 0.5
        %v2891 = vmul.f32 %v2635, 0.5
        %v2892 = vmul.f32 %v2636, 0.5
        %v2893 = vmul.f32 %v2637, 0.5
        %v2894 = vmul.f32 %v2638, 0.5
        %v2895 = vmul.f32 %v2639, 0.5
        %v2896 = vmul.f32 %v2640, 0.5
        %v2897 = vmul.f32 %v2641, 0.5
        %v2898 = vmul.f32 %v2642, 0.5
        %v2899 = vmul.f32 %v2643, 0.5
        %v2900 = vmul.f32 %v2644, 0.5
        %v2901 = vmul.f32 %v2645, 0.5
        %v2902 = vmul.f32 %v2646, 0.5
        %v2903 = vmul.f32 %v2647, 0.5
        %v2904 = vmul.f32 %v2648, 0.5
        %v2905 = vmul.f32 %v2649, 0.5
        %v2906 = vmul.f32 %v2650, 0.5
        %v2907 = vmul.f32 %v2651, 0.5
        %v2908 = vmul.f32 %v2652, 0.5
        %v2909 = vmul.f32 %v2653, 0.5
        %v2910 = vmul.f32 %v2654, 0.5
        %v2911 = vmul.f32 %v2655, 0.5
        %v2912 = vmul.f32 %v2656, 0.5
        %v2913 = vmul.f32 %v2657, 0.5
        %v2914 = vmul.f32 %v2658, 0.5
        %v2915 = vmul.f32 %v2659, 0.5
        %v2916 = vmul.f32 %v2660, 0.5
        %v2917 = vmul.f32 %v2661, 0.5
        %v2918 = vmul.f32 %v2662, 0.5
        %v2919 = vmul.f32 %v2663, 0.5
        %v2920 = vmul.f32 %v2664, 0.5
        %v2921 = vmul.f32 %v2665, 0.5
        %v2922 = vmul.f32 %v2666, 0.5
        %v2923 = vmul.f32 %v2667, 0.5
        %v2924 = vmul.f32 %v2668, 0.5
        %v2925 = vmul.f32 %v2669, 0.5
        %v2926 = vmul.f32 %v2670, 0.5
        %v2927 = vmul.f32 %v2671, 0.5
        %v2928 = vmul.f32 %v2672, 0.5
        %v2929 = vmul.f32 %v2673, 0.5
        %v2930 = vmul.f32 %v2674, 0.5
        %v2931 = vmul.f32 %v2675, 0.5
        %v2932 = vmul.f32 %v2676, 0.5
        %v2933 = vmul.f32 %v2677, 0.5
        %v2934 = vmul.f32 %v2678, 0.5
        %v2935 = vmul.f32 %v2679, 0.5
        %v2936 = vmul.f32 %v2680, 0.5
        %v2937 = vmul.f32 %v2681, 0.5
        %v2938 = vmul.f32 %v2682, 0.5
        %v2939 = vmul.f32 %v2683, 0.5
        %v2940 = vmul.f32 %v2684, 0.5
        %v2941 = vmul.f32 %v2685, 0.5
        %v2942 = vmul.f32 %v2686, 0.5
        %v2943 = vmul.f32 %v2687, 0.5
        %v2944 = vmul.f32 %v2688, 0.5
        %v2945 = vmul.f32 %v2689, 0.5
        %v2946 = vmul.f32 %v2690, 0.5
        %v2947 = vmul.f32 %v2691, 0.5
        %v2948 = vmul.f32 %v2692, 0.5
        %v2949 = vmul.f32 %v2693, 0.5
        %v2950 = vmul.f32 %v2694, 0.5
        %v2951 = vmul.f32 %v2695, 0.5
        %v2952 = vmul.f32 %v2696, 0.5
        %v2953 = vmul.f32 %v2697, 0.5
        %v2954 = vmul.f32 %v2698, 0.5
        %v2955 = vmul.f32 %v2699, 0.5
        %v2956 = vmul.f32 %v2700, 0.5
        %v2957 = vmul.f32 %v2701, 0.5
        %v2958 = vmul.f32 %v2702, 0.5
        %v2959 = vmul.f32 %v2703, 0.5
        %v2960 = vmul.f32 %v2704, 0.5
        %v2961 = vmul.f32 %v2705, 0.5
        %v2962 = vmul.f32 %v2706, 0.5
        %v2963 = vmul.f32 %v2707, 0.5
        %v2964 = vmul.f32 %v2708, 0.5
        %v2965 = vmul.f32 %v2709, 0.5
        %v2966 = vmul.f32 %v2710, 0.5
        %v2967 = vmul.f32 %v2711, 0.5
        %v2968 = vmul.f32 %v2712, 0.5
        %v2969 = vmul.f32 %v2713, 0.5
        %v2970 = vmul.f32 %v2714, 0.5
        %v2971 = vmul.f32 %v2715, 0.5
        %v2972 = vmul.f32 %v2716, 0.5
        %v2973 = vmul.f32 %v2717, 0.5
        %v2974 = vmul.f32 %v2718, 0.5
        %v2975 = vmul.f32 %v2719, 0.5
        %v2976 = vmul.f32 %v2720, 0.5
        %v2977 = vmul.f32 %v2721, 0.5
        %v2978 = vmul.f32 %v2722, 0.5
        %v2979 = vmul.f32 %v2723, 0.5
        %v2980 = vmul.f32 %v2724, 0.5
        %v2981 = vmul.f32 %v2725, 0.5
        %v2982 = vmul.f32 %v2726, 0.5
        %v2983 = vmul.f32 %v2727, 0.5
        %v2984 = vmul.f32 %v2728, 0.5
        %v2985 = vmul.f32 %v2729, 0.5
        %v2986 = vmul.f32 %v2730, 0.5
        %v2987 = vmul.f32 %v2731, 0.5
        %v2988 = vmul.f32 %v2732, 0.5
        %v2989 = vmul.f32 %v2733, 0.5
        %v2990 = vmul.f32 %v2734, 0.5
        %v2991 = vmul.f32 %v2735, 0.5
        %v2992 = vmul.f32 %v2736, 0.5
        %v2993 = vmul.f32 %v2737, 0.5
        %v2994 = vmul.f32 %v2738, 0.5
        %v2995 = vmul.f32 %v2739, 0.5
        %v2996 = vmul.f32 %v2740, 0.5
        %v2997 = vmul.f32 %v2741, 0.5
        %v2998 = vmul.f32 %v2742, 0.5
        %v2999 = vmul.f32 %v2743, 0.5
        %v3000 = vmul.f32 %v2744, 0.5
        %v3001 = vmul.f32 %v2745, 0.5
        %v3002 = vmul.f32 %v2746, 0.5
        %v3003 = vmul.f32 %v2747, 0.5
        %v3004 = vmul.f32 %v2748, 0.5
        %v3005 = vmul.f32 %v2749, 0.5
        %v3006 = vmul.f32 %v2750, 0.5
        %v3007 = vmul.f32 %v2751, 0.5
        %v3008 = vmul.f32 %v2752, 0.5
        %v3009 = vmul.f32 %v2753, 0.5
        %v3010 = vmul.f32 %v2754, 0.5
        %v3011 = vmul.f32 %v2755, 0.5
        %v3012 = vmul.f32 %v2756, 0.5
        %v3013 = vmul.f32 %v2757, 0.5
        %v3014 = vmul.f32 %v2758, 0.5
        %v3015 = vmul.f32 %v2759, 0.5
        %v3016 = vmul.f32 %v2760, 0.5
        %v3017 = vmul.f32 %v2761, 0.5
        %v3018 = vmul.f32 %v2762, 0.5
        %v3019 = vmul.f32 %v2763, 0.5
        %v3020 = vmul.f32 %v2764, 0.5
        %v3021 = vmul.f32 %v2765, 0.5
        %v3022 = vmul.f32 %v2766, 0.5
        %v3023 = vmul.f32 %v2767, 0.5
        %v3024 = vmul.f32 %v2768, 0.5
        %v3025 = vmul.f32 %v2769, 0.5
        %v3026 = vmul.f32 %v2770, 0.5
        %v3027 = vmul.f32 %v2771, 0.5
        %v3028 = vmul.f32 %v2772, 0.5
        %v3029 = vmul.f32 %v2773, 0.5
        %v3030 = vmul.f32 %v2774, 0.5
        %v3031 = vmul.f32 %v2775, 0.5
        %v3032 = vmul.f32 %v2776, 0.5
        %v3033 = vmul.f32 %v2777, 0.5
        %v3034 = vmul.f32 %v2778, 0.5
        %v3035 = vmul.f32 %v2779, 0.5
        %v3036 = vmul.f32 %v2780, 0.5
        %v3037 = vmul.f32 %v2781, 0.5
        %v3038 = vmul.f32 %v2782, 0.5
        %v3039 = vmul.f32 %v2783, 0.5
        %v3040 = vmul.f32 %v2784, 0.5
        %v3041 = vmul.f32 %v2785, 0.5
        %v3042 = vmul.f32 %v2786, 0.5
        %v3043 = vmul.f32 %v2787, 0.5
        %v3044 = vmul.f32 %v2788, 0.5
        %v3045 = vmul.f32 %v2789, 0.5
        %v3046 = vmul.f32 %v2790, 0.5
        %v3047 = vmul.f32 %v2791, 0.5
        %v3048 = vmul.f32 %v2792, 0.5
        %v3049 = vmul.f32 %v2793, 0.5
        %v3050 = vmul.f32 %v2794, 0.5
        %v3051 = vmul.f32 %v2795, 0.5
        %v3052 = vmul.f32 %v2796, 0.5
        %v3053 = vmul.f32 %v2797, 0.5
        %v3054 = vmul.f32 %v2798, 0.5
        %v3055 = vmul.f32 %v2799, 0.5
        %v3056 = vmul.f32 %v2800, 0.5
        %v3057 = vmul.f32 %v2801, 0.5
        %v3058 = vmul.f32 %v2802, 0.5
        %v3059 = vmul.f32 %v2803, 0.5
        %v3060 = vmul.f32 %v2804, 0.5
        %v3061 = vmul.f32 %v2805, 0.5
        %v3062 = vmul.f32 %v2806, 0.5
        %v3063 = vmul.f32 %v2807, 0.5
        %v3064 = vmul.f32 %v2808, 0.5
        %v3065 = vmul.f32 %v2809, 0.5
        %v3066 = vmul.f32 %v2810, 0.5
        %v3067 = vmul.f32 %v2811, 0.5
        %v3068 = vmul.f32 %v2812, 0.5
        %v3069 = vmul.f32 %v2813, 0.5
        %v3070 = vmul.f32 %v2814, 0.5
        %v3071 = vmul.f32 %v2815, 0.5
        %v3072 = vmul.f32 %v2816, 0.5
        %v3073 = vmul.f32 %v2817, 0.5
        %v3074 = vmul.f32 %v2818, 0.5
        %v3075 = vmul.f32 %v2819, 0.5
        %v3076 = vmul.f32 %v2820, 0.5
        %v3077 = vmul.f32 %v2821, 0.5
        %v3078 = vmul.f32 %v2822, 0.5
        %v3079 = vmul.f32 %v2823, 0.5
        %v3080 = vmul.f32 %v2824, 0.5
        %v3081 = vmul.f32 %v2825, 0.5
        %v3082 = vmul.f32 %v2826, 0.5
        %v3083 = vmul.f32 %v2827, 0.5
        %v3084 = vmul.f32 %v2828, 0.5
        %v3085 = vmul.f32 %v2829, 0.5
        %v3086 = vmul.f32 %v2830, 0.5
        %v3087 = vmul.f32 %v2831, 0.5
        %v3088 = vmul.f32 %v2832, 0.5
        %v3089 = vmul.f32 %v2833, 0.5
        %v3090 = vmul.f32 %v2834, 0.5
        %v3091 = vmul.f32 %v2835, 0.5
        %v3092 = vmul.f32 %v2836, 0.5
        %v3093 = vmul.f32 %v2837, 0.5
        %v3094 = vmul.f32 %v2838, 0.5
        %v3095 = vmul.f32 %v2839, 0.5
        %v3096 = vmul.f32 %v2840, 0.5
        %v3097 = vmul.f32 %v2841, 0.5
        %v3098 = vmul.f32 %v2842, 0.5
        %v3099 = vmul.f32 %v2843, 0.5
        %v3100 = vmul.f32 %v2844, 0.5
        %v3101 = vmul.f32 %v2845, 0.5
        %v3102 = vmul.f32 %v2846, 0.5
        %v3103 = vmul.f32 %v2847, 0.5
        %v3104 = vmul.f32 %v2848, 0.5
        %v3105 = vmul.f32 %v2849, 0.5
        %v3106 = vmul.f32 %v2850, 0.5
        %v3107 = vmul.f32 %v2851, 0.5
        %v3108 = vmul.f32 %v2852, 0.5
        %v3109 = vmul.f32 %v2853, 0.5
        %v3110 = vmul.f32 %v2854, 0.5
        %v3111 = vmul.f32 %v2855, 0.5
        %v3112 = vmul.f32 %v2856, 0.5
        %v3113 = vmul.f32 %v2857, 0.5
        %v3114 = vmul.f32 %v2858, 0.5
        %v3115 = vmul.f32 %v2859, 0.5
        %v3116 = vmul.f32 %v2860, 0.5
        %v3117 = vmul.f32 %v2861, 0.5
        %v3118 = vmul.f32 %v2862, 0.5
        %v3119 = vmul.f32 %v2863, 0.5
        %v3120 = vmul.f32 %v2864, 0.5
        %v3121 = vmul.f32 %v2865, 0.5
        %v3122 = vmul.f32 %v2866, 0.5
        %v3123 = vmul.f32 %v2867, 0.5
        %v3124 = vmul.f32 %v2868, 0.5
        %v3125 = vmul.f32 %v2869, 0.5
        %v3126 = vmul.f32 %v2870, 0.5
        %v3127 = vmul.f32 %v2871, 0.5
        %v3128 = vmul.f32 %v2872, 0.5
        %v3129 = vmul.f32 %v2873, 0.5
        %v3130 = vmul.f32 %v2874, 0.5
        %v3131 = vmul.f32 %v2875, 0.5
        %v3132 = vmul.f32 %v2876, 0.5
        %v3133 = vadd.f32 %v2877, 0.5
        %v3134 = vadd.f32 %v2878, 0.5
        %v3135 = vadd.f32 %v2879, 0.5
        %v3136 = vadd.f32 %v2880, 0.5
        %v3137 = vadd.f32 %v2881, 0.5
        %v3138 = vadd.f32 %v2882, 0.5
        %v3139 = vadd.f32 %v2883, 0.5
        %v3140 = vadd.f32 %v2884, 0.5
        %v3141 = vadd.f32 %v2885, 0.5
        %v3142 = vadd.f32 %v2886, 0.5
        %v3143 = vadd.f32 %v2887, 0.5
        %v3144 = vadd.f32 %v2888, 0.5
        %v3145 = vadd.f32 %v2889, 0.5
        %v3146 = vadd.f32 %v2890, 0.5
        %v3147 = vadd.f32 %v2891, 0.5
        %v3148 = vadd.f32 %v2892, 0.5
        %v3149 = vadd.f32 %v2893, 0.5
        %v3150 = vadd.f32 %v2894, 0.5
        %v3151 = vadd.f32 %v2895, 0.5
        %v3152 = vadd.f32 %v2896, 0.5
        %v3153 = vadd.f32 %v2897, 0.5
        %v3154 = vadd.f32 %v2898, 0.5
        %v3155 = vadd.f32 %v2899, 0.5
        %v3156 = vadd.f32 %v2900, 0.5
        %v3157 = vadd.f32 %v2901, 0.5
        %v3158 = vadd.f32 %v2902, 0.5
        %v3159 = vadd.f32 %v2903, 0.5
        %v3160 = vadd.f32 %v2904, 0.5
        %v3161 = vadd.f32 %v2905, 0.5
        %v3162 = vadd.f32 %v2906, 0.5
        %v3163 = vadd.f32 %v2907, 0.5
        %v3164 = vadd.f32 %v2908, 0.5
        %v3165 = vadd.f32 %v2909, 0.5
        %v3166 = vadd.f32 %v2910, 0.5
        %v3167 = vadd.f32 %v2911, 0.5
        %v3168 = vadd.f32 %v2912, 0.5
        %v3169 = vadd.f32 %v2913, 0.5
        %v3170 = vadd.f32 %v2914, 0.5
        %v3171 = vadd.f32 %v2915, 0.5
        %v3172 = vadd.f32 %v2916, 0.5
        %v3173 = vadd.f32 %v2917, 0.5
        %v3174 = vadd.f32 %v2918, 0.5
        %v3175 = vadd.f32 %v2919, 0.5
        %v3176 = vadd.f32 %v2920, 0.5
        %v3177 = vadd.f32 %v2921, 0.5
        %v3178 = vadd.f32 %v2922, 0.5
        %v3179 = vadd.f32 %v2923, 0.5
        %v3180 = vadd.f32 %v2924, 0.5
        %v3181 = vadd.f32 %v2925, 0.5
        %v3182 = vadd.f32 %v2926, 0.5
        %v3183 = vadd.f32 %v2927, 0.5
        %v3184 = vadd.f32 %v2928, 0.5
        %v3185 = vadd.f32 %v2929, 0.5
        %v3186 = vadd.f32 %v2930, 0.5
        %v3187 = vadd.f32 %v2931, 0.5
        %v3188 = vadd.f32 %v2932, 0.5
        %v3189 = vadd.f32 %v2933, 0.5
        %v3190 = vadd.f32 %v2934, 0.5
        %v3191 = vadd.f32 %v2935, 0.5
        %v3192 = vadd.f32 %v2936, 0.5
        %v3193 = vadd.f32 %v2937, 0.5
        %v3194 = vadd.f32 %v2938, 0.5
        %v3195 = vadd.f32 %v2939, 0.5
        %v3196 = vadd.f32 %v2940, 0.5
        %v3197 = vadd.f32 %v2941, 0.5
        %v3198 = vadd.f32 %v2942, 0.5
        %v3199 = vadd.f32 %v2943, 0.5
        %v3200 = vadd.f32 %v2944, 0.5
        %v3201 = vadd.f32 %v2945, 0.5
        %v3202 = vadd.f32 %v2946, 0.5
        %v3203 = vadd.f32 %v2947, 0.5
        %v3204 = vadd.f32 %v2948, 0.5
        %v3205 = vadd.f32 %v2949, 0.5
        %v3206 = vadd.f32 %v2950, 0.5
        %v3207 = vadd.f32 %v2951, 0.5
        %v3208 = vadd.f32 %v2952, 0.5
        %v3209 = vadd.f32 %v2953, 0.5
        %v3210 = vadd.f32 %v2954, 0.5
        %v3211 = vadd.f32 %v2955, 0.5
        %v3212 = vadd.f32 %v2956, 0.5
        %v3213 = vadd.f32 %v2957, 0.5
        %v3214 = vadd.f32 %v2958, 0.5
        %v3215 = vadd.f32 %v2959, 0.5
        %v3216 = vadd.f32 %v2960, 0.5
        %v3217 = vadd.f32 %v2961, 0.5
        %v3218 = vadd.f32 %v2962, 0.5
        %v3219 = vadd.f32 %v2963, 0.5
        %v3220 = vadd.f32 %v2964, 0.5
        %v3221 = vadd.f32 %v2965, 0.5
        %v3222 = vadd.f32 %v2966, 0.5
        %v3223 = vadd.f32 %v2967, 0.5
        %v3224 = vadd.f32 %v2968, 0.5
        %v3225 = vadd.f32 %v2969, 0.5
        %v3226 = vadd.f32 %v2970, 0.5
        %v3227 = vadd.f32 %v2971, 0.5
        %v3228 = vadd.f32 %v2972, 0.5
        %v3229 = vadd.f32 %v2973, 0.5
        %v3230 = vadd.f32 %v2974, 0.5
        %v3231 = vadd.f32 %v2975, 0.5
        %v3232 = vadd.f32 %v2976, 0.5
        %v3233 = vadd.f32 %v2977, 0.5
        %v3234 = vadd.f32 %v2978, 0.5
        %v3235 = vadd.f32 %v2979, 0.5
        %v3236 = vadd.f32 %v2980, 0.5
        %v3237 = vadd.f32 %v2981, 0.5
        %v3238 = vadd.f32 %v2982, 0.5
        %v3239 = vadd.f32 %v2983, 0.5
        %v3240 = vadd.f32 %v2984, 0.5
        %v3241 = vadd.f32 %v2985, 0.5
        %v3242 = vadd.f32 %v2986, 0.5
        %v3243 = vadd.f32 %v2987, 0.5
        %v3244 = vadd.f32 %v2988, 0.5
        %v3245 = vadd.f32 %v2989, 0.5
        %v3246 = vadd.f32 %v2990, 0.5
        %v3247 = vadd.f32 %v2991, 0.5
        %v3248 = vadd.f32 %v2992, 0.5
        %v3249 = vadd.f32 %v2993, 0.5
        %v3250 = vadd.f32 %v2994, 0.5
        %v3251 = vadd.f32 %v2995, 0.5
        %v3252 = vadd.f32 %v2996, 0.5
        %v3253 = vadd.f32 %v2997, 0.5
        %v3254 = vadd.f32 %v2998, 0.5
        %v3255 = vadd.f32 %v2999, 0.5
        %v3256 = vadd.f32 %v3000, 0.5
        %v3257 = vadd.f32 %v3001, 0.5
        %v3258 = vadd.f32 %v3002, 0.5
        %v3259 = vadd.f32 %v3003, 0.5
        %v3260 = vadd.f32 %v3004, 0.5
        %v3261 = vadd.f32 %v3005, 0.5
        %v3262 = vadd.f32 %v3006, 0.5
        %v3263 = vadd.f32 %v3007, 0.5
        %v3264 = vadd.f32 %v3008, 0.5
        %v3265 = vadd.f32 %v3009, 0.5
        %v3266 = vadd.f32 %v3010, 0.5
        %v3267 = vadd.f32 %v3011, 0.5
        %v3268 = vadd.f32 %v3012, 0.5
        %v3269 = vadd.f32 %v3013, 0.5
        %v3270 = vadd.f32 %v3014, 0.5
        %v3271 = vadd.f32 %v3015, 0.5
        %v3272 = vadd.f32 %v3016, 0.5
        %v3273 = vadd.f32 %v3017, 0.5
        %v3274 = vadd.f32 %v3018, 0.5
        %v3275 = vadd.f32 %v3019, 0.5
        %v3276 = vadd.f32 %v3020, 0.5
        %v3277 = vadd.f32 %v3021, 0.5
        %v3278 = vadd.f32 %v3022, 0.5
        %v3279 = vadd.f32 %v3023, 0.5
        %v3280 = vadd.f32 %v3024, 0.5
        %v3281 = vadd.f32 %v3025, 0.5
        %v3282 = vadd.f32 %v3026, 0.5
        %v3283 = vadd.f32 %v3027, 0.5
        %v3284 = vadd.f32 %v3028, 0.5
        %v3285 = vadd.f32 %v3029, 0.5
        %v3286 = vadd.f32 %v3030, 0.5
        %v3287 = vadd.f32 %v3031, 0.5
        %v3288 = vadd.f32 %v3032, 0.5
        %v3289 = vadd.f32 %v3033, 0.5
        %v3290 = vadd.f32 %v3034, 0.5
        %v3291 = vadd.f32 %v3035, 0.5
        %v3292 = vadd.f32 %v3036, 0.5
        %v3293 = vadd.f32 %v3037, 0.5
        %v3294 = vadd.f32 %v3038, 0.5
        %v3295 = vadd.f32 %v3039, 0.5
        %v3296 = vadd.f32 %v3040, 0.5
        %v3297 = vadd.f32 %v3041, 0.5
        %v3298 = vadd.f32 %v3042, 0.5
        %v3299 = vadd.f32 %v3043, 0.5
        %v3300 = vadd.f32 %v3044, 0.5
        %v3301 = vadd.f32 %v3045, 0.5
        %v3302 = vadd.f32 %v3046, 0.5
        %v3303 = vadd.f32 %v3047, 0.5
        %v3304 = vadd.f32 %v3048, 0.5
        %v3305 = vadd.f32 %v3049, 0.5
        %v3306 = vadd.f32 %v3050, 0.5
        %v3307 = vadd.f32 %v3051, 0.5
        %v3308 = vadd.f32 %v3052, 0.5
        %v3309 = vadd.f32 %v3053, 0.5
        %v3310 = vadd.f32 %v3054, 0.5
        %v3311 = vadd.f32 %v3055, 0.5
        %v3312 = vadd.f32 %v3056, 0.5
        %v3313 = vadd.f32 %v3057, 0.5
        %v3314 = vadd.f32 %v3058, 0.5
        %v3315 = vadd.f32 %v3059, 0.5
        %v3316 = vadd.f32 %v3060, 0.5
        %v3317 = vadd.f32 %v3061, 0.5
        %v3318 = vadd.f32 %v3062, 0.5
        %v3319 = vadd.f32 %v3063, 0.5
        %v3320 = vadd.f32 %v3064, 0.5
        %v3321 = vadd.f32 %v3065, 0.5
        %v3322 = vadd.f32 %v3066, 0.5
        %v3323 = vadd.f32 %v3067, 0.5
        %v3324 = vadd.f32 %v3068, 0.5
        %v3325 = vadd.f32 %v3069, 0.5
        %v3326 = vadd.f32 %v3070, 0.5
        %v3327 = vadd.f32 %v3071, 0.5
        %v3328 = vadd.f32 %v3072, 0.5
        %v3329 = vadd.f32 %v3073, 0.5
        %v3330 = vadd.f32 %v3074, 0.5
        %v3331 = vadd.f32 %v3075, 0.5
        %v3332 = vadd.f32 %v3076, 0.5
        %v3333 = vadd.f32 %v3077, 0.5
        %v3334 = vadd.f32 %v3078, 0.5
        %v3335 = vadd.f32 %v3079, 0.5
        %v3336 = vadd.f32 %v3080, 0.5
        %v3337 = vadd.f32 %v3081, 0.5
        %v3338 = vadd.f32 %v3082, 0.5
        %v3339 = vadd.f32 %v3083, 0.5
        %v3340 = vadd.f32 %v3084, 0.5
        %v3341 = vadd.f32 %v3085, 0.5
        %v3342 = vadd.f32 %v3086, 0.5
        %v3343 = vadd.f32 %v3087, 0.5
        %v3344 = vadd.f32 %v3088, 0.5
        %v3345 = vadd.f32 %v3089, 0.5
        %v3346 = vadd.f32 %v3090, 0.5
        %v3347 = vadd.f32 %v3091, 0.5
        %v3348 = vadd.f32 %v3092, 0.5
        %v3349 = vadd.f32 %v3093, 0.5
        %v3350 = vadd.f32 %v3094, 0.5
        %v3351 = vadd.f32 %v3095, 0.5
        %v3352 = vadd.f32 %v3096, 0.5
        %v3353 = vadd.f32 %v3097, 0.5
        %v3354 = vadd.f32 %v3098, 0.5
        %v3355 = vadd.f32 %v3099, 0.5
        %v3356 = vadd.f32 %v3100, 0.5
        %v3357 = vadd.f32 %v3101, 0.5
        %v3358 = vadd.f32 %v3102, 0.5
        %v3359 = vadd.f32 %v3103, 0.5
        %v3360 = vadd.f32 %v3104, 0.5
        %v3361 = vadd.f32 %v3105, 0.5
        %v3362 = vadd.f32 %v3106, 0.5
        %v3363 = vadd.f32 %v3107, 0.5
        %v3364 = vadd.f32 %v3108, 0.5
        %v3365 = vadd.f32 %v3109, 0.5
        %v3366 = vadd.f32 %v3110, 0.5
        %v3367 = vadd.f32 %v3111, 0.5
        %v3368 = vadd.f32 %v3112, 0.5
        %v3369 = vadd.f32 %v3113, 0.5
        %v3370 = vadd.f32 %v3114, 0.5
        %v3371 = vadd.f32 %v3115, 0.5
        %v3372 = vadd.f32 %v3116, 0.5
        %v3373 = vadd.f32 %v3117, 0.5
        %v3374 = vadd.f32 %v3118, 0.5
        %v3375 = vadd.f32 %v3119, 0.5
        %v3376 = vadd.f32 %v3120, 0.5
        %v3377 = vadd.f32 %v3121, 0.5
        %v3378 = vadd.f32 %v3122, 0.5
        %v3379 = vadd.f32 %v3123, 0.5
        %v3380 = vadd.f32 %v3124, 0.5
        %v3381 = vadd.f32 %v3125, 0.5
        %v3382 = vadd.f32 %v3126, 0.5
        %v3383 = vadd.f32 %v3127, 0.5
        %v3384 = vadd.f32 %v3128, 0.5
        %v3385 = vadd.f32 %v3129, 0.5
        %v3386 = vadd.f32 %v3130, 0.5
        %v3387 = vadd.f32 %v3131, 0.5
        %v3388 = vadd.f32 %v3132, 0.5
        %v3389 = vld [vmem:[%s340] sm:$0xf]
        %3391 = vset.pattern.permute.xlu0 0
        %3392 = vperm.xlu0 %3391, %v1279
        %v3393 = vpop.permute.xlu0 %3392
        %3396 = vset.pattern.permute.xlu0 0
        %3397 = vperm.xlu0 %3396, %v1283
        %v3398 = vpop.permute.xlu0 %3397
        %3401 = vset.pattern.permute.xlu0 0
        %3402 = vperm.xlu0 %3401, %v1289
        %v3403 = vpop.permute.xlu0 %3402
        %3406 = vset.pattern.permute.xlu0 0
        %3407 = vperm.xlu0 %3406, %v1293
        %v3408 = vpop.permute.xlu0 %3407
        %3411 = vset.pattern.permute.xlu0 0
        %3412 = vperm.xlu0 %3411, %v1299
        %v3413 = vpop.permute.xlu0 %3412
        %3416 = vset.pattern.permute.xlu0 0
        %3417 = vperm.xlu0 %3416, %v1303
        %v3418 = vpop.permute.xlu0 %3417
        %3421 = vset.pattern.permute.xlu0 0
        %3422 = vperm.xlu0 %3421, %v1309
        %v3423 = vpop.permute.xlu0 %3422
        %3426 = vset.pattern.permute.xlu0 0
        %3427 = vperm.xlu0 %3426, %v1313
        %v3428 = vpop.permute.xlu0 %3427
        %3431 = vset.pattern.permute.xlu0 0
        %3432 = vperm.xlu0 %3431, %v1319
        %v3433 = vpop.permute.xlu0 %3432
        %3436 = vset.pattern.permute.xlu0 0
        %3437 = vperm.xlu0 %3436, %v1323
        %v3438 = vpop.permute.xlu0 %3437
        %3441 = vset.pattern.permute.xlu0 0
        %3442 = vperm.xlu0 %3441, %v1329
        %v3443 = vpop.permute.xlu0 %3442
        %3446 = vset.pattern.permute.xlu0 0
        %3447 = vperm.xlu0 %3446, %v1333
        %v3448 = vpop.permute.xlu0 %3447
        %3451 = vset.pattern.permute.xlu0 0
        %3452 = vperm.xlu0 %3451, %v1339
        %v3453 = vpop.permute.xlu0 %3452
        %3456 = vset.pattern.permute.xlu0 0
        %3457 = vperm.xlu0 %3456, %v1343
        %v3458 = vpop.permute.xlu0 %3457
        %3461 = vset.pattern.permute.xlu0 0
        %3462 = vperm.xlu0 %3461, %v1349
        %v3463 = vpop.permute.xlu0 %3462
        %3466 = vset.pattern.permute.xlu0 0
        %3467 = vperm.xlu0 %3466, %v1353
        %v3468 = vpop.permute.xlu0 %3467
        %3471 = vset.pattern.permute.xlu0 0
        %3472 = vperm.xlu0 %3471, %v1359
        %v3473 = vpop.permute.xlu0 %3472
        %3476 = vset.pattern.permute.xlu0 0
        %3477 = vperm.xlu0 %3476, %v1363
        %v3478 = vpop.permute.xlu0 %3477
        %3481 = vset.pattern.permute.xlu0 0
        %3482 = vperm.xlu0 %3481, %v1369
        %v3483 = vpop.permute.xlu0 %3482
        %3486 = vset.pattern.permute.xlu0 0
        %3487 = vperm.xlu0 %3486, %v1373
        %v3488 = vpop.permute.xlu0 %3487
        %3491 = vset.pattern.permute.xlu0 0
        %3492 = vperm.xlu0 %3491, %v1379
        %v3493 = vpop.permute.xlu0 %3492
        %3496 = vset.pattern.permute.xlu0 0
        %3497 = vperm.xlu0 %3496, %v1383
        %v3498 = vpop.permute.xlu0 %3497
        %3501 = vset.pattern.permute.xlu0 0
        %3502 = vperm.xlu0 %3501, %v1389
        %v3503 = vpop.permute.xlu0 %3502
        %3506 = vset.pattern.permute.xlu0 0
        %3507 = vperm.xlu0 %3506, %v1393
        %v3508 = vpop.permute.xlu0 %3507
        %3511 = vset.pattern.permute.xlu0 0
        %3512 = vperm.xlu0 %3511, %v1399
        %v3513 = vpop.permute.xlu0 %3512
        %3516 = vset.pattern.permute.xlu0 0
        %3517 = vperm.xlu0 %3516, %v1403
        %v3518 = vpop.permute.xlu0 %3517
        %3521 = vset.pattern.permute.xlu0 0
        %3522 = vperm.xlu0 %3521, %v1409
        %v3523 = vpop.permute.xlu0 %3522
        %3526 = vset.pattern.permute.xlu0 0
        %3527 = vperm.xlu0 %3526, %v1413
        %v3528 = vpop.permute.xlu0 %3527
        %3531 = vset.pattern.permute.xlu0 0
        %3532 = vperm.xlu0 %3531, %v1419
        %v3533 = vpop.permute.xlu0 %3532
        %3536 = vset.pattern.permute.xlu0 0
        %3537 = vperm.xlu0 %3536, %v1423
        %v3538 = vpop.permute.xlu0 %3537
        %3541 = vset.pattern.permute.xlu0 0
        %3542 = vperm.xlu0 %3541, %v1429
        %v3543 = vpop.permute.xlu0 %3542
        %3546 = vset.pattern.permute.xlu0 0
        %3547 = vperm.xlu0 %3546, %v1433
        %v3548 = vpop.permute.xlu0 %3547
        %3551 = vset.pattern.permute.xlu0 0
        %3552 = vperm.xlu0 %3551, %v1439
        %v3553 = vpop.permute.xlu0 %3552
        %3556 = vset.pattern.permute.xlu0 0
        %3557 = vperm.xlu0 %3556, %v1443
        %v3558 = vpop.permute.xlu0 %3557
        %3561 = vset.pattern.permute.xlu0 0
        %3562 = vperm.xlu0 %3561, %v1449
        %v3563 = vpop.permute.xlu0 %3562
        %3566 = vset.pattern.permute.xlu0 0
        %3567 = vperm.xlu0 %3566, %v1453
        %v3568 = vpop.permute.xlu0 %3567
        %3571 = vset.pattern.permute.xlu0 0
        %3572 = vperm.xlu0 %3571, %v1459
        %v3573 = vpop.permute.xlu0 %3572
        %3576 = vset.pattern.permute.xlu0 0
        %3577 = vperm.xlu0 %3576, %v1463
        %v3578 = vpop.permute.xlu0 %3577
        %3581 = vset.pattern.permute.xlu0 0
        %3582 = vperm.xlu0 %3581, %v1469
        %v3583 = vpop.permute.xlu0 %3582
        %3586 = vset.pattern.permute.xlu0 0
        %3587 = vperm.xlu0 %3586, %v1473
        %v3588 = vpop.permute.xlu0 %3587
        %3591 = vset.pattern.permute.xlu0 0
        %3592 = vperm.xlu0 %3591, %v1479
        %v3593 = vpop.permute.xlu0 %3592
        %3596 = vset.pattern.permute.xlu0 0
        %3597 = vperm.xlu0 %3596, %v1483
        %v3598 = vpop.permute.xlu0 %3597
        %3601 = vset.pattern.permute.xlu0 0
        %3602 = vperm.xlu0 %3601, %v1489
        %v3603 = vpop.permute.xlu0 %3602
        %3606 = vset.pattern.permute.xlu0 0
        %3607 = vperm.xlu0 %3606, %v1493
        %v3608 = vpop.permute.xlu0 %3607
        %3611 = vset.pattern.permute.xlu0 0
        %3612 = vperm.xlu0 %3611, %v1499
        %v3613 = vpop.permute.xlu0 %3612
        %3616 = vset.pattern.permute.xlu0 0
        %3617 = vperm.xlu0 %3616, %v1503
        %v3618 = vpop.permute.xlu0 %3617
        %3621 = vset.pattern.permute.xlu0 0
        %3622 = vperm.xlu0 %3621, %v1509
        %v3623 = vpop.permute.xlu0 %3622
        %3626 = vset.pattern.permute.xlu0 0
        %3627 = vperm.xlu0 %3626, %v1513
        %v3628 = vpop.permute.xlu0 %3627
        %3631 = vset.pattern.permute.xlu0 0
        %3632 = vperm.xlu0 %3631, %v1519
        %v3633 = vpop.permute.xlu0 %3632
        %3636 = vset.pattern.permute.xlu0 0
        %3637 = vperm.xlu0 %3636, %v1523
        %v3638 = vpop.permute.xlu0 %3637
        %3641 = vset.pattern.permute.xlu0 0
        %3642 = vperm.xlu0 %3641, %v1529
        %v3643 = vpop.permute.xlu0 %3642
        %3646 = vset.pattern.permute.xlu0 0
        %3647 = vperm.xlu0 %3646, %v1533
        %v3648 = vpop.permute.xlu0 %3647
        %3651 = vset.pattern.permute.xlu0 0
        %3652 = vperm.xlu0 %3651, %v1539
        %v3653 = vpop.permute.xlu0 %3652
        %3656 = vset.pattern.permute.xlu0 0
        %3657 = vperm.xlu0 %3656, %v1543
        %v3658 = vpop.permute.xlu0 %3657
        %3661 = vset.pattern.permute.xlu0 0
        %3662 = vperm.xlu0 %3661, %v1549
        %v3663 = vpop.permute.xlu0 %3662
        %3666 = vset.pattern.permute.xlu0 0
        %3667 = vperm.xlu0 %3666, %v1553
        %v3668 = vpop.permute.xlu0 %3667
        %3671 = vset.pattern.permute.xlu0 0
        %3672 = vperm.xlu0 %3671, %v1559
        %v3673 = vpop.permute.xlu0 %3672
        %3676 = vset.pattern.permute.xlu0 0
        %3677 = vperm.xlu0 %3676, %v1563
        %v3678 = vpop.permute.xlu0 %3677
        %3681 = vset.pattern.permute.xlu0 0
        %3682 = vperm.xlu0 %3681, %v1569
        %v3683 = vpop.permute.xlu0 %3682
        %3686 = vset.pattern.permute.xlu0 0
        %3687 = vperm.xlu0 %3686, %v1573
        %v3688 = vpop.permute.xlu0 %3687
        %3691 = vset.pattern.permute.xlu0 0
        %3692 = vperm.xlu0 %3691, %v1579
        %v3693 = vpop.permute.xlu0 %3692
        %3696 = vset.pattern.permute.xlu0 0
        %3697 = vperm.xlu0 %3696, %v1583
        %v3698 = vpop.permute.xlu0 %3697
        %3701 = vset.pattern.permute.xlu0 0
        %3702 = vperm.xlu0 %3701, %v1589
        %v3703 = vpop.permute.xlu0 %3702
        %3706 = vset.pattern.permute.xlu0 0
        %3707 = vperm.xlu0 %3706, %v1593
        %v3708 = vpop.permute.xlu0 %3707
        %v3710 = vmul.f32 %v3133, %v3393
        %v3711 = vmul.f32 %v3134, %v3393
        %v3712 = vmul.f32 %v3135, %v3393
        %v3713 = vmul.f32 %v3136, %v3393
        %v3714 = vmul.f32 %v3137, %v3398
        %v3715 = vmul.f32 %v3138, %v3398
        %v3716 = vmul.f32 %v3139, %v3398
        %v3717 = vmul.f32 %v3140, %v3398
        %v3718 = vmul.f32 %v3141, %v3403
        %v3719 = vmul.f32 %v3142, %v3403
        %v3720 = vmul.f32 %v3143, %v3403
        %v3721 = vmul.f32 %v3144, %v3403
        %v3722 = vmul.f32 %v3145, %v3408
        %v3723 = vmul.f32 %v3146, %v3408
        %v3724 = vmul.f32 %v3147, %v3408
        %v3725 = vmul.f32 %v3148, %v3408
        %v3726 = vmul.f32 %v3149, %v3413
        %v3727 = vmul.f32 %v3150, %v3413
        %v3728 = vmul.f32 %v3151, %v3413
        %v3729 = vmul.f32 %v3152, %v3413
        %v3730 = vmul.f32 %v3153, %v3418
        %v3731 = vmul.f32 %v3154, %v3418
        %v3732 = vmul.f32 %v3155, %v3418
        %v3733 = vmul.f32 %v3156, %v3418
        %v3734 = vmul.f32 %v3157, %v3423
        %v3735 = vmul.f32 %v3158, %v3423
        %v3736 = vmul.f32 %v3159, %v3423
        %v3737 = vmul.f32 %v3160, %v3423
        %v3738 = vmul.f32 %v3161, %v3428
        %v3739 = vmul.f32 %v3162, %v3428
        %v3740 = vmul.f32 %v3163, %v3428
        %v3741 = vmul.f32 %v3164, %v3428
        %v3742 = vmul.f32 %v3165, %v3433
        %v3743 = vmul.f32 %v3166, %v3433
        %v3744 = vmul.f32 %v3167, %v3433
        %v3745 = vmul.f32 %v3168, %v3433
        %v3746 = vmul.f32 %v3169, %v3438
        %v3747 = vmul.f32 %v3170, %v3438
        %v3748 = vmul.f32 %v3171, %v3438
        %v3749 = vmul.f32 %v3172, %v3438
        %v3750 = vmul.f32 %v3173, %v3443
        %v3751 = vmul.f32 %v3174, %v3443
        %v3752 = vmul.f32 %v3175, %v3443
        %v3753 = vmul.f32 %v3176, %v3443
        %v3754 = vmul.f32 %v3177, %v3448
        %v3755 = vmul.f32 %v3178, %v3448
        %v3756 = vmul.f32 %v3179, %v3448
        %v3757 = vmul.f32 %v3180, %v3448
        %v3758 = vmul.f32 %v3181, %v3453
        %v3759 = vmul.f32 %v3182, %v3453
        %v3760 = vmul.f32 %v3183, %v3453
        %v3761 = vmul.f32 %v3184, %v3453
        %v3762 = vmul.f32 %v3185, %v3458
        %v3763 = vmul.f32 %v3186, %v3458
        %v3764 = vmul.f32 %v3187, %v3458
        %v3765 = vmul.f32 %v3188, %v3458
        %v3766 = vmul.f32 %v3189, %v3463
        %v3767 = vmul.f32 %v3190, %v3463
        %v3768 = vmul.f32 %v3191, %v3463
        %v3769 = vmul.f32 %v3192, %v3463
        %v3770 = vmul.f32 %v3193, %v3468
        %v3771 = vmul.f32 %v3194, %v3468
        %v3772 = vmul.f32 %v3195, %v3468
        %v3773 = vmul.f32 %v3196, %v3468
        %v3774 = vmul.f32 %v3197, %v3473
        %v3775 = vmul.f32 %v3198, %v3473
        %v3776 = vmul.f32 %v3199, %v3473
        %v3777 = vmul.f32 %v3200, %v3473
        %v3778 = vmul.f32 %v3201, %v3478
        %v3779 = vmul.f32 %v3202, %v3478
        %v3780 = vmul.f32 %v3203, %v3478
        %v3781 = vmul.f32 %v3204, %v3478
        %v3782 = vmul.f32 %v3205, %v3483
        %v3783 = vmul.f32 %v3206, %v3483
        %v3784 = vmul.f32 %v3207, %v3483
        %v3785 = vmul.f32 %v3208, %v3483
        %v3786 = vmul.f32 %v3209, %v3488
        %v3787 = vmul.f32 %v3210, %v3488
        %v3788 = vmul.f32 %v3211, %v3488
        %v3789 = vmul.f32 %v3212, %v3488
        %v3790 = vmul.f32 %v3213, %v3493
        %v3791 = vmul.f32 %v3214, %v3493
        %v3792 = vmul.f32 %v3215, %v3493
        %v3793 = vmul.f32 %v3216, %v3493
        %v3794 = vmul.f32 %v3217, %v3498
        %v3795 = vmul.f32 %v3218, %v3498
        %v3796 = vmul.f32 %v3219, %v3498
        %v3797 = vmul.f32 %v3220, %v3498
        %v3798 = vmul.f32 %v3221, %v3503
        %v3799 = vmul.f32 %v3222, %v3503
        %v3800 = vmul.f32 %v3223, %v3503
        %v3801 = vmul.f32 %v3224, %v3503
        %v3802 = vmul.f32 %v3225, %v3508
        %v3803 = vmul.f32 %v3226, %v3508
        %v3804 = vmul.f32 %v3227, %v3508
        %v3805 = vmul.f32 %v3228, %v3508
        %v3806 = vmul.f32 %v3229, %v3513
        %v3807 = vmul.f32 %v3230, %v3513
        %v3808 = vmul.f32 %v3231, %v3513
        %v3809 = vmul.f32 %v3232, %v3513
        %v3810 = vmul.f32 %v3233, %v3518
        %v3811 = vmul.f32 %v3234, %v3518
        %v3812 = vmul.f32 %v3235, %v3518
        %v3813 = vmul.f32 %v3236, %v3518
        %v3814 = vmul.f32 %v3237, %v3523
        %v3815 = vmul.f32 %v3238, %v3523
        %v3816 = vmul.f32 %v3239, %v3523
        %v3817 = vmul.f32 %v3240, %v3523
        %v3818 = vmul.f32 %v3241, %v3528
        %v3819 = vmul.f32 %v3242, %v3528
        %v3820 = vmul.f32 %v3243, %v3528
        %v3821 = vmul.f32 %v3244, %v3528
        %v3822 = vmul.f32 %v3245, %v3533
        %v3823 = vmul.f32 %v3246, %v3533
        %v3824 = vmul.f32 %v3247, %v3533
        %v3825 = vmul.f32 %v3248, %v3533
        %v3826 = vmul.f32 %v3249, %v3538
        %v3827 = vmul.f32 %v3250, %v3538
        %v3828 = vmul.f32 %v3251, %v3538
        %v3829 = vmul.f32 %v3252, %v3538
        %v3830 = vmul.f32 %v3253, %v3543
        %v3831 = vmul.f32 %v3254, %v3543
        %v3832 = vmul.f32 %v3255, %v3543
        %v3833 = vmul.f32 %v3256, %v3543
        %v3834 = vmul.f32 %v3257, %v3548
        %v3835 = vmul.f32 %v3258, %v3548
        %v3836 = vmul.f32 %v3259, %v3548
        %v3837 = vmul.f32 %v3260, %v3548
        %v3838 = vmul.f32 %v3261, %v3553
        %v3839 = vmul.f32 %v3262, %v3553
        %v3840 = vmul.f32 %v3263, %v3553
        %v3841 = vmul.f32 %v3264, %v3553
        %v3842 = vmul.f32 %v3265, %v3558
        %v3843 = vmul.f32 %v3266, %v3558
        %v3844 = vmul.f32 %v3267, %v3558
        %v3845 = vmul.f32 %v3268, %v3558
        %v3846 = vmul.f32 %v3269, %v3563
        %v3847 = vmul.f32 %v3270, %v3563
        %v3848 = vmul.f32 %v3271, %v3563
        %v3849 = vmul.f32 %v3272, %v3563
        %v3850 = vmul.f32 %v3273, %v3568
        %v3851 = vmul.f32 %v3274, %v3568
        %v3852 = vmul.f32 %v3275, %v3568
        %v3853 = vmul.f32 %v3276, %v3568
        %v3854 = vmul.f32 %v3277, %v3573
        %v3855 = vmul.f32 %v3278, %v3573
        %v3856 = vmul.f32 %v3279, %v3573
        %v3857 = vmul.f32 %v3280, %v3573
        %v3858 = vmul.f32 %v3281, %v3578
        %v3859 = vmul.f32 %v3282, %v3578
        %v3860 = vmul.f32 %v3283, %v3578
        %v3861 = vmul.f32 %v3284, %v3578
        %v3862 = vmul.f32 %v3285, %v3583
        %v3863 = vmul.f32 %v3286, %v3583
        %v3864 = vmul.f32 %v3287, %v3583
        %v3865 = vmul.f32 %v3288, %v3583
        %v3866 = vmul.f32 %v3289, %v3588
        %v3867 = vmul.f32 %v3290, %v3588
        %v3868 = vmul.f32 %v3291, %v3588
        %v3869 = vmul.f32 %v3292, %v3588
        %v3870 = vmul.f32 %v3293, %v3593
        %v3871 = vmul.f32 %v3294, %v3593
        %v3872 = vmul.f32 %v3295, %v3593
        %v3873 = vmul.f32 %v3296, %v3593
        %v3874 = vmul.f32 %v3297, %v3598
        %v3875 = vmul.f32 %v3298, %v3598
        %v3876 = vmul.f32 %v3299, %v3598
        %v3877 = vmul.f32 %v3300, %v3598
        %v3878 = vmul.f32 %v3301, %v3603
        %v3879 = vmul.f32 %v3302, %v3603
        %v3880 = vmul.f32 %v3303, %v3603
        %v3881 = vmul.f32 %v3304, %v3603
        %v3882 = vmul.f32 %v3305, %v3608
        %v3883 = vmul.f32 %v3306, %v3608
        %v3884 = vmul.f32 %v3307, %v3608
        %v3885 = vmul.f32 %v3308, %v3608
        %v3886 = vmul.f32 %v3309, %v3613
        %v3887 = vmul.f32 %v3310, %v3613
        %v3888 = vmul.f32 %v3311, %v3613
        %v3889 = vmul.f32 %v3312, %v3613
        %v3890 = vmul.f32 %v3313, %v3618
        %v3891 = vmul.f32 %v3314, %v3618
        %v3892 = vmul.f32 %v3315, %v3618
        %v3893 = vmul.f32 %v3316, %v3618
        %v3894 = vmul.f32 %v3317, %v3623
        %v3895 = vmul.f32 %v3318, %v3623
        %v3896 = vmul.f32 %v3319, %v3623
        %v3897 = vmul.f32 %v3320, %v3623
        %v3898 = vmul.f32 %v3321, %v3628
        %v3899 = vmul.f32 %v3322, %v3628
        %v3900 = vmul.f32 %v3323, %v3628
        %v3901 = vmul.f32 %v3324, %v3628
        %v3902 = vmul.f32 %v3325, %v3633
        %v3903 = vmul.f32 %v3326, %v3633
        %v3904 = vmul.f32 %v3327, %v3633
        %v3905 = vmul.f32 %v3328, %v3633
        %v3906 = vmul.f32 %v3329, %v3638
        %v3907 = vmul.f32 %v3330, %v3638
        %v3908 = vmul.f32 %v3331, %v3638
        %v3909 = vmul.f32 %v3332, %v3638
        %v3910 = vmul.f32 %v3333, %v3643
        %v3911 = vmul.f32 %v3334, %v3643
        %v3912 = vmul.f32 %v3335, %v3643
        %v3913 = vmul.f32 %v3336, %v3643
        %v3914 = vmul.f32 %v3337, %v3648
        %v3915 = vmul.f32 %v3338, %v3648
        %v3916 = vmul.f32 %v3339, %v3648
        %v3917 = vmul.f32 %v3340, %v3648
        %v3918 = vmul.f32 %v3341, %v3653
        %v3919 = vmul.f32 %v3342, %v3653
        %v3920 = vmul.f32 %v3343, %v3653
        %v3921 = vmul.f32 %v3344, %v3653
        %v3922 = vmul.f32 %v3345, %v3658
        %v3923 = vmul.f32 %v3346, %v3658
        %v3924 = vmul.f32 %v3347, %v3658
        %v3925 = vmul.f32 %v3348, %v3658
        %v3926 = vmul.f32 %v3349, %v3663
        %v3927 = vmul.f32 %v3350, %v3663
        %v3928 = vmul.f32 %v3351, %v3663
        %v3929 = vmul.f32 %v3352, %v3663
        %v3930 = vmul.f32 %v3353, %v3668
        %v3931 = vmul.f32 %v3354, %v3668
        %v3932 = vmul.f32 %v3355, %v3668
        %v3933 = vmul.f32 %v3356, %v3668
        %v3934 = vmul.f32 %v3357, %v3673
        %v3935 = vmul.f32 %v3358, %v3673
        %v3936 = vmul.f32 %v3359, %v3673
        %v3937 = vmul.f32 %v3360, %v3673
        %v3938 = vmul.f32 %v3361, %v3678
        %v3939 = vmul.f32 %v3362, %v3678
        %v3940 = vmul.f32 %v3363, %v3678
        %v3941 = vmul.f32 %v3364, %v3678
        %v3942 = vmul.f32 %v3365, %v3683
        %v3943 = vmul.f32 %v3366, %v3683
        %v3944 = vmul.f32 %v3367, %v3683
        %v3945 = vmul.f32 %v3368, %v3683
        %v3946 = vmul.f32 %v3369, %v3688
        %v3947 = vmul.f32 %v3370, %v3688
        %v3948 = vmul.f32 %v3371, %v3688
        %v3949 = vmul.f32 %v3372, %v3688
        %v3950 = vmul.f32 %v3373, %v3693
        %v3951 = vmul.f32 %v3374, %v3693
        %v3952 = vmul.f32 %v3375, %v3693
        %v3953 = vmul.f32 %v3376, %v3693
        %v3954 = vmul.f32 %v3377, %v3698
        %v3955 = vmul.f32 %v3378, %v3698
        %v3956 = vmul.f32 %v3379, %v3698
        %v3957 = vmul.f32 %v3380, %v3698
        %v3958 = vmul.f32 %v3381, %v3703
        %v3959 = vmul.f32 %v3382, %v3703
        %v3960 = vmul.f32 %v3383, %v3703
        %v3961 = vmul.f32 %v3384, %v3703
        %v3962 = vmul.f32 %v3385, %v3708
        %v3963 = vmul.f32 %v3386, %v3708
        %v3964 = vmul.f32 %v3387, %v3708
        %v3965 = vmul.f32 %v3388, %v3708
        %v3966 = vadd.f32 %v3710, %v3714
        %v3967 = vadd.f32 %v3966, %v3718
        %v3968 = vadd.f32 %v3967, %v3722
        %v3969 = vadd.f32 %v3968, %v3726
        %v3970 = vadd.f32 %v3969, %v3730
        %v3971 = vadd.f32 %v3970, %v3734
        %v3972 = vadd.f32 %v3971, %v3738
        %v3973 = vadd.f32 %v3972, %v3742
        %v3974 = vadd.f32 %v3973, %v3746
        %v3975 = vadd.f32 %v3974, %v3750
        %v3976 = vadd.f32 %v3975, %v3754
        %v3977 = vadd.f32 %v3976, %v3758
        %v3978 = vadd.f32 %v3977, %v3762
        %v3979 = vadd.f32 %v3978, %v3766
        %v3980 = vadd.f32 %v3979, %v3770
        %v3981 = vadd.f32 %v3980, %v3774
        %v3982 = vadd.f32 %v3981, %v3778
        %v3983 = vadd.f32 %v3982, %v3782
        %v3984 = vadd.f32 %v3983, %v3786
        %v3985 = vadd.f32 %v3984, %v3790
        %v3986 = vadd.f32 %v3985, %v3794
        %v3987 = vadd.f32 %v3986, %v3798
        %v3988 = vadd.f32 %v3987, %v3802
        %v3989 = vadd.f32 %v3988, %v3806
        %v3990 = vadd.f32 %v3989, %v3810
        %v3991 = vadd.f32 %v3990, %v3814
        %v3992 = vadd.f32 %v3991, %v3818
        %v3993 = vadd.f32 %v3992, %v3822
        %v3994 = vadd.f32 %v3993, %v3826
        %v3995 = vadd.f32 %v3994, %v3830
        %v3996 = vadd.f32 %v3995, %v3834
        %v3997 = vadd.f32 %v3996, %v3838
        %v3998 = vadd.f32 %v3997, %v3842
        %v3999 = vadd.f32 %v3998, %v3846
        %v4000 = vadd.f32 %v3999, %v3850
        %v4001 = vadd.f32 %v4000, %v3854
        %v4002 = vadd.f32 %v4001, %v3858
        %v4003 = vadd.f32 %v4002, %v3862
        %v4004 = vadd.f32 %v4003, %v3866
        %v4005 = vadd.f32 %v4004, %v3870
        %v4006 = vadd.f32 %v4005, %v3874
        %v4007 = vadd.f32 %v4006, %v3878
        %v4008 = vadd.f32 %v4007, %v3882
        %v4009 = vadd.f32 %v4008, %v3886
        %v4010 = vadd.f32 %v4009, %v3890
        %v4011 = vadd.f32 %v4010, %v3894
        %v4012 = vadd.f32 %v4011, %v3898
        %v4013 = vadd.f32 %v4012, %v3902
        %v4014 = vadd.f32 %v4013, %v3906
        %v4015 = vadd.f32 %v4014, %v3910
        %v4016 = vadd.f32 %v4015, %v3914
        %v4017 = vadd.f32 %v4016, %v3918
        %v4018 = vadd.f32 %v4017, %v3922
        %v4019 = vadd.f32 %v4018, %v3926
        %v4020 = vadd.f32 %v4019, %v3930
        %v4021 = vadd.f32 %v4020, %v3934
        %v4022 = vadd.f32 %v4021, %v3938
        %v4023 = vadd.f32 %v4022, %v3942
        %v4024 = vadd.f32 %v4023, %v3946
        %v4025 = vadd.f32 %v4024, %v3950
        %v4026 = vadd.f32 %v4025, %v3954
        %v4027 = vadd.f32 %v4026, %v3958
        %v4028 = vadd.f32 %v4027, %v3962
        %v4029 = vrot.slane %v4028, 4
        %v4030 = vadd.f32 %v4028, %v4029
        %v4031 = vrot.slane %v4030, 2
        %v4032 = vadd.f32 %v4030, %v4031
        %v4033 = vrot.slane %v4032, 1
        %v4034 = vadd.f32 %v4032, %v4033
        %v4035 = vadd.f32 %v3711, %v3715
        %v4036 = vadd.f32 %v4035, %v3719
        %v4037 = vadd.f32 %v4036, %v3723
        %v4038 = vadd.f32 %v4037, %v3727
        %v4039 = vadd.f32 %v4038, %v3731
        %v4040 = vadd.f32 %v4039, %v3735
        %v4041 = vadd.f32 %v4040, %v3739
        %v4042 = vadd.f32 %v4041, %v3743
        %v4043 = vadd.f32 %v4042, %v3747
        %v4044 = vadd.f32 %v4043, %v3751
        %v4045 = vadd.f32 %v4044, %v3755
        %v4046 = vadd.f32 %v4045, %v3759
        %v4047 = vadd.f32 %v4046, %v3763
        %v4048 = vadd.f32 %v4047, %v3767
        %v4049 = vadd.f32 %v4048, %v3771
        %v4050 = vadd.f32 %v4049, %v3775
        %v4051 = vadd.f32 %v4050, %v3779
        %v4052 = vadd.f32 %v4051, %v3783
        %v4053 = vadd.f32 %v4052, %v3787
        %v4054 = vadd.f32 %v4053, %v3791
        %v4055 = vadd.f32 %v4054, %v3795
        %v4056 = vadd.f32 %v4055, %v3799
        %v4057 = vadd.f32 %v4056, %v3803
        %v4058 = vadd.f32 %v4057, %v3807
        %v4059 = vadd.f32 %v4058, %v3811
        %v4060 = vadd.f32 %v4059, %v3815
        %v4061 = vadd.f32 %v4060, %v3819
        %v4062 = vadd.f32 %v4061, %v3823
        %v4063 = vadd.f32 %v4062, %v3827
        %v4064 = vadd.f32 %v4063, %v3831
        %v4065 = vadd.f32 %v4064, %v3835
        %v4066 = vadd.f32 %v4065, %v3839
        %v4067 = vadd.f32 %v4066, %v3843
        %v4068 = vadd.f32 %v4067, %v3847
        %v4069 = vadd.f32 %v4068, %v3851
        %v4070 = vadd.f32 %v4069, %v3855
        %v4071 = vadd.f32 %v4070, %v3859
        %v4072 = vadd.f32 %v4071, %v3863
        %v4073 = vadd.f32 %v4072, %v3867
        %v4074 = vadd.f32 %v4073, %v3871
        %v4075 = vadd.f32 %v4074, %v3875
        %v4076 = vadd.f32 %v4075, %v3879
        %v4077 = vadd.f32 %v4076, %v3883
        %v4078 = vadd.f32 %v4077, %v3887
        %v4079 = vadd.f32 %v4078, %v3891
        %v4080 = vadd.f32 %v4079, %v3895
        %v4081 = vadd.f32 %v4080, %v3899
        %v4082 = vadd.f32 %v4081, %v3903
        %v4083 = vadd.f32 %v4082, %v3907
        %v4084 = vadd.f32 %v4083, %v3911
        %v4085 = vadd.f32 %v4084, %v3915
        %v4086 = vadd.f32 %v4085, %v3919
        %v4087 = vadd.f32 %v4086, %v3923
        %v4088 = vadd.f32 %v4087, %v3927
        %v4089 = vadd.f32 %v4088, %v3931
        %v4090 = vadd.f32 %v4089, %v3935
        %v4091 = vadd.f32 %v4090, %v3939
        %v4092 = vadd.f32 %v4091, %v3943
        %v4093 = vadd.f32 %v4092, %v3947
        %v4094 = vadd.f32 %v4093, %v3951
        %v4095 = vadd.f32 %v4094, %v3955
        %v4096 = vadd.f32 %v4095, %v3959
        %v4097 = vadd.f32 %v4096, %v3963
        %v4098 = vrot.slane %v4097, 4
        %v4099 = vadd.f32 %v4097, %v4098
        %v4100 = vrot.slane %v4099, 2
        %v4101 = vadd.f32 %v4099, %v4100
        %v4102 = vrot.slane %v4101, 1
        %v4103 = vadd.f32 %v4101, %v4102
        %v4104 = vadd.f32 %v3712, %v3716
        %v4105 = vadd.f32 %v4104, %v3720
        %v4106 = vadd.f32 %v4105, %v3724
        %v4107 = vadd.f32 %v4106, %v3728
        %v4108 = vadd.f32 %v4107, %v3732
        %v4109 = vadd.f32 %v4108, %v3736
        %v4110 = vadd.f32 %v4109, %v3740
        %v4111 = vadd.f32 %v4110, %v3744
        %v4112 = vadd.f32 %v4111, %v3748
        %v4113 = vadd.f32 %v4112, %v3752
        %v4114 = vadd.f32 %v4113, %v3756
        %v4115 = vadd.f32 %v4114, %v3760
        %v4116 = vadd.f32 %v4115, %v3764
        %v4117 = vadd.f32 %v4116, %v3768
        %v4118 = vadd.f32 %v4117, %v3772
        %v4119 = vadd.f32 %v4118, %v3776
        %v4120 = vadd.f32 %v4119, %v3780
        %v4121 = vadd.f32 %v4120, %v3784
        %v4122 = vadd.f32 %v4121, %v3788
        %v4123 = vadd.f32 %v4122, %v3792
        %v4124 = vadd.f32 %v4123, %v3796
        %v4125 = vadd.f32 %v4124, %v3800
        %v4126 = vadd.f32 %v4125, %v3804
        %v4127 = vadd.f32 %v4126, %v3808
        %v4128 = vadd.f32 %v4127, %v3812
        %v4129 = vadd.f32 %v4128, %v3816
        %v4130 = vadd.f32 %v4129, %v3820
        %v4131 = vadd.f32 %v4130, %v3824
        %v4132 = vadd.f32 %v4131, %v3828
        %v4133 = vadd.f32 %v4132, %v3832
        %v4134 = vadd.f32 %v4133, %v3836
        %v4135 = vadd.f32 %v4134, %v3840
        %v4136 = vadd.f32 %v4135, %v3844
        %v4137 = vadd.f32 %v4136, %v3848
        %v4138 = vadd.f32 %v4137, %v3852
        %v4139 = vadd.f32 %v4138, %v3856
        %v4140 = vadd.f32 %v4139, %v3860
        %v4141 = vadd.f32 %v4140, %v3864
        %v4142 = vadd.f32 %v4141, %v3868
        %v4143 = vadd.f32 %v4142, %v3872
        %v4144 = vadd.f32 %v4143, %v3876
        %v4145 = vadd.f32 %v4144, %v3880
        %v4146 = vadd.f32 %v4145, %v3884
        %v4147 = vadd.f32 %v4146, %v3888
        %v4148 = vadd.f32 %v4147, %v3892
        %v4149 = vadd.f32 %v4148, %v3896
        %v4150 = vadd.f32 %v4149, %v3900
        %v4151 = vadd.f32 %v4150, %v3904
        %v4152 = vadd.f32 %v4151, %v3908
        %v4153 = vadd.f32 %v4152, %v3912
        %v4154 = vadd.f32 %v4153, %v3916
        %v4155 = vadd.f32 %v4154, %v3920
        %v4156 = vadd.f32 %v4155, %v3924
        %v4157 = vadd.f32 %v4156, %v3928
        %v4158 = vadd.f32 %v4157, %v3932
        %v4159 = vadd.f32 %v4158, %v3936
        %v4160 = vadd.f32 %v4159, %v3940
        %v4161 = vadd.f32 %v4160, %v3944
        %v4162 = vadd.f32 %v4161, %v3948
        %v4163 = vadd.f32 %v4162, %v3952
        %v4164 = vadd.f32 %v4163, %v3956
        %v4165 = vadd.f32 %v4164, %v3960
        %v4166 = vadd.f32 %v4165, %v3964
        %v4167 = vrot.slane %v4166, 4
        %v4168 = vadd.f32 %v4166, %v4167
        %v4169 = vrot.slane %v4168, 2
        %v4170 = vadd.f32 %v4168, %v4169
        %v4171 = vrot.slane %v4170, 1
        %v4172 = vadd.f32 %v4170, %v4171
        %v4173 = vadd.f32 %v3713, %v3717
        %v4174 = vadd.f32 %v4173, %v3721
        %v4175 = vadd.f32 %v4174, %v3725
        %v4176 = vadd.f32 %v4175, %v3729
        %v4177 = vadd.f32 %v4176, %v3733
        %v4178 = vadd.f32 %v4177, %v3737
        %v4179 = vadd.f32 %v4178, %v3741
        %v4180 = vadd.f32 %v4179, %v3745
        %v4181 = vadd.f32 %v4180, %v3749
        %v4182 = vadd.f32 %v4181, %v3753
        %v4183 = vadd.f32 %v4182, %v3757
        %v4184 = vadd.f32 %v4183, %v3761
        %v4185 = vadd.f32 %v4184, %v3765
        %v4186 = vadd.f32 %v4185, %v3769
        %v4187 = vadd.f32 %v4186, %v3773
        %v4188 = vadd.f32 %v4187, %v3777
        %v4189 = vadd.f32 %v4188, %v3781
        %v4190 = vadd.f32 %v4189, %v3785
        %v4191 = vadd.f32 %v4190, %v3789
        %v4192 = vadd.f32 %v4191, %v3793
        %v4193 = vadd.f32 %v4192, %v3797
        %v4194 = vadd.f32 %v4193, %v3801
        %v4195 = vadd.f32 %v4194, %v3805
        %v4196 = vadd.f32 %v4195, %v3809
        %v4197 = vadd.f32 %v4196, %v3813
        %v4198 = vadd.f32 %v4197, %v3817
        %v4199 = vadd.f32 %v4198, %v3821
        %v4200 = vadd.f32 %v4199, %v3825
        %v4201 = vadd.f32 %v4200, %v3829
        %v4202 = vadd.f32 %v4201, %v3833
        %v4203 = vadd.f32 %v4202, %v3837
        %v4204 = vadd.f32 %v4203, %v3841
        %v4205 = vadd.f32 %v4204, %v3845
        %v4206 = vadd.f32 %v4205, %v3849
        %v4207 = vadd.f32 %v4206, %v3853
        %v4208 = vadd.f32 %v4207, %v3857
        %v4209 = vadd.f32 %v4208, %v3861
        %v4210 = vadd.f32 %v4209, %v3865
        %v4211 = vadd.f32 %v4210, %v3869
        %v4212 = vadd.f32 %v4211, %v3873
        %v4213 = vadd.f32 %v4212, %v3877
        %v4214 = vadd.f32 %v4213, %v3881
        %v4215 = vadd.f32 %v4214, %v3885
        %v4216 = vadd.f32 %v4215, %v3889
        %v4217 = vadd.f32 %v4216, %v3893
        %v4218 = vadd.f32 %v4217, %v3897
        %v4219 = vadd.f32 %v4218, %v3901
        %v4220 = vadd.f32 %v4219, %v3905
        %v4221 = vadd.f32 %v4220, %v3909
        %v4222 = vadd.f32 %v4221, %v3913
        %v4223 = vadd.f32 %v4222, %v3917
        %v4224 = vadd.f32 %v4223, %v3921
        %v4225 = vadd.f32 %v4224, %v3925
        %v4226 = vadd.f32 %v4225, %v3929
        %v4227 = vadd.f32 %v4226, %v3933
        %v4228 = vadd.f32 %v4227, %v3937
        %v4229 = vadd.f32 %v4228, %v3941
        %v4230 = vadd.f32 %v4229, %v3945
        %v4231 = vadd.f32 %v4230, %v3949
        %v4232 = vadd.f32 %v4231, %v3953
        %v4233 = vadd.f32 %v4232, %v3957
        %v4234 = vadd.f32 %v4233, %v3961
        %v4235 = vadd.f32 %v4234, %v3965
        %v4236 = vrot.slane %v4235, 4
        %v4237 = vadd.f32 %v4235, %v4236
        %v4238 = vrot.slane %v4237, 2
        %v4239 = vadd.f32 %v4237, %v4238
        %v4240 = vrot.slane %v4239, 1
        %v4241 = vadd.f32 %v4239, %v4240
        %v4246 = vcombine.low %v4034, %v4103
        %v4247 = vcombine.low %v4172, %v4241
        %v4249 = vunpack.c.l.s4 1966171168
        %v4250 = vunpack.c.0.s8 %v4249
        %v4251 = vlaneseq
        %v4252 = vshrl.u32 %v4251, 7
        %v4253 = vsub.s32 %v4250, %v4252
        %v4254 = vrot.slane %v4246, %v4253
        %v4256 = vunpack.c.l.s4 1966171168
        %v4257 = vunpack.c.0.s8 %v4256
        %v4258 = vlaneseq
        %v4259 = vshrl.u32 %v4258, 7
        %v4260 = vsub.s32 %v4257, %v4259
        %v4261 = vrot.slane %v4247, %v4260
        %v4262 = vcombine.low %v4254, %v4261
        %v4264 = vunpack.c.l.s4 1966171168
        %v4265 = vunpack.c.0.s8 %v4264
        %v4266 = vlaneseq
        %v4267 = vshrl.u32 %v4266, 7
        %v4268 = vsub.s32 %v4265, %v4267
        %v4269 = vrot.slane %v4262, %v4268
        %v4271 = vadd.f32 %v3389, %v4269
        %v4272 = vlaneseq
        %vm4273 = vcmp.ge.s32.totalorder %v4272, 0
        %vm4274 = vcmp.lt.s32.totalorder %v4272, 512
        %vm4275 = vmand %vm4273, %vm4274
        %4276 = vst.msk [vmem:[%s340] sm:$0xf] %vm4275, %v4271
        %s4277 = sand.u32 %s200, 1
        %s4278 = scalar_lea.sflag [#allocation6], %s4277
        %s4279 = sand.u32 %s200, 1
        %s4280 = smul.addr %s4279, 4
        %s4281 = scalar_lea.vmem [#allocation5], %s4280
        // Predicated region
        $region76: #{tpu_custom_call.1} parent=66 // pred_check
          %p4282 = pneg %p210
        $region77: #{tpu_custom_call.1} parent=66 // pred_check_branch
          %4284 = sbr.rel (%p4282) target = $region79
        $region78: #{tpu_custom_call.1} parent=66 // pred_region
          %s4285 = smul.u32 4, %s27
          %s4287 = ssub.s32 64, 64
          %4288 = vsyncadd %s4278, %s4287
          %s4289 = smul.addr %s4285, 16
          %s4290 = scalar_lea.hbm %s7, %s4289
          %s4292 = sshll.u32 %s4281, 4
          %s4293 = int_to_ptr.vmem [resolvable:$true] %s4292
          %4295 = dma.vmem_to_hbm [thread:$0]  %s4293, 64, %s4290, %s4278
        $region79: #{tpu_custom_call.1} parent=66 // pred_fallthru
          _
      $region67: #{tpu_custom_call.1} parent=5 // pred_fallthru
        _
      %p4296 = scmp.le.s32.totalorder 2, %s18
      // Predicated region
      $region80: #{tpu_custom_call.1} parent=5 // pred_check
        %p4297 = pneg %p4296
      $region81: #{tpu_custom_call.1} parent=5 // pred_check_branch
        %4299 = sbr.rel (%p4297) target = $region83
      $region82: #{tpu_custom_call.1} parent=5 // pred_region
        %s4300 = ssub.s32 %s18, 2
        // Predicated region
        $region84: #{tpu_custom_call.1} parent=82 // pred_check
          %p4301 = pneg %p216
        $region85: #{tpu_custom_call.1} parent=82 // pred_check_branch
          %4303 = sbr.rel (%p4301) target = $region87
        $region86: #{tpu_custom_call.1} parent=82 // pred_region
          %s4304 = sand.u32 %s201, 1
          %s4305 = scalar_lea.sflag [#allocation6], %s4304
          %s4306 = sand.u32 %s201, 1
          %s4307 = smul.addr %s4306, 4
          %s4308 = scalar_lea.vmem [#allocation5], %s4307
          %4309 = dma.done %s4305, 64
        $region87: #{tpu_custom_call.1} parent=82 // pred_fallthru
          _
      $region83: #{tpu_custom_call.1} parent=5 // pred_fallthru
        _
    $region6: #{tpu_custom_call.1} parent=1 // loop_footer
      %s22 = sadd.s32 1, %s18
    $region7: #{tpu_custom_call.1} parent=1 // loop_footer_branch
      %17 = sbr.rel target = $region3
    $region8: #{tpu_custom_call.1} parent=1 // loop_exit
      _
    %4310 = vsyncpa [#allocation6], 1
    %s4311 = scalar_lea.sflag [#allocation6], 1
    %4312 = vsyncpa %s4311, 1

</llo_original>
